<compile_context>
chip_gen: v7x
topology: tpu7x:2x2x1
jax: 0.10.0
libtpu: 0.0.40
codegen_flags: <defaults>
</compile_context>

<pallas_src>
import math

import jax
import jax.numpy as jnp
from jax.experimental import pallas as pl
from jax.experimental.pallas import tpu as pltpu


# ----------------------------- host-side helpers -----------------------------

def _eca_kernel_size(c, b=1, gamma=2):
    """Kernel size used by EfficientChannelAttention(c)."""
    t = int(abs((math.log2(c) + b) / gamma))
    return t if t % 2 else t + 1


def _band_matrix(wk, c):
    """(c, c) matrix M s.t. M @ y == Conv1d(1,1,k,pad=k//2,bias=False) over the channel axis."""
    k = wk.shape[0]
    pad = k // 2
    o = jnp.arange(c)[:, None]
    i = jnp.arange(c)[None, :]
    d = i - o + pad
    valid = (d >= 0) & (d < k)
    return jnp.where(valid, wk[jnp.clip(d, 0, k - 1)], 0.0).astype(wk.dtype)


def _fold_bn(gamma, beta, mean, var, eps=1e-5):
    scale = gamma / jnp.sqrt(var + eps)
    shift = beta - mean * scale
    return scale[:, None], shift[:, None]          # (C, 1) columns


def _full_spec(shape):
    ndim = len(shape)

    def index_map(b):
        return (0,) * ndim

    return pl.BlockSpec(shape, index_map)


# ----------------------------- fused Pallas kernel ----------------------------

def gated_res2net_bottleneck(x, params, *, scales=4, batch_tile=1):
    """x: (B, inplanes, L) float32, inplanes == 4 * planes, L % 128 == 0."""
    B, c_in, L = x.shape
    w1 = params["w1"]                              # (P, c_in)     conv1 (1x1) weight
    P = w1.shape[0]
    sw = P // scales                               # split width
    w3 = params["w3"]                              # (c_out, P)    conv3 (1x1) weight
    c_out = w3.shape[0]
    assert c_in == c_out, "identity residual requires inplanes == expansion * planes"
    assert L % 128 == 0, "pad L to a multiple of 128 for lane-dense tiles"
    assert B % batch_tile == 0
    f32 = jnp.float32

    # ---- host prep (tiny): fold BN, stack conv2 taps, build banded ECA matrices ----
    bn1_s, bn1_b = _fold_bn(*params["bn1"])                               # (P, 1)
    bn2_pairs = [_fold_bn(*p) for p in params["bn2"]]
    bn2_s = jnp.stack([s for s, _ in bn2_pairs])                          # (scales-1, sw, 1)
    bn2_b = jnp.stack([b for _, b in bn2_pairs])
    bn3_s, bn3_b = _fold_bn(*params["bn3"])                               # (c_out, 1)

    # conv2 weights: torch (sw, sw, 3) per scale -> row (scale*3 + tap) is a (sw, sw) matrix.
    w2 = jnp.stack(params["w2"])                                          # (scales-1, sw, sw, 3)
    w2k = jnp.transpose(w2, (0, 3, 1, 2)).reshape((scales - 1) * 3, sw, sw)

    m_se = jnp.stack([_band_matrix(wk, sw) for wk in params["eca_se_w"]])  # (scales-1, sw, sw)
    m_mod = _band_matrix(params["eca_mod_w"], c_out)                       # (c_out, c_out)
    m_shr = _band_matrix(params["eca_shr_w"], c_out)                       # (c_out, c_out)

    fc1_w, fc1_b = params["fc1_w"], params["fc1_b"][:, None]               # (C,C), (C,1)
    fc2_w, fc2_b = params["fc2_w"], params["fc2_b"][:, None]

    # ------------------------------- kernel body -------------------------------
    def shift_l(v, d):
        # out[:, l] = v[:, l + d], zero padded over L.
        z = jnp.zeros((v.shape[0], abs(d)), v.dtype)
        if d > 0:
            return jnp.concatenate([v[:, d:], z], axis=1)
        return jnp.concatenate([z, v[:, :d]], axis=1)

    def kernel(x_ref, w1_ref, bn1s_ref, bn1b_ref, w2_ref, bn2s_ref, bn2b_ref,
               mse_ref, w3_ref, bn3s_ref, bn3b_ref, mmod_ref, mshr_ref,
               fc1w_ref, fc1b_ref, fc2w_ref, fc2b_ref, o_ref):

        def mm(a, b):
            return jnp.dot(a, b, preferred_element_type=f32)

        def eca_gate(v, m):
            # sigmoid(conv_over_channels(mean over L)) via banded matmul -> (C, 1)
            pooled = jnp.mean(v, axis=-1, keepdims=True)
            return jax.nn.sigmoid(mm(m, pooled))

        for bt in range(batch_tile):
            xb = x_ref[bt]                                                 # (c_in, L)

            # conv1 (1x1) + bn1 + relu
            h = mm(w1_ref[...], xb)                                        # (P, L)
            h = jnp.maximum(h * bn1s_ref[...] + bn1b_ref[...], 0.0)

            # Res2Net scale splits with gated links
            ys = [h[0:sw, :]]
            before = []
            for s in range(1, scales):
                xs_s = h[s * sw:(s + 1) * sw, :]
                base = (s - 1) * 3
                t = (mm(w2_ref[base + 0], shift_l(xs_s, -1))               # tap l-1
                     + mm(w2_ref[base + 1], xs_s)                          # tap l
                     + mm(w2_ref[base + 2], shift_l(xs_s, 1)))             # tap l+1
                t = jnp.maximum(t * bn2s_ref[s - 1] + bn2b_ref[s - 1], 0.0)
                v = t if s == 1 else t + before[-1] + ys[-1]
                before.append(t)
                ys.append(eca_gate(v, mse_ref[s - 1]) + v)                 # additive ECA gate

            cat = jnp.concatenate(ys, axis=0)                              # (P, L)

            # conv3 (1x1) + bn3
            o3 = mm(w3_ref[...], cat)                                      # (c_out, L)
            o3 = o3 * bn3s_ref[...] + bn3b_ref[...]

            # mod == 'ECA':  out = out + (sigmoid_gate + out)
            o4 = o3 + (eca_gate(o3, mmod_ref[...]) + o3)

            # Shrinkage_ECA (soft thresholding)
            xa = jnp.abs(o4)
            attn = xa * eca_gate(xa, mshr_ref[...])                        # multiplicative ECA
            avg = jnp.mean(xa, axis=-1, keepdims=True)                     # (c_out, 1)
            h1 = jnp.maximum(mm(fc1w_ref[...], avg) + fc1b_ref[...], 0.0)
            fcv = jax.nn.sigmoid(mm(fc2w_ref[...], h1) + fc2b_ref[...])
            thr = avg * fcv                                                # (c_out, 1)
            n_sub = jnp.maximum(xa - attn * thr, 0.0)
            sgn = jnp.where(o4 > 0, 1.0, jnp.where(o4 < 0, -1.0, 0.0))
            o5 = sgn * n_sub

            # residual + relu
            o_ref[bt] = jnp.maximum(o5 + xb, 0.0).astype(o_ref.dtype)

    # ------------------------------- pallas_call --------------------------------
    weights = [w1, bn1_s, bn1_b, w2k, bn2_s, bn2_b, m_se, w3, bn3_s, bn3_b,
               m_mod, m_shr, fc1_w, fc1_b, fc2_w, fc2_b]

    in_specs = [pl.BlockSpec((batch_tile, c_in, L), lambda b: (b, 0, 0))]
    in_specs += [_full_spec(a.shape) for a in weights]
    out_specs = pl.BlockSpec((batch_tile, c_out, L), lambda b: (b, 0, 0))

    # VMEM budget: double-buffered in+out slabs + resident weights, with headroom.
    itemsize = x.dtype.itemsize
    slab_bytes = batch_tile * (c_in + c_out) * L * itemsize
    weight_bytes = sum(int(a.size) * a.dtype.itemsize for a in weights)
    vmem_limit = int(min(112 * 1024 * 1024,
                         max(32 * 1024 * 1024,
                             4 * slab_bytes + 2 * weight_bytes + (4 << 20))))

    return pl.pallas_call(
        kernel,
        out_shape=jax.ShapeDtypeStruct((B, c_out, L), x.dtype),
        grid_spec=pltpu.PrefetchScalarGridSpec(
            num_scalar_prefetch=0,
            grid=(B // batch_tile,),
            in_specs=in_specs,
            out_specs=out_specs,
        ),
        compiler_params=pltpu.CompilerParams(
            dimension_semantics=("parallel",),
            vmem_limit_bytes=vmem_limit,
        ),
    )(x, *weights)


# ----------------------------- pure-JAX reference -----------------------------

def reference_forward(x, params, *, scales=4):
    relu = lambda v: jnp.maximum(v, 0.0)
    sigmoid = jax.nn.sigmoid
    B, c_in, L = x.shape

    def bn(v, p):
        gamma, beta, mean, var = p
        s = gamma / jnp.sqrt(var + 1e-5)
        return v * s[None, :, None] + (beta - mean * s)[None, :, None]

    def eca_gate(v, wk):
        pooled = jnp.mean(v, axis=-1)                            # (B, C)
        k = wk.shape[0]
        pad = k // 2
        C = pooled.shape[1]
        yp = jnp.pad(pooled, ((0, 0), (pad, pad)))
        z = sum(wk[t] * yp[:, t:t + C] for t in range(k))
        return sigmoid(z)[..., None]                             # (B, C, 1)

    h = relu(bn(jnp.einsum('pc,bcl->bpl', params["w1"], x), params["bn1"]))
    P = h.shape[1]
    sw = P // scales

    ys, before = [h[:, :sw, :]], []
    for s in range(1, scales):
        xs_s = h[:, s * sw:(s + 1) * sw, :]
        W = params["w2"][s - 1]                                  # (sw, sw, 3)
        xp = jnp.pad(xs_s, ((0, 0), (0, 0), (1, 1)))
        t = sum(jnp.einsum('oi,bil->bol', W[:, :, k_], xp[:, :, k_:k_ + L]) for k_ in range(3))
        t = relu(bn(t, params["bn2"][s - 1]))
        v = t if s == 1 else t + before[-1] + ys[-1]
        before.append(t)
        ys.append(eca_gate(v, params["eca_se_w"][s - 1]) + v)

    out = jnp.concatenate(ys, axis=1)
    out = bn(jnp.einsum('qp,bpl->bql', params["w3"], out), params["bn3"])
    out = out + (eca_gate(out, params["eca_mod_w"]) + out)

    # Shrinkage_ECA
    x_raw = out
    xa = jnp.abs(out)
    attn = xa * eca_gate(xa, params["eca_shr_w"])
    avg = jnp.mean(xa, axis=-1)                                  # (B, C)
    h1 = relu(avg @ params["fc1_w"].T + params["fc1_b"])
    fcv = sigmoid(h1 @ params["fc2_w"].T + params["fc2_b"])
    thr = (avg * fcv)[..., None]
    n_sub = jnp.maximum(xa - attn * thr, 0.0)
    out = jnp.sign(x_raw) * n_sub

    return relu(out + x)


# ------------------------------------ main ------------------------------------

if __name__ == "__main__":
    key = jax.random.PRNGKey(0)
    B, planes, scales, L = 2, 16, 4, 128
    inplanes = 4 * planes                  # expansion * planes so the identity residual is valid
    P = planes                             # bottleneck_planes (groups=1)
    sw = P // scales
    c_out = 4 * planes

    ks = iter(jax.random.split(key, 48))

    def nrm(shape, scale=0.2):
        return scale * jax.random.normal(next(ks), shape, dtype=jnp.float32)

    def bn_params(c):
        return (jax.random.uniform(next(ks), (c,), minval=0.5, maxval=1.5, dtype=jnp.float32),
                nrm((c,), 0.1),
                nrm((c,), 0.1),
                jax.random.uniform(next(ks), (c,), minval=0.5, maxval=1.5, dtype=jnp.float32))

    k_se = _eca_kernel_size(sw)            # EfficientChannelAttention(bottleneck_planes // scales)
    k_mod = _eca_kernel_size(c_out)        # EfficientChannelAttention(expansion * planes)
    k_shr = 3                              # ECA inside Shrinkage_ECA (k_size=3)

    params = {
        "w1": nrm((P, inplanes)),                                     # conv1 (1x1), no bias
        "bn1": bn_params(P),
        "w2": [nrm((sw, sw, 3)) for _ in range(scales - 1)],          # conv3 (k=3, pad=1), no bias
        "bn2": [bn_params(sw) for _ in range(scales - 1)],
        "eca_se_w": [nrm((k_se,), 0.5) for _ in range(scales - 1)],   # Conv1d(1,1,k) weights
        "w3": nrm((c_out, P)),                                        # conv3 (1x1): P -> 4*planes
        "bn3": bn_params(c_out),
        "eca_mod_w": nrm((k_mod,), 0.5),
        "eca_shr_w": nrm((k_shr,), 0.5),
        "fc1_w": nrm((c_out, c_out)), "fc1_b": nrm((c_out,), 0.1),
        "fc2_w": nrm((c_out, c_out)), "fc2_b": nrm((c_out,), 0.1),
    }

    x = jax.random.normal(next(ks), (B, inplanes, L), dtype=jnp.float32)

    out = gated_res2net_bottleneck(x, params, scales=scales, batch_tile=1)
    out = jax.block_until_ready(out)

    ref = reference_forward(x, params, scales=scales)
    assert out.shape == (B, c_out, L)
    max_err = float(jnp.max(jnp.abs(out - ref)))
    assert jnp.allclose(out, ref, atol=5e-3, rtol=5e-3), f"max abs err = {max_err}"

    print("KERNEL_OK")
</pallas_src>

<mosaic_0001>
module attributes {stable_mosaic.version = 11 : i64} {
  func.func @kernel(%arg0: i32, %arg1: memref<1x64x128xf32, #tpu.memory_space<vmem>>, %arg2: memref<16x64xf32, #tpu.memory_space<vmem>>, %arg3: memref<16x1xf32, #tpu.memory_space<vmem>>, %arg4: memref<16x1xf32, #tpu.memory_space<vmem>>, %arg5: memref<9x4x4xf32, #tpu.memory_space<vmem>>, %arg6: memref<3x4x1xf32, #tpu.memory_space<vmem>>, %arg7: memref<3x4x1xf32, #tpu.memory_space<vmem>>, %arg8: memref<3x4x4xf32, #tpu.memory_space<vmem>>, %arg9: memref<64x16xf32, #tpu.memory_space<vmem>>, %arg10: memref<64x1xf32, #tpu.memory_space<vmem>>, %arg11: memref<64x1xf32, #tpu.memory_space<vmem>>, %arg12: memref<64x64xf32, #tpu.memory_space<vmem>>, %arg13: memref<64x64xf32, #tpu.memory_space<vmem>>, %arg14: memref<64x64xf32, #tpu.memory_space<vmem>>, %arg15: memref<64x1xf32, #tpu.memory_space<vmem>>, %arg16: memref<64x64xf32, #tpu.memory_space<vmem>>, %arg17: memref<64x1xf32, #tpu.memory_space<vmem>>, %arg18: memref<1x64x128xf32, #tpu.memory_space<vmem>>) attributes {dimension_semantics = [#tpu.dimension_semantics<parallel>], iteration_bounds = array<i64: 2>, scalar_prefetch = 0 : i64, scratch_operands = 0 : i64, tpu.core_type = #tpu.core_type<tc>, window_params = [{transform_indices = @transform_0, window_bounds = array<i64: 1, 64, 128>}, {pipeline_mode = #tpu.pipeline_mode<synchronous>, transform_indices = @transform_1, window_bounds = array<i64: 16, 64>}, {pipeline_mode = #tpu.pipeline_mode<synchronous>, transform_indices = @transform_2, window_bounds = array<i64: 16, 1>}, {pipeline_mode = #tpu.pipeline_mode<synchronous>, transform_indices = @transform_3, window_bounds = array<i64: 16, 1>}, {pipeline_mode = #tpu.pipeline_mode<synchronous>, transform_indices = @transform_4, window_bounds = array<i64: 9, 4, 4>}, {pipeline_mode = #tpu.pipeline_mode<synchronous>, transform_indices = @transform_5, window_bounds = array<i64: 3, 4, 1>}, {pipeline_mode = #tpu.pipeline_mode<synchronous>, transform_indices = @transform_6, window_bounds = array<i64: 3, 4, 1>}, {pipeline_mode = #tpu.pipeline_mode<synchronous>, transform_indices = @transform_7, window_bounds = array<i64: 3, 4, 4>}, {pipeline_mode = #tpu.pipeline_mode<synchronous>, transform_indices = @transform_8, window_bounds = array<i64: 64, 16>}, {pipeline_mode = #tpu.pipeline_mode<synchronous>, transform_indices = @transform_9, window_bounds = array<i64: 64, 1>}, {pipeline_mode = #tpu.pipeline_mode<synchronous>, transform_indices = @transform_10, window_bounds = array<i64: 64, 1>}, {pipeline_mode = #tpu.pipeline_mode<synchronous>, transform_indices = @transform_11, window_bounds = array<i64: 64, 64>}, {pipeline_mode = #tpu.pipeline_mode<synchronous>, transform_indices = @transform_12, window_bounds = array<i64: 64, 64>}, {pipeline_mode = #tpu.pipeline_mode<synchronous>, transform_indices = @transform_13, window_bounds = array<i64: 64, 64>}, {pipeline_mode = #tpu.pipeline_mode<synchronous>, transform_indices = @transform_14, window_bounds = array<i64: 64, 1>}, {pipeline_mode = #tpu.pipeline_mode<synchronous>, transform_indices = @transform_15, window_bounds = array<i64: 64, 64>}, {pipeline_mode = #tpu.pipeline_mode<synchronous>, transform_indices = @transform_16, window_bounds = array<i64: 64, 1>}, {transform_indices = @transform_17, window_bounds = array<i64: 1, 64, 128>}]} {
    %c0 = arith.constant 0 : index
    %c0_0 = arith.constant 0 : index
    %c0_1 = arith.constant 0 : index
    %0 = vector.load %arg1[%c0, %c0_0, %c0_1] : memref<1x64x128xf32, #tpu.memory_space<vmem>>, vector<1x64x128xf32>
    %1 = vector.shape_cast %0 : vector<1x64x128xf32> to vector<64x128xf32>
    %c0_2 = arith.constant 0 : index
    %c0_3 = arith.constant 0 : index
    %2 = vector.load %arg2[%c0_2, %c0_3] : memref<16x64xf32, #tpu.memory_space<vmem>>, vector<16x64xf32>
    %cst = arith.constant dense<0.000000e+00> : vector<16x128xf32>
    %3 = tpu.matmul %2, %1, %cst {dimension_numbers = #tpu.dot_dimension_numbers<[1], [0], [0], [1], [0, 0, 1, 1], [], []>} : vector<16x64xf32>, vector<64x128xf32>, vector<16x128xf32> -> vector<16x128xf32>
    %c0_4 = arith.constant 0 : index
    %c0_5 = arith.constant 0 : index
    %4 = vector.load %arg3[%c0_4, %c0_5] : memref<16x1xf32, #tpu.memory_space<vmem>>, vector<16x1xf32>
    %5 = vector.broadcast %4 : vector<16x1xf32> to vector<16x128xf32>
    %6 = arith.mulf %3, %5 : vector<16x128xf32>
    %c0_6 = arith.constant 0 : index
    %c0_7 = arith.constant 0 : index
    %7 = vector.load %arg4[%c0_6, %c0_7] : memref<16x1xf32, #tpu.memory_space<vmem>>, vector<16x1xf32>
    %8 = vector.broadcast %7 : vector<16x1xf32> to vector<16x128xf32>
    %9 = arith.addf %6, %8 : vector<16x128xf32>
    %cst_8 = arith.constant 0.000000e+00 : f32
    %10 = vector.broadcast %cst_8 : f32 to vector<16x128xf32>
    %11 = arith.maximumf %9, %10 : vector<16x128xf32>
    %12 = vector.extract_strided_slice %11 {offsets = [0, 0], sizes = [4, 128], strides = [1, 1]} : vector<16x128xf32> to vector<4x128xf32>
    %13 = vector.extract_strided_slice %11 {offsets = [4, 0], sizes = [4, 128], strides = [1, 1]} : vector<16x128xf32> to vector<4x128xf32>
    %c0_9 = arith.constant 0 : index
    %c0_10 = arith.constant 0 : index
    %c0_11 = arith.constant 0 : index
    %14 = vector.load %arg5[%c0_9, %c0_10, %c0_11] : memref<9x4x4xf32, #tpu.memory_space<vmem>>, vector<1x4x4xf32>
    %15 = vector.shape_cast %14 : vector<1x4x4xf32> to vector<4x4xf32>
    %cst_12 = arith.constant 0.000000e+00 : f32
    %16 = vector.broadcast %cst_12 : f32 to vector<4x1xf32>
    %17 = vector.extract_strided_slice %13 {offsets = [0, 0], sizes = [4, 127], strides = [1, 1]} : vector<4x128xf32> to vector<4x127xf32>
    %18 = tpu.concatenate %16, %17 in 1 : vector<4x1xf32>, vector<4x127xf32> -> vector<4x128xf32>
    %cst_13 = arith.constant dense<0.000000e+00> : vector<4x128xf32>
    %19 = tpu.matmul %15, %18, %cst_13 {dimension_numbers = #tpu.dot_dimension_numbers<[1], [0], [0], [1], [0, 0, 1, 1], [], []>} : vector<4x4xf32>, vector<4x128xf32>, vector<4x128xf32> -> vector<4x128xf32>
    %c1 = arith.constant 1 : index
    %c0_14 = arith.constant 0 : index
    %c0_15 = arith.constant 0 : index
    %20 = vector.load %arg5[%c1, %c0_14, %c0_15] : memref<9x4x4xf32, #tpu.memory_space<vmem>>, vector<1x4x4xf32>
    %21 = vector.shape_cast %20 : vector<1x4x4xf32> to vector<4x4xf32>
    %cst_16 = arith.constant dense<0.000000e+00> : vector<4x128xf32>
    %22 = tpu.matmul %21, %13, %cst_16 {dimension_numbers = #tpu.dot_dimension_numbers<[1], [0], [0], [1], [0, 0, 1, 1], [], []>} : vector<4x4xf32>, vector<4x128xf32>, vector<4x128xf32> -> vector<4x128xf32>
    %23 = arith.addf %19, %22 : vector<4x128xf32>
    %c2 = arith.constant 2 : index
    %c0_17 = arith.constant 0 : index
    %c0_18 = arith.constant 0 : index
    %24 = vector.load %arg5[%c2, %c0_17, %c0_18] : memref<9x4x4xf32, #tpu.memory_space<vmem>>, vector<1x4x4xf32>
    %25 = vector.shape_cast %24 : vector<1x4x4xf32> to vector<4x4xf32>
    %cst_19 = arith.constant 0.000000e+00 : f32
    %26 = vector.broadcast %cst_19 : f32 to vector<4x1xf32>
    %27 = vector.extract_strided_slice %13 {offsets = [0, 1], sizes = [4, 127], strides = [1, 1]} : vector<4x128xf32> to vector<4x127xf32>
    %28 = tpu.concatenate %27, %26 in 1 : vector<4x127xf32>, vector<4x1xf32> -> vector<4x128xf32>
    %cst_20 = arith.constant dense<0.000000e+00> : vector<4x128xf32>
    %29 = tpu.matmul %25, %28, %cst_20 {dimension_numbers = #tpu.dot_dimension_numbers<[1], [0], [0], [1], [0, 0, 1, 1], [], []>} : vector<4x4xf32>, vector<4x128xf32>, vector<4x128xf32> -> vector<4x128xf32>
    %30 = arith.addf %23, %29 : vector<4x128xf32>
    %c0_21 = arith.constant 0 : index
    %c0_22 = arith.constant 0 : index
    %c0_23 = arith.constant 0 : index
    %31 = vector.load %arg6[%c0_21, %c0_22, %c0_23] : memref<3x4x1xf32, #tpu.memory_space<vmem>>, vector<1x4x1xf32>
    %32 = vector.shape_cast %31 : vector<1x4x1xf32> to vector<4x1xf32>
    %33 = vector.broadcast %32 : vector<4x1xf32> to vector<4x128xf32>
    %34 = arith.mulf %30, %33 : vector<4x128xf32>
    %c0_24 = arith.constant 0 : index
    %c0_25 = arith.constant 0 : index
    %c0_26 = arith.constant 0 : index
    %35 = vector.load %arg7[%c0_24, %c0_25, %c0_26] : memref<3x4x1xf32, #tpu.memory_space<vmem>>, vector<1x4x1xf32>
    %36 = vector.shape_cast %35 : vector<1x4x1xf32> to vector<4x1xf32>
    %37 = vector.broadcast %36 : vector<4x1xf32> to vector<4x128xf32>
    %38 = arith.addf %34, %37 : vector<4x128xf32>
    %cst_27 = arith.constant 0.000000e+00 : f32
    %39 = vector.broadcast %cst_27 : f32 to vector<4x128xf32>
    %40 = arith.maximumf %38, %39 : vector<4x128xf32>
    %c0_28 = arith.constant 0 : index
    %c0_29 = arith.constant 0 : index
    %c0_30 = arith.constant 0 : index
    %41 = vector.load %arg8[%c0_28, %c0_29, %c0_30] : memref<3x4x4xf32, #tpu.memory_space<vmem>>, vector<1x4x4xf32>
    %42 = vector.shape_cast %41 : vector<1x4x4xf32> to vector<4x4xf32>
    %cst_31 = arith.constant dense<0.000000e+00> : vector<4xf32>
    %43 = vector.multi_reduction <add>, %40, %cst_31 [1] : vector<4x128xf32> to vector<4xf32>
    %44 = vector.shape_cast %43 : vector<4xf32> to vector<4x1xf32>
    %cst_32 = arith.constant 1.280000e+02 : f32
    %45 = vector.broadcast %cst_32 : f32 to vector<4x1xf32>
    %46 = arith.divf %44, %45 : vector<4x1xf32>
    %cst_33 = arith.constant dense<0.000000e+00> : vector<4x1xf32>
    %47 = tpu.matmul %42, %46, %cst_33 {dimension_numbers = #tpu.dot_dimension_numbers<[1], [0], [0], [1], [0, 0, 1, 1], [], []>} : vector<4x4xf32>, vector<4x1xf32>, vector<4x1xf32> -> vector<4x1xf32>
    %48 = arith.negf %47 : vector<4x1xf32>
    %49 = math.exp %48 : vector<4x1xf32>
    %cst_34 = arith.constant 1.000000e+00 : f32
    %50 = vector.broadcast %cst_34 : f32 to vector<4x1xf32>
    %51 = arith.addf %50, %49 : vector<4x1xf32>
    %52 = arith.divf %50, %51 : vector<4x1xf32>
    %53 = vector.broadcast %52 : vector<4x1xf32> to vector<4x128xf32>
    %54 = arith.addf %53, %40 : vector<4x128xf32>
    %55 = vector.extract_strided_slice %11 {offsets = [8, 0], sizes = [4, 128], strides = [1, 1]} : vector<16x128xf32> to vector<4x128xf32>
    %c3 = arith.constant 3 : index
    %c0_35 = arith.constant 0 : index
    %c0_36 = arith.constant 0 : index
    %56 = vector.load %arg5[%c3, %c0_35, %c0_36] : memref<9x4x4xf32, #tpu.memory_space<vmem>>, vector<1x4x4xf32>
    %57 = vector.shape_cast %56 : vector<1x4x4xf32> to vector<4x4xf32>
    %cst_37 = arith.constant 0.000000e+00 : f32
    %58 = vector.broadcast %cst_37 : f32 to vector<4x1xf32>
    %59 = vector.extract_strided_slice %55 {offsets = [0, 0], sizes = [4, 127], strides = [1, 1]} : vector<4x128xf32> to vector<4x127xf32>
    %60 = tpu.concatenate %58, %59 in 1 : vector<4x1xf32>, vector<4x127xf32> -> vector<4x128xf32>
    %cst_38 = arith.constant dense<0.000000e+00> : vector<4x128xf32>
    %61 = tpu.matmul %57, %60, %cst_38 {dimension_numbers = #tpu.dot_dimension_numbers<[1], [0], [0], [1], [0, 0, 1, 1], [], []>} : vector<4x4xf32>, vector<4x128xf32>, vector<4x128xf32> -> vector<4x128xf32>
    %c4 = arith.constant 4 : index
    %c0_39 = arith.constant 0 : index
    %c0_40 = arith.constant 0 : index
    %62 = vector.load %arg5[%c4, %c0_39, %c0_40] : memref<9x4x4xf32, #tpu.memory_space<vmem>>, vector<1x4x4xf32>
    %63 = vector.shape_cast %62 : vector<1x4x4xf32> to vector<4x4xf32>
    %cst_41 = arith.constant dense<0.000000e+00> : vector<4x128xf32>
    %64 = tpu.matmul %63, %55, %cst_41 {dimension_numbers = #tpu.dot_dimension_numbers<[1], [0], [0], [1], [0, 0, 1, 1], [], []>} : vector<4x4xf32>, vector<4x128xf32>, vector<4x128xf32> -> vector<4x128xf32>
    %65 = arith.addf %61, %64 : vector<4x128xf32>
    %c5 = arith.constant 5 : index
    %c0_42 = arith.constant 0 : index
    %c0_43 = arith.constant 0 : index
    %66 = vector.load %arg5[%c5, %c0_42, %c0_43] : memref<9x4x4xf32, #tpu.memory_space<vmem>>, vector<1x4x4xf32>
    %67 = vector.shape_cast %66 : vector<1x4x4xf32> to vector<4x4xf32>
    %cst_44 = arith.constant 0.000000e+00 : f32
    %68 = vector.broadcast %cst_44 : f32 to vector<4x1xf32>
    %69 = vector.extract_strided_slice %55 {offsets = [0, 1], sizes = [4, 127], strides = [1, 1]} : vector<4x128xf32> to vector<4x127xf32>
    %70 = tpu.concatenate %69, %68 in 1 : vector<4x127xf32>, vector<4x1xf32> -> vector<4x128xf32>
    %cst_45 = arith.constant dense<0.000000e+00> : vector<4x128xf32>
    %71 = tpu.matmul %67, %70, %cst_45 {dimension_numbers = #tpu.dot_dimension_numbers<[1], [0], [0], [1], [0, 0, 1, 1], [], []>} : vector<4x4xf32>, vector<4x128xf32>, vector<4x128xf32> -> vector<4x128xf32>
    %72 = arith.addf %65, %71 : vector<4x128xf32>
    %c1_46 = arith.constant 1 : index
    %c0_47 = arith.constant 0 : index
    %c0_48 = arith.constant 0 : index
    %73 = vector.load %arg6[%c1_46, %c0_47, %c0_48] : memref<3x4x1xf32, #tpu.memory_space<vmem>>, vector<1x4x1xf32>
    %74 = vector.shape_cast %73 : vector<1x4x1xf32> to vector<4x1xf32>
    %75 = vector.broadcast %74 : vector<4x1xf32> to vector<4x128xf32>
    %76 = arith.mulf %72, %75 : vector<4x128xf32>
    %c1_49 = arith.constant 1 : index
    %c0_50 = arith.constant 0 : index
    %c0_51 = arith.constant 0 : index
    %77 = vector.load %arg7[%c1_49, %c0_50, %c0_51] : memref<3x4x1xf32, #tpu.memory_space<vmem>>, vector<1x4x1xf32>
    %78 = vector.shape_cast %77 : vector<1x4x1xf32> to vector<4x1xf32>
    %79 = vector.broadcast %78 : vector<4x1xf32> to vector<4x128xf32>
    %80 = arith.addf %76, %79 : vector<4x128xf32>
    %cst_52 = arith.constant 0.000000e+00 : f32
    %81 = vector.broadcast %cst_52 : f32 to vector<4x128xf32>
    %82 = arith.maximumf %80, %81 : vector<4x128xf32>
    %83 = arith.addf %82, %40 : vector<4x128xf32>
    %84 = arith.addf %83, %54 : vector<4x128xf32>
    %c1_53 = arith.constant 1 : index
    %c0_54 = arith.constant 0 : index
    %c0_55 = arith.constant 0 : index
    %85 = vector.load %arg8[%c1_53, %c0_54, %c0_55] : memref<3x4x4xf32, #tpu.memory_space<vmem>>, vector<1x4x4xf32>
    %86 = vector.shape_cast %85 : vector<1x4x4xf32> to vector<4x4xf32>
    %cst_56 = arith.constant dense<0.000000e+00> : vector<4xf32>
    %87 = vector.multi_reduction <add>, %84, %cst_56 [1] : vector<4x128xf32> to vector<4xf32>
    %88 = vector.shape_cast %87 : vector<4xf32> to vector<4x1xf32>
    %cst_57 = arith.constant 1.280000e+02 : f32
    %89 = vector.broadcast %cst_57 : f32 to vector<4x1xf32>
    %90 = arith.divf %88, %89 : vector<4x1xf32>
    %cst_58 = arith.constant dense<0.000000e+00> : vector<4x1xf32>
    %91 = tpu.matmul %86, %90, %cst_58 {dimension_numbers = #tpu.dot_dimension_numbers<[1], [0], [0], [1], [0, 0, 1, 1], [], []>} : vector<4x4xf32>, vector<4x1xf32>, vector<4x1xf32> -> vector<4x1xf32>
    %92 = arith.negf %91 : vector<4x1xf32>
    %93 = math.exp %92 : vector<4x1xf32>
    %cst_59 = arith.constant 1.000000e+00 : f32
    %94 = vector.broadcast %cst_59 : f32 to vector<4x1xf32>
    %95 = arith.addf %94, %93 : vector<4x1xf32>
    %96 = arith.divf %94, %95 : vector<4x1xf32>
    %97 = vector.broadcast %96 : vector<4x1xf32> to vector<4x128xf32>
    %98 = arith.addf %97, %84 : vector<4x128xf32>
    %99 = vector.extract_strided_slice %11 {offsets = [12, 0], sizes = [4, 128], strides = [1, 1]} : vector<16x128xf32> to vector<4x128xf32>
    %c6 = arith.constant 6 : index
    %c0_60 = arith.constant 0 : index
    %c0_61 = arith.constant 0 : index
    %100 = vector.load %arg5[%c6, %c0_60, %c0_61] : memref<9x4x4xf32, #tpu.memory_space<vmem>>, vector<1x4x4xf32>
    %101 = vector.shape_cast %100 : vector<1x4x4xf32> to vector<4x4xf32>
    %cst_62 = arith.constant 0.000000e+00 : f32
    %102 = vector.broadcast %cst_62 : f32 to vector<4x1xf32>
    %103 = vector.extract_strided_slice %99 {offsets = [0, 0], sizes = [4, 127], strides = [1, 1]} : vector<4x128xf32> to vector<4x127xf32>
    %104 = tpu.concatenate %102, %103 in 1 : vector<4x1xf32>, vector<4x127xf32> -> vector<4x128xf32>
    %cst_63 = arith.constant dense<0.000000e+00> : vector<4x128xf32>
    %105 = tpu.matmul %101, %104, %cst_63 {dimension_numbers = #tpu.dot_dimension_numbers<[1], [0], [0], [1], [0, 0, 1, 1], [], []>} : vector<4x4xf32>, vector<4x128xf32>, vector<4x128xf32> -> vector<4x128xf32>
    %c7 = arith.constant 7 : index
    %c0_64 = arith.constant 0 : index
    %c0_65 = arith.constant 0 : index
    %106 = vector.load %arg5[%c7, %c0_64, %c0_65] : memref<9x4x4xf32, #tpu.memory_space<vmem>>, vector<1x4x4xf32>
    %107 = vector.shape_cast %106 : vector<1x4x4xf32> to vector<4x4xf32>
    %cst_66 = arith.constant dense<0.000000e+00> : vector<4x128xf32>
    %108 = tpu.matmul %107, %99, %cst_66 {dimension_numbers = #tpu.dot_dimension_numbers<[1], [0], [0], [1], [0, 0, 1, 1], [], []>} : vector<4x4xf32>, vector<4x128xf32>, vector<4x128xf32> -> vector<4x128xf32>
    %109 = arith.addf %105, %108 : vector<4x128xf32>
    %c8 = arith.constant 8 : index
    %c0_67 = arith.constant 0 : index
    %c0_68 = arith.constant 0 : index
    %110 = vector.load %arg5[%c8, %c0_67, %c0_68] : memref<9x4x4xf32, #tpu.memory_space<vmem>>, vector<1x4x4xf32>
    %111 = vector.shape_cast %110 : vector<1x4x4xf32> to vector<4x4xf32>
    %cst_69 = arith.constant 0.000000e+00 : f32
    %112 = vector.broadcast %cst_69 : f32 to vector<4x1xf32>
    %113 = vector.extract_strided_slice %99 {offsets = [0, 1], sizes = [4, 127], strides = [1, 1]} : vector<4x128xf32> to vector<4x127xf32>
    %114 = tpu.concatenate %113, %112 in 1 : vector<4x127xf32>, vector<4x1xf32> -> vector<4x128xf32>
    %cst_70 = arith.constant dense<0.000000e+00> : vector<4x128xf32>
    %115 = tpu.matmul %111, %114, %cst_70 {dimension_numbers = #tpu.dot_dimension_numbers<[1], [0], [0], [1], [0, 0, 1, 1], [], []>} : vector<4x4xf32>, vector<4x128xf32>, vector<4x128xf32> -> vector<4x128xf32>
    %116 = arith.addf %109, %115 : vector<4x128xf32>
    %c2_71 = arith.constant 2 : index
    %c0_72 = arith.constant 0 : index
    %c0_73 = arith.constant 0 : index
    %117 = vector.load %arg6[%c2_71, %c0_72, %c0_73] : memref<3x4x1xf32, #tpu.memory_space<vmem>>, vector<1x4x1xf32>
    %118 = vector.shape_cast %117 : vector<1x4x1xf32> to vector<4x1xf32>
    %119 = vector.broadcast %118 : vector<4x1xf32> to vector<4x128xf32>
    %120 = arith.mulf %116, %119 : vector<4x128xf32>
    %c2_74 = arith.constant 2 : index
    %c0_75 = arith.constant 0 : index
    %c0_76 = arith.constant 0 : index
    %121 = vector.load %arg7[%c2_74, %c0_75, %c0_76] : memref<3x4x1xf32, #tpu.memory_space<vmem>>, vector<1x4x1xf32>
    %122 = vector.shape_cast %121 : vector<1x4x1xf32> to vector<4x1xf32>
    %123 = vector.broadcast %122 : vector<4x1xf32> to vector<4x128xf32>
    %124 = arith.addf %120, %123 : vector<4x128xf32>
    %cst_77 = arith.constant 0.000000e+00 : f32
    %125 = vector.broadcast %cst_77 : f32 to vector<4x128xf32>
    %126 = arith.maximumf %124, %125 : vector<4x128xf32>
    %127 = arith.addf %126, %82 : vector<4x128xf32>
    %128 = arith.addf %127, %98 : vector<4x128xf32>
    %c2_78 = arith.constant 2 : index
    %c0_79 = arith.constant 0 : index
    %c0_80 = arith.constant 0 : index
    %129 = vector.load %arg8[%c2_78, %c0_79, %c0_80] : memref<3x4x4xf32, #tpu.memory_space<vmem>>, vector<1x4x4xf32>
    %130 = vector.shape_cast %129 : vector<1x4x4xf32> to vector<4x4xf32>
    %cst_81 = arith.constant dense<0.000000e+00> : vector<4xf32>
    %131 = vector.multi_reduction <add>, %128, %cst_81 [1] : vector<4x128xf32> to vector<4xf32>
    %132 = vector.shape_cast %131 : vector<4xf32> to vector<4x1xf32>
    %cst_82 = arith.constant 1.280000e+02 : f32
    %133 = vector.broadcast %cst_82 : f32 to vector<4x1xf32>
    %134 = arith.divf %132, %133 : vector<4x1xf32>
    %cst_83 = arith.constant dense<0.000000e+00> : vector<4x1xf32>
    %135 = tpu.matmul %130, %134, %cst_83 {dimension_numbers = #tpu.dot_dimension_numbers<[1], [0], [0], [1], [0, 0, 1, 1], [], []>} : vector<4x4xf32>, vector<4x1xf32>, vector<4x1xf32> -> vector<4x1xf32>
    %136 = arith.negf %135 : vector<4x1xf32>
    %137 = math.exp %136 : vector<4x1xf32>
    %cst_84 = arith.constant 1.000000e+00 : f32
    %138 = vector.broadcast %cst_84 : f32 to vector<4x1xf32>
    %139 = arith.addf %138, %137 : vector<4x1xf32>
    %140 = arith.divf %138, %139 : vector<4x1xf32>
    %141 = vector.broadcast %140 : vector<4x1xf32> to vector<4x128xf32>
    %142 = arith.addf %141, %128 : vector<4x128xf32>
    %143 = tpu.concatenate %12, %54, %98, %142 in 0 : vector<4x128xf32>, vector<4x128xf32>, vector<4x128xf32>, vector<4x128xf32> -> vector<16x128xf32>
    %c0_85 = arith.constant 0 : index
    %c0_86 = arith.constant 0 : index
    %144 = vector.load %arg9[%c0_85, %c0_86] : memref<64x16xf32, #tpu.memory_space<vmem>>, vector<64x16xf32>
    %cst_87 = arith.constant dense<0.000000e+00> : vector<64x128xf32>
    %145 = tpu.matmul %144, %143, %cst_87 {dimension_numbers = #tpu.dot_dimension_numbers<[1], [0], [0], [1], [0, 0, 1, 1], [], []>} : vector<64x16xf32>, vector<16x128xf32>, vector<64x128xf32> -> vector<64x128xf32>
    %c0_88 = arith.constant 0 : index
    %c0_89 = arith.constant 0 : index
    %146 = vector.load %arg10[%c0_88, %c0_89] : memref<64x1xf32, #tpu.memory_space<vmem>>, vector<64x1xf32>
    %147 = vector.broadcast %146 : vector<64x1xf32> to vector<64x128xf32>
    %148 = arith.mulf %145, %147 : vector<64x128xf32>
    %c0_90 = arith.constant 0 : index
    %c0_91 = arith.constant 0 : index
    %149 = vector.load %arg11[%c0_90, %c0_91] : memref<64x1xf32, #tpu.memory_space<vmem>>, vector<64x1xf32>
    %150 = vector.broadcast %149 : vector<64x1xf32> to vector<64x128xf32>
    %151 = arith.addf %148, %150 : vector<64x128xf32>
    %c0_92 = arith.constant 0 : index
    %c0_93 = arith.constant 0 : index
    %152 = vector.load %arg12[%c0_92, %c0_93] : memref<64x64xf32, #tpu.memory_space<vmem>>, vector<64x64xf32>
    %cst_94 = arith.constant dense<0.000000e+00> : vector<64xf32>
    %153 = vector.multi_reduction <add>, %151, %cst_94 [1] : vector<64x128xf32> to vector<64xf32>
    %154 = vector.shape_cast %153 : vector<64xf32> to vector<64x1xf32>
    %cst_95 = arith.constant 1.280000e+02 : f32
    %155 = vector.broadcast %cst_95 : f32 to vector<64x1xf32>
    %156 = arith.divf %154, %155 : vector<64x1xf32>
    %cst_96 = arith.constant dense<0.000000e+00> : vector<64x1xf32>
    %157 = tpu.matmul %152, %156, %cst_96 {dimension_numbers = #tpu.dot_dimension_numbers<[1], [0], [0], [1], [0, 0, 1, 1], [], []>} : vector<64x64xf32>, vector<64x1xf32>, vector<64x1xf32> -> vector<64x1xf32>
    %158 = arith.negf %157 : vector<64x1xf32>
    %159 = math.exp %158 : vector<64x1xf32>
    %cst_97 = arith.constant 1.000000e+00 : f32
    %160 = vector.broadcast %cst_97 : f32 to vector<64x1xf32>
    %161 = arith.addf %160, %159 : vector<64x1xf32>
    %162 = arith.divf %160, %161 : vector<64x1xf32>
    %163 = vector.broadcast %162 : vector<64x1xf32> to vector<64x128xf32>
    %164 = arith.addf %163, %151 : vector<64x128xf32>
    %165 = arith.addf %151, %164 : vector<64x128xf32>
    %166 = math.absf %165 : vector<64x128xf32>
    %c0_98 = arith.constant 0 : index
    %c0_99 = arith.constant 0 : index
    %167 = vector.load %arg13[%c0_98, %c0_99] : memref<64x64xf32, #tpu.memory_space<vmem>>, vector<64x64xf32>
    %cst_100 = arith.constant dense<0.000000e+00> : vector<64xf32>
    %168 = vector.multi_reduction <add>, %166, %cst_100 [1] : vector<64x128xf32> to vector<64xf32>
    %169 = vector.shape_cast %168 : vector<64xf32> to vector<64x1xf32>
    %cst_101 = arith.constant 1.280000e+02 : f32
    %170 = vector.broadcast %cst_101 : f32 to vector<64x1xf32>
    %171 = arith.divf %169, %170 : vector<64x1xf32>
    %cst_102 = arith.constant dense<0.000000e+00> : vector<64x1xf32>
    %172 = tpu.matmul %167, %171, %cst_102 {dimension_numbers = #tpu.dot_dimension_numbers<[1], [0], [0], [1], [0, 0, 1, 1], [], []>} : vector<64x64xf32>, vector<64x1xf32>, vector<64x1xf32> -> vector<64x1xf32>
    %173 = arith.negf %172 : vector<64x1xf32>
    %174 = math.exp %173 : vector<64x1xf32>
    %cst_103 = arith.constant 1.000000e+00 : f32
    %175 = vector.broadcast %cst_103 : f32 to vector<64x1xf32>
    %176 = arith.addf %175, %174 : vector<64x1xf32>
    %177 = arith.divf %175, %176 : vector<64x1xf32>
    %178 = vector.broadcast %177 : vector<64x1xf32> to vector<64x128xf32>
    %179 = arith.mulf %166, %178 : vector<64x128xf32>
    %cst_104 = arith.constant dense<0.000000e+00> : vector<64xf32>
    %180 = vector.multi_reduction <add>, %166, %cst_104 [1] : vector<64x128xf32> to vector<64xf32>
    %181 = vector.shape_cast %180 : vector<64xf32> to vector<64x1xf32>
    %cst_105 = arith.constant 1.280000e+02 : f32
    %182 = vector.broadcast %cst_105 : f32 to vector<64x1xf32>
    %183 = arith.divf %181, %182 : vector<64x1xf32>
    %c0_106 = arith.constant 0 : index
    %c0_107 = arith.constant 0 : index
    %184 = vector.load %arg14[%c0_106, %c0_107] : memref<64x64xf32, #tpu.memory_space<vmem>>, vector<64x64xf32>
    %cst_108 = arith.constant dense<0.000000e+00> : vector<64x1xf32>
    %185 = tpu.matmul %184, %183, %cst_108 {dimension_numbers = #tpu.dot_dimension_numbers<[1], [0], [0], [1], [0, 0, 1, 1], [], []>} : vector<64x64xf32>, vector<64x1xf32>, vector<64x1xf32> -> vector<64x1xf32>
    %c0_109 = arith.constant 0 : index
    %c0_110 = arith.constant 0 : index
    %186 = vector.load %arg15[%c0_109, %c0_110] : memref<64x1xf32, #tpu.memory_space<vmem>>, vector<64x1xf32>
    %187 = arith.addf %185, %186 : vector<64x1xf32>
    %cst_111 = arith.constant 0.000000e+00 : f32
    %188 = vector.broadcast %cst_111 : f32 to vector<64x1xf32>
    %189 = arith.maximumf %187, %188 : vector<64x1xf32>
    %c0_112 = arith.constant 0 : index
    %c0_113 = arith.constant 0 : index
    %190 = vector.load %arg16[%c0_112, %c0_113] : memref<64x64xf32, #tpu.memory_space<vmem>>, vector<64x64xf32>
    %cst_114 = arith.constant dense<0.000000e+00> : vector<64x1xf32>
    %191 = tpu.matmul %190, %189, %cst_114 {dimension_numbers = #tpu.dot_dimension_numbers<[1], [0], [0], [1], [0, 0, 1, 1], [], []>} : vector<64x64xf32>, vector<64x1xf32>, vector<64x1xf32> -> vector<64x1xf32>
    %c0_115 = arith.constant 0 : index
    %c0_116 = arith.constant 0 : index
    %192 = vector.load %arg17[%c0_115, %c0_116] : memref<64x1xf32, #tpu.memory_space<vmem>>, vector<64x1xf32>
    %193 = arith.addf %191, %192 : vector<64x1xf32>
    %194 = arith.negf %193 : vector<64x1xf32>
    %195 = math.exp %194 : vector<64x1xf32>
    %cst_117 = arith.constant 1.000000e+00 : f32
    %196 = vector.broadcast %cst_117 : f32 to vector<64x1xf32>
    %197 = arith.addf %196, %195 : vector<64x1xf32>
    %198 = arith.divf %196, %197 : vector<64x1xf32>
    %199 = arith.mulf %183, %198 : vector<64x1xf32>
    %200 = vector.broadcast %199 : vector<64x1xf32> to vector<64x128xf32>
    %201 = arith.mulf %179, %200 : vector<64x128xf32>
    %202 = arith.subf %166, %201 : vector<64x128xf32>
    %cst_118 = arith.constant 0.000000e+00 : f32
    %203 = vector.broadcast %cst_118 : f32 to vector<64x128xf32>
    %204 = arith.maximumf %202, %203 : vector<64x128xf32>
    %cst_119 = arith.constant 0.000000e+00 : f32
    %205 = vector.broadcast %cst_119 : f32 to vector<64x128xf32>
    %206 = arith.cmpf ogt, %165, %205 : vector<64x128xf32>
    %cst_120 = arith.constant 0.000000e+00 : f32
    %207 = vector.broadcast %cst_120 : f32 to vector<64x128xf32>
    %208 = arith.cmpf olt, %165, %207 : vector<64x128xf32>
    %cst_121 = arith.constant -1.000000e+00 : f32
    %cst_122 = arith.constant 0.000000e+00 : f32
    %209 = vector.broadcast %cst_121 : f32 to vector<64x128xf32>
    %210 = vector.broadcast %cst_122 : f32 to vector<64x128xf32>
    %211 = arith.select %208, %209, %210 : vector<64x128xi1>, vector<64x128xf32>
    %cst_123 = arith.constant 1.000000e+00 : f32
    %212 = vector.broadcast %cst_123 : f32 to vector<64x128xf32>
    %213 = arith.select %206, %212, %211 : vector<64x128xi1>, vector<64x128xf32>
    %214 = arith.mulf %213, %204 : vector<64x128xf32>
    %215 = arith.addf %214, %1 : vector<64x128xf32>
    %cst_124 = arith.constant 0.000000e+00 : f32
    %216 = vector.broadcast %cst_124 : f32 to vector<64x128xf32>
    %217 = arith.maximumf %215, %216 : vector<64x128xf32>
    %c0_125 = arith.constant 0 : index
    %c0_126 = arith.constant 0 : index
    %c0_127 = arith.constant 0 : index
    %218 = vector.load %arg18[%c0_125, %c0_126, %c0_127] : memref<1x64x128xf32, #tpu.memory_space<vmem>>, vector<1x64x128xf32>
    %219 = vector.shape_cast %218 : vector<1x64x128xf32> to vector<64x128xf32>
    %220 = vector.shape_cast %217 : vector<64x128xf32> to vector<1x64x128xf32>
    tpu.vector_store %arg18[%c0_125, %c0_126, %c0_127], %220 {strides = array<i32>} : memref<1x64x128xf32, #tpu.memory_space<vmem>>, vector<1x64x128xf32>,
    return
  }
  func.func @transform_0(%arg0: i32) -> (i32, i32, i32) {
    %c0_i32 = arith.constant 0 : i32
    %c0_i32_0 = arith.constant 0 : i32
    %c0_i32_1 = arith.constant 0 : i32
    return %arg0, %c0_i32, %c0_i32_0 : i32, i32, i32
  }
  func.func @transform_1(%arg0: i32) -> (i32, i32) {
    %c0_i32 = arith.constant 0 : i32
    %c0_i32_0 = arith.constant 0 : i32
    %c0_i32_1 = arith.constant 0 : i32
    return %c0_i32, %c0_i32_0 : i32, i32
  }
  func.func @transform_2(%arg0: i32) -> (i32, i32) {
    %c0_i32 = arith.constant 0 : i32
    %c0_i32_0 = arith.constant 0 : i32
    %c0_i32_1 = arith.constant 0 : i32
    return %c0_i32, %c0_i32_0 : i32, i32
  }
  func.func @transform_3(%arg0: i32) -> (i32, i32) {
    %c0_i32 = arith.constant 0 : i32
    %c0_i32_0 = arith.constant 0 : i32
    %c0_i32_1 = arith.constant 0 : i32
    return %c0_i32, %c0_i32_0 : i32, i32
  }
  func.func @transform_4(%arg0: i32) -> (i32, i32, i32) {
    %c0_i32 = arith.constant 0 : i32
    %c0_i32_0 = arith.constant 0 : i32
    %c0_i32_1 = arith.constant 0 : i32
    %c0_i32_2 = arith.constant 0 : i32
    return %c0_i32, %c0_i32_0, %c0_i32_1 : i32, i32, i32
  }
  func.func @transform_5(%arg0: i32) -> (i32, i32, i32) {
    %c0_i32 = arith.constant 0 : i32
    %c0_i32_0 = arith.constant 0 : i32
    %c0_i32_1 = arith.constant 0 : i32
    %c0_i32_2 = arith.constant 0 : i32
    return %c0_i32, %c0_i32_0, %c0_i32_1 : i32, i32, i32
  }
  func.func @transform_6(%arg0: i32) -> (i32, i32, i32) {
    %c0_i32 = arith.constant 0 : i32
    %c0_i32_0 = arith.constant 0 : i32
    %c0_i32_1 = arith.constant 0 : i32
    %c0_i32_2 = arith.constant 0 : i32
    return %c0_i32, %c0_i32_0, %c0_i32_1 : i32, i32, i32
  }
  func.func @transform_7(%arg0: i32) -> (i32, i32, i32) {
    %c0_i32 = arith.constant 0 : i32
    %c0_i32_0 = arith.constant 0 : i32
    %c0_i32_1 = arith.constant 0 : i32
    %c0_i32_2 = arith.constant 0 : i32
    return %c0_i32, %c0_i32_0, %c0_i32_1 : i32, i32, i32
  }
  func.func @transform_8(%arg0: i32) -> (i32, i32) {
    %c0_i32 = arith.constant 0 : i32
    %c0_i32_0 = arith.constant 0 : i32
    %c0_i32_1 = arith.constant 0 : i32
    return %c0_i32, %c0_i32_0 : i32, i32
  }
  func.func @transform_9(%arg0: i32) -> (i32, i32) {
    %c0_i32 = arith.constant 0 : i32
    %c0_i32_0 = arith.constant 0 : i32
    %c0_i32_1 = arith.constant 0 : i32
    return %c0_i32, %c0_i32_0 : i32, i32
  }
  func.func @transform_10(%arg0: i32) -> (i32, i32) {
    %c0_i32 = arith.constant 0 : i32
    %c0_i32_0 = arith.constant 0 : i32
    %c0_i32_1 = arith.constant 0 : i32
    return %c0_i32, %c0_i32_0 : i32, i32
  }
  func.func @transform_11(%arg0: i32) -> (i32, i32) {
    %c0_i32 = arith.constant 0 : i32
    %c0_i32_0 = arith.constant 0 : i32
    %c0_i32_1 = arith.constant 0 : i32
    return %c0_i32, %c0_i32_0 : i32, i32
  }
  func.func @transform_12(%arg0: i32) -> (i32, i32) {
    %c0_i32 = arith.constant 0 : i32
    %c0_i32_0 = arith.constant 0 : i32
    %c0_i32_1 = arith.constant 0 : i32
    return %c0_i32, %c0_i32_0 : i32, i32
  }
  func.func @transform_13(%arg0: i32) -> (i32, i32) {
    %c0_i32 = arith.constant 0 : i32
    %c0_i32_0 = arith.constant 0 : i32
    %c0_i32_1 = arith.constant 0 : i32
    return %c0_i32, %c0_i32_0 : i32, i32
  }
  func.func @transform_14(%arg0: i32) -> (i32, i32) {
    %c0_i32 = arith.constant 0 : i32
    %c0_i32_0 = arith.constant 0 : i32
    %c0_i32_1 = arith.constant 0 : i32
    return %c0_i32, %c0_i32_0 : i32, i32
  }
  func.func @transform_15(%arg0: i32) -> (i32, i32) {
    %c0_i32 = arith.constant 0 : i32
    %c0_i32_0 = arith.constant 0 : i32
    %c0_i32_1 = arith.constant 0 : i32
    return %c0_i32, %c0_i32_0 : i32, i32
  }
  func.func @transform_16(%arg0: i32) -> (i32, i32) {
    %c0_i32 = arith.constant 0 : i32
    %c0_i32_0 = arith.constant 0 : i32
    %c0_i32_1 = arith.constant 0 : i32
    return %c0_i32, %c0_i32_0 : i32, i32
  }
  func.func @transform_17(%arg0: i32) -> (i32, i32, i32) {
    %c0_i32 = arith.constant 0 : i32
    %c0_i32_0 = arith.constant 0 : i32
    %c0_i32_1 = arith.constant 0 : i32
    return %arg0, %c0_i32, %c0_i32_0 : i32, i32, i32
  }
}

</mosaic_0001>

<llo_original>
// kernel: tpu_custom_call.1
$region0: #{tpu_custom_call.1}
  #allocation0 [shape = 'u32[]', space=smem, size = 0x4, offset = 0x4, fixed_abs, tag = 'smem constant byte address 0x4 - core index']
  #allocation1 [shape = 'u32[144,128]{1,0:T(1,128)}', space=vmem, size = 0x12000, scoped, tag = 'internal scratch']
  %s0 = inlined_call_operand.vmem [shape: f32[2,64,128], index: 0, kind: input, shape index: {}]
  %s1 = inlined_call_operand.vmem [shape: f32[16,64], index: 1, kind: input, shape index: {}]
  %s2 = inlined_call_operand.vmem [shape: f32[16,1], index: 2, kind: input, shape index: {}]
  %s3 = inlined_call_operand.vmem [shape: f32[16,1], index: 3, kind: input, shape index: {}]
  %s4 = inlined_call_operand.vmem [shape: f32[9,4,4], index: 4, kind: input, shape index: {}]
  %s5 = inlined_call_operand.vmem [shape: f32[3,4,1], index: 5, kind: input, shape index: {}]
  %s6 = inlined_call_operand.vmem [shape: f32[3,4,1], index: 6, kind: input, shape index: {}]
  %s7 = inlined_call_operand.vmem [shape: f32[3,4,4], index: 7, kind: input, shape index: {}]
  %s8 = inlined_call_operand.vmem [shape: f32[64,16], index: 8, kind: input, shape index: {}]
  %s9 = inlined_call_operand.vmem [shape: f32[64,1], index: 9, kind: input, shape index: {}]
  %s10 = inlined_call_operand.vmem [shape: f32[64,1], index: 10, kind: input, shape index: {}]
  %s11 = inlined_call_operand.vmem [shape: f32[64,64], index: 11, kind: input, shape index: {}]
  %s12 = inlined_call_operand.vmem [shape: f32[64,64], index: 12, kind: input, shape index: {}]
  %s13 = inlined_call_operand.vmem [shape: f32[64,64], index: 13, kind: input, shape index: {}]
  %s14 = inlined_call_operand.vmem [shape: f32[64,1], index: 14, kind: input, shape index: {}]
  %s15 = inlined_call_operand.vmem [shape: f32[64,64], index: 15, kind: input, shape index: {}]
  %s16 = inlined_call_operand.vmem [shape: f32[64,1], index: 16, kind: input, shape index: {}]
  %s17 = inlined_call_operand.hbm [shape: f32[2,64,128], index: 17, kind: output, shape index: {}]
  %s18 = sld [smem:[#allocation0]]
  $region101: #{tpu_custom_call.1} parent=0
    _
  %s20 = ssub.s32 1, %s18
  %s21 = scalar_select 0, %s20, %s18
  $region1: #{tpu_custom_call.1} parent=0
    #allocation2 [shape = 'u8[65536]{0}', space=vmem, size = 0x10000, scoped, tag = 'output window, operand 0']
    #allocation3 [shape = 's32[2]{0}', space=sflag, size = 0x8, scoped, tag = 'scoped memory for tpu_custom_call.1']
    %22 = vsyncpa [#allocation3], 0
    %s23 = scalar_lea.sflag [#allocation3], 1
    %24 = vsyncpa %s23, 0
    loop: start=0, step=1, limit=4
    $region2: #{tpu_custom_call.1} parent=1 // loop_pre_header
      _
    $region3: #{tpu_custom_call.1} parent=1 // loop_header
      %s26 = sphi 0, %s30
      %p27 = scmp.ge.s32.totalorder %s26, 4
      %s36 = sphi 0, %s38
      %s39 = sphi 0, %s36
      %s40 = sphi 0, %s39
      %s56 = sphi 0, %s40
      %s60 = sphi 0, %s60
      %s62 = sphi 0, %s60
      %s63 = sphi 0, %s62
      %s77 = sphi 0, %s63
      %s81 = sphi 0, %s81
      %s83 = sphi 0, %s81
      %s84 = sphi 0, %s83
      %s98 = sphi 0, %s84
      %s102 = sphi 0, %s102
      %s104 = sphi 0, %s102
      %s105 = sphi 0, %s104
      %s119 = sphi 0, %s105
      %s123 = sphi 0, %s123
      %s125 = sphi 0, %s123
      %s126 = sphi 0, %s125
      %s140 = sphi 0, %s126
      %s144 = sphi 0, %s144
      %s146 = sphi 0, %s144
      %s147 = sphi 0, %s146
      %s161 = sphi 0, %s147
      %s165 = sphi 0, %s165
      %s167 = sphi 0, %s165
      %s168 = sphi 0, %s167
      %s182 = sphi 0, %s168
      %s186 = sphi 0, %s186
      %s188 = sphi 0, %s186
      %s189 = sphi 0, %s188
      %s203 = sphi 0, %s189
      %s207 = sphi 0, %s207
      %s209 = sphi 0, %s207
      %s210 = sphi 0, %s209
      %s224 = sphi 0, %s210
      %s228 = sphi 0, %s228
      %s230 = sphi 0, %s228
      %s231 = sphi 0, %s230
      %s245 = sphi 0, %s231
      %s249 = sphi 0, %s249
      %s251 = sphi 0, %s249
      %s252 = sphi 0, %s251
      %s266 = sphi 0, %s252
      %s270 = sphi 0, %s270
      %s272 = sphi 0, %s270
      %s273 = sphi 0, %s272
      %s287 = sphi 0, %s273
      %s291 = sphi 0, %s291
      %s293 = sphi 0, %s291
      %s294 = sphi 0, %s293
      %s308 = sphi 0, %s294
      %s312 = sphi 0, %s312
      %s314 = sphi 0, %s312
      %s315 = sphi 0, %s314
      %s329 = sphi 0, %s315
      %s333 = sphi 0, %s333
      %s335 = sphi 0, %s333
      %s336 = sphi 0, %s335
      %s350 = sphi 0, %s336
      %s354 = sphi 0, %s354
      %s356 = sphi 0, %s354
      %s357 = sphi 0, %s356
      %s371 = sphi 0, %s357
      %s375 = sphi 0, %s375
      %s377 = sphi 0, %s375
      %s378 = sphi 0, %s377
      %s392 = sphi 0, %s378
      %s398 = sphi 0, %s400
      %s401 = sphi 0, %s398
      %s402 = sphi 0, %s401
      %s418 = sphi 0, %s402
    $region4: #{tpu_custom_call.1} parent=1 // loop_header_branch
      %29 = sbr.rel (%p27) target = $region8
    $region5: #{tpu_custom_call.1} parent=1 // loop_body
      %s31 = ssub.s32 %s26, 1
      %s32 = ssub.s32 %s26, 2
      %s33 = sadd.s32 %s26, 1
      %s34 = ssub.s32 %s26, %s33
      %p35 = scmp.eq.s32.totalorder %s34, 0
      %s37 = sadd.s32 %s36, 1
      %s38 = scalar_select %p35, %s36, %s37
      %p41 = pneg %p35
      %p42 = scmp.eq.s32.totalorder %s26, 1
      %p43 = por %p41, %p42
      %p44 = scmp.ne.s32.totalorder %s36, %s39
      %p45 = scmp.eq.s32.totalorder %s26, 0
      %p46 = por %p44, %p45
      %p47 = scmp.ne.s32.totalorder %s36, %s39
      %p48 = scmp.eq.s32.totalorder %s31, 1
      %p49 = por %p47, %p48
      %p50 = scmp.ne.s32.totalorder %s39, %s40
      %p51 = scmp.eq.s32.totalorder %s31, 0
      %p52 = por %p50, %p51
      %p53 = scmp.ne.s32.totalorder %s39, %s40
      %p54 = scmp.eq.s32.totalorder %s32, 1
      %p55 = por %p53, %p54
      %p57 = scmp.ne.s32.totalorder %s40, %s56
      %p58 = scmp.eq.s32.totalorder %s32, 0
      %p59 = por %p57, %p58
      %s61 = sadd.s32 %s60, 1
      %p64 = scmp.eq.s32.totalorder %s26, 1
      %p65 = scmp.ne.s32.totalorder %s60, %s62
      %p66 = scmp.eq.s32.totalorder %s26, 0
      %p67 = por %p65, %p66
      %p68 = scmp.ne.s32.totalorder %s60, %s62
      %p69 = scmp.eq.s32.totalorder %s31, 1
      %p70 = por %p68, %p69
      %p71 = scmp.ne.s32.totalorder %s62, %s63
      %p72 = scmp.eq.s32.totalorder %s31, 0
      %p73 = por %p71, %p72
      %p74 = scmp.ne.s32.totalorder %s62, %s63
      %p75 = scmp.eq.s32.totalorder %s32, 1
      %p76 = por %p74, %p75
      %p78 = scmp.ne.s32.totalorder %s63, %s77
      %p79 = scmp.eq.s32.totalorder %s32, 0
      %p80 = por %p78, %p79
      %s82 = sadd.s32 %s81, 1
      %p85 = scmp.eq.s32.totalorder %s26, 1
      %p86 = scmp.ne.s32.totalorder %s81, %s83
      %p87 = scmp.eq.s32.totalorder %s26, 0
      %p88 = por %p86, %p87
      %p89 = scmp.ne.s32.totalorder %s81, %s83
      %p90 = scmp.eq.s32.totalorder %s31, 1
      %p91 = por %p89, %p90
      %p92 = scmp.ne.s32.totalorder %s83, %s84
      %p93 = scmp.eq.s32.totalorder %s31, 0
      %p94 = por %p92, %p93
      %p95 = scmp.ne.s32.totalorder %s83, %s84
      %p96 = scmp.eq.s32.totalorder %s32, 1
      %p97 = por %p95, %p96
      %p99 = scmp.ne.s32.totalorder %s84, %s98
      %p100 = scmp.eq.s32.totalorder %s32, 0
      %p101 = por %p99, %p100
      %s103 = sadd.s32 %s102, 1
      %p106 = scmp.eq.s32.totalorder %s26, 1
      %p107 = scmp.ne.s32.totalorder %s102, %s104
      %p108 = scmp.eq.s32.totalorder %s26, 0
      %p109 = por %p107, %p108
      %p110 = scmp.ne.s32.totalorder %s102, %s104
      %p111 = scmp.eq.s32.totalorder %s31, 1
      %p112 = por %p110, %p111
      %p113 = scmp.ne.s32.totalorder %s104, %s105
      %p114 = scmp.eq.s32.totalorder %s31, 0
      %p115 = por %p113, %p114
      %p116 = scmp.ne.s32.totalorder %s104, %s105
      %p117 = scmp.eq.s32.totalorder %s32, 1
      %p118 = por %p116, %p117
      %p120 = scmp.ne.s32.totalorder %s105, %s119
      %p121 = scmp.eq.s32.totalorder %s32, 0
      %p122 = por %p120, %p121
      %s124 = sadd.s32 %s123, 1
      %p127 = scmp.eq.s32.totalorder %s26, 1
      %p128 = scmp.ne.s32.totalorder %s123, %s125
      %p129 = scmp.eq.s32.totalorder %s26, 0
      %p130 = por %p128, %p129
      %p131 = scmp.ne.s32.totalorder %s123, %s125
      %p132 = scmp.eq.s32.totalorder %s31, 1
      %p133 = por %p131, %p132
      %p134 = scmp.ne.s32.totalorder %s125, %s126
      %p135 = scmp.eq.s32.totalorder %s31, 0
      %p136 = por %p134, %p135
      %p137 = scmp.ne.s32.totalorder %s125, %s126
      %p138 = scmp.eq.s32.totalorder %s32, 1
      %p139 = por %p137, %p138
      %p141 = scmp.ne.s32.totalorder %s126, %s140
      %p142 = scmp.eq.s32.totalorder %s32, 0
      %p143 = por %p141, %p142
      %s145 = sadd.s32 %s144, 1
      %p148 = scmp.eq.s32.totalorder %s26, 1
      %p149 = scmp.ne.s32.totalorder %s144, %s146
      %p150 = scmp.eq.s32.totalorder %s26, 0
      %p151 = por %p149, %p150
      %p152 = scmp.ne.s32.totalorder %s144, %s146
      %p153 = scmp.eq.s32.totalorder %s31, 1
      %p154 = por %p152, %p153
      %p155 = scmp.ne.s32.totalorder %s146, %s147
      %p156 = scmp.eq.s32.totalorder %s31, 0
      %p157 = por %p155, %p156
      %p158 = scmp.ne.s32.totalorder %s146, %s147
      %p159 = scmp.eq.s32.totalorder %s32, 1
      %p160 = por %p158, %p159
      %p162 = scmp.ne.s32.totalorder %s147, %s161
      %p163 = scmp.eq.s32.totalorder %s32, 0
      %p164 = por %p162, %p163
      %s166 = sadd.s32 %s165, 1
      %p169 = scmp.eq.s32.totalorder %s26, 1
      %p170 = scmp.ne.s32.totalorder %s165, %s167
      %p171 = scmp.eq.s32.totalorder %s26, 0
      %p172 = por %p170, %p171
      %p173 = scmp.ne.s32.totalorder %s165, %s167
      %p174 = scmp.eq.s32.totalorder %s31, 1
      %p175 = por %p173, %p174
      %p176 = scmp.ne.s32.totalorder %s167, %s168
      %p177 = scmp.eq.s32.totalorder %s31, 0
      %p178 = por %p176, %p177
      %p179 = scmp.ne.s32.totalorder %s167, %s168
      %p180 = scmp.eq.s32.totalorder %s32, 1
      %p181 = por %p179, %p180
      %p183 = scmp.ne.s32.totalorder %s168, %s182
      %p184 = scmp.eq.s32.totalorder %s32, 0
      %p185 = por %p183, %p184
      %s187 = sadd.s32 %s186, 1
      %p190 = scmp.eq.s32.totalorder %s26, 1
      %p191 = scmp.ne.s32.totalorder %s186, %s188
      %p192 = scmp.eq.s32.totalorder %s26, 0
      %p193 = por %p191, %p192
      %p194 = scmp.ne.s32.totalorder %s186, %s188
      %p195 = scmp.eq.s32.totalorder %s31, 1
      %p196 = por %p194, %p195
      %p197 = scmp.ne.s32.totalorder %s188, %s189
      %p198 = scmp.eq.s32.totalorder %s31, 0
      %p199 = por %p197, %p198
      %p200 = scmp.ne.s32.totalorder %s188, %s189
      %p201 = scmp.eq.s32.totalorder %s32, 1
      %p202 = por %p200, %p201
      %p204 = scmp.ne.s32.totalorder %s189, %s203
      %p205 = scmp.eq.s32.totalorder %s32, 0
      %p206 = por %p204, %p205
      %s208 = sadd.s32 %s207, 1
      %p211 = scmp.eq.s32.totalorder %s26, 1
      %p212 = scmp.ne.s32.totalorder %s207, %s209
      %p213 = scmp.eq.s32.totalorder %s26, 0
      %p214 = por %p212, %p213
      %p215 = scmp.ne.s32.totalorder %s207, %s209
      %p216 = scmp.eq.s32.totalorder %s31, 1
      %p217 = por %p215, %p216
      %p218 = scmp.ne.s32.totalorder %s209, %s210
      %p219 = scmp.eq.s32.totalorder %s31, 0
      %p220 = por %p218, %p219
      %p221 = scmp.ne.s32.totalorder %s209, %s210
      %p222 = scmp.eq.s32.totalorder %s32, 1
      %p223 = por %p221, %p222
      %p225 = scmp.ne.s32.totalorder %s210, %s224
      %p226 = scmp.eq.s32.totalorder %s32, 0
      %p227 = por %p225, %p226
      %s229 = sadd.s32 %s228, 1
      %p232 = scmp.eq.s32.totalorder %s26, 1
      %p233 = scmp.ne.s32.totalorder %s228, %s230
      %p234 = scmp.eq.s32.totalorder %s26, 0
      %p235 = por %p233, %p234
      %p236 = scmp.ne.s32.totalorder %s228, %s230
      %p237 = scmp.eq.s32.totalorder %s31, 1
      %p238 = por %p236, %p237
      %p239 = scmp.ne.s32.totalorder %s230, %s231
      %p240 = scmp.eq.s32.totalorder %s31, 0
      %p241 = por %p239, %p240
      %p242 = scmp.ne.s32.totalorder %s230, %s231
      %p243 = scmp.eq.s32.totalorder %s32, 1
      %p244 = por %p242, %p243
      %p246 = scmp.ne.s32.totalorder %s231, %s245
      %p247 = scmp.eq.s32.totalorder %s32, 0
      %p248 = por %p246, %p247
      %s250 = sadd.s32 %s249, 1
      %p253 = scmp.eq.s32.totalorder %s26, 1
      %p254 = scmp.ne.s32.totalorder %s249, %s251
      %p255 = scmp.eq.s32.totalorder %s26, 0
      %p256 = por %p254, %p255
      %p257 = scmp.ne.s32.totalorder %s249, %s251
      %p258 = scmp.eq.s32.totalorder %s31, 1
      %p259 = por %p257, %p258
      %p260 = scmp.ne.s32.totalorder %s251, %s252
      %p261 = scmp.eq.s32.totalorder %s31, 0
      %p262 = por %p260, %p261
      %p263 = scmp.ne.s32.totalorder %s251, %s252
      %p264 = scmp.eq.s32.totalorder %s32, 1
      %p265 = por %p263, %p264
      %p267 = scmp.ne.s32.totalorder %s252, %s266
      %p268 = scmp.eq.s32.totalorder %s32, 0
      %p269 = por %p267, %p268
      %s271 = sadd.s32 %s270, 1
      %p274 = scmp.eq.s32.totalorder %s26, 1
      %p275 = scmp.ne.s32.totalorder %s270, %s272
      %p276 = scmp.eq.s32.totalorder %s26, 0
      %p277 = por %p275, %p276
      %p278 = scmp.ne.s32.totalorder %s270, %s272
      %p279 = scmp.eq.s32.totalorder %s31, 1
      %p280 = por %p278, %p279
      %p281 = scmp.ne.s32.totalorder %s272, %s273
      %p282 = scmp.eq.s32.totalorder %s31, 0
      %p283 = por %p281, %p282
      %p284 = scmp.ne.s32.totalorder %s272, %s273
      %p285 = scmp.eq.s32.totalorder %s32, 1
      %p286 = por %p284, %p285
      %p288 = scmp.ne.s32.totalorder %s273, %s287
      %p289 = scmp.eq.s32.totalorder %s32, 0
      %p290 = por %p288, %p289
      %s292 = sadd.s32 %s291, 1
      %p295 = scmp.eq.s32.totalorder %s26, 1
      %p296 = scmp.ne.s32.totalorder %s291, %s293
      %p297 = scmp.eq.s32.totalorder %s26, 0
      %p298 = por %p296, %p297
      %p299 = scmp.ne.s32.totalorder %s291, %s293
      %p300 = scmp.eq.s32.totalorder %s31, 1
      %p301 = por %p299, %p300
      %p302 = scmp.ne.s32.totalorder %s293, %s294
      %p303 = scmp.eq.s32.totalorder %s31, 0
      %p304 = por %p302, %p303
      %p305 = scmp.ne.s32.totalorder %s293, %s294
      %p306 = scmp.eq.s32.totalorder %s32, 1
      %p307 = por %p305, %p306
      %p309 = scmp.ne.s32.totalorder %s294, %s308
      %p310 = scmp.eq.s32.totalorder %s32, 0
      %p311 = por %p309, %p310
      %s313 = sadd.s32 %s312, 1
      %p316 = scmp.eq.s32.totalorder %s26, 1
      %p317 = scmp.ne.s32.totalorder %s312, %s314
      %p318 = scmp.eq.s32.totalorder %s26, 0
      %p319 = por %p317, %p318
      %p320 = scmp.ne.s32.totalorder %s312, %s314
      %p321 = scmp.eq.s32.totalorder %s31, 1
      %p322 = por %p320, %p321
      %p323 = scmp.ne.s32.totalorder %s314, %s315
      %p324 = scmp.eq.s32.totalorder %s31, 0
      %p325 = por %p323, %p324
      %p326 = scmp.ne.s32.totalorder %s314, %s315
      %p327 = scmp.eq.s32.totalorder %s32, 1
      %p328 = por %p326, %p327
      %p330 = scmp.ne.s32.totalorder %s315, %s329
      %p331 = scmp.eq.s32.totalorder %s32, 0
      %p332 = por %p330, %p331
      %s334 = sadd.s32 %s333, 1
      %p337 = scmp.eq.s32.totalorder %s26, 1
      %p338 = scmp.ne.s32.totalorder %s333, %s335
      %p339 = scmp.eq.s32.totalorder %s26, 0
      %p340 = por %p338, %p339
      %p341 = scmp.ne.s32.totalorder %s333, %s335
      %p342 = scmp.eq.s32.totalorder %s31, 1
      %p343 = por %p341, %p342
      %p344 = scmp.ne.s32.totalorder %s335, %s336
      %p345 = scmp.eq.s32.totalorder %s31, 0
      %p346 = por %p344, %p345
      %p347 = scmp.ne.s32.totalorder %s335, %s336
      %p348 = scmp.eq.s32.totalorder %s32, 1
      %p349 = por %p347, %p348
      %p351 = scmp.ne.s32.totalorder %s336, %s350
      %p352 = scmp.eq.s32.totalorder %s32, 0
      %p353 = por %p351, %p352
      %s355 = sadd.s32 %s354, 1
      %p358 = scmp.eq.s32.totalorder %s26, 1
      %p359 = scmp.ne.s32.totalorder %s354, %s356
      %p360 = scmp.eq.s32.totalorder %s26, 0
      %p361 = por %p359, %p360
      %p362 = scmp.ne.s32.totalorder %s354, %s356
      %p363 = scmp.eq.s32.totalorder %s31, 1
      %p364 = por %p362, %p363
      %p365 = scmp.ne.s32.totalorder %s356, %s357
      %p366 = scmp.eq.s32.totalorder %s31, 0
      %p367 = por %p365, %p366
      %p368 = scmp.ne.s32.totalorder %s356, %s357
      %p369 = scmp.eq.s32.totalorder %s32, 1
      %p370 = por %p368, %p369
      %p372 = scmp.ne.s32.totalorder %s357, %s371
      %p373 = scmp.eq.s32.totalorder %s32, 0
      %p374 = por %p372, %p373
      %s376 = sadd.s32 %s375, 1
      %p379 = scmp.eq.s32.totalorder %s26, 1
      %p380 = scmp.ne.s32.totalorder %s375, %s377
      %p381 = scmp.eq.s32.totalorder %s26, 0
      %p382 = por %p380, %p381
      %p383 = scmp.ne.s32.totalorder %s375, %s377
      %p384 = scmp.eq.s32.totalorder %s31, 1
      %p385 = por %p383, %p384
      %p386 = scmp.ne.s32.totalorder %s377, %s378
      %p387 = scmp.eq.s32.totalorder %s31, 0
      %p388 = por %p386, %p387
      %p389 = scmp.ne.s32.totalorder %s377, %s378
      %p390 = scmp.eq.s32.totalorder %s32, 1
      %p391 = por %p389, %p390
      %p393 = scmp.ne.s32.totalorder %s378, %s392
      %p394 = scmp.eq.s32.totalorder %s32, 0
      %p395 = por %p393, %p394
      %s396 = ssub.s32 %s26, %s33
      %p397 = scmp.eq.s32.totalorder %s396, 0
      %s399 = sadd.s32 %s398, 1
      %s400 = scalar_select %p397, %s398, %s399
      %p403 = pneg %p397
      %p404 = scmp.eq.s32.totalorder %s26, 1
      %p405 = por %p403, %p404
      %p406 = scmp.ne.s32.totalorder %s398, %s401
      %p407 = scmp.eq.s32.totalorder %s26, 0
      %p408 = por %p406, %p407
      %p409 = scmp.ne.s32.totalorder %s398, %s401
      %p410 = scmp.eq.s32.totalorder %s31, 1
      %p411 = por %p409, %p410
      %p412 = scmp.ne.s32.totalorder %s401, %s402
      %p413 = scmp.eq.s32.totalorder %s31, 0
      %p414 = por %p412, %p413
      %p415 = scmp.ne.s32.totalorder %s401, %s402
      %p416 = scmp.eq.s32.totalorder %s32, 1
      %p417 = por %p415, %p416
      %p419 = scmp.ne.s32.totalorder %s402, %s418
      %p420 = scmp.eq.s32.totalorder %s32, 0
      %p421 = por %p419, %p420
      %p422 = scmp.le.s32.totalorder 1, %s26
      %p423 = scmp.lt.s32.totalorder %s26, 3
      %p424 = pnand %p422, %p423
      %p425 = pneg %p424
      // Predicated region
      $region9: #{tpu_custom_call.1} parent=5 // pred_check
        _
      $region10: #{tpu_custom_call.1} parent=5 // pred_check_branch
        %427 = sbr.rel (%p424) target = $region12
      $region11: #{tpu_custom_call.1} parent=5 // pred_region
        %s428 = ssub.s32 %s26, 1
        // Predicated region
        $region13: #{tpu_custom_call.1} parent=11 // pred_check
          %p429 = pneg %p73
        $region14: #{tpu_custom_call.1} parent=11 // pred_check_branch
          %431 = sbr.rel (%p429) target = $region16
        $region15: #{tpu_custom_call.1} parent=11 // pred_region
          _
        $region16: #{tpu_custom_call.1} parent=11 // pred_fallthru
          _
        // Predicated region
        $region17: #{tpu_custom_call.1} parent=11 // pred_check
          %p432 = pneg %p94
        $region18: #{tpu_custom_call.1} parent=11 // pred_check_branch
          %434 = sbr.rel (%p432) target = $region20
        $region19: #{tpu_custom_call.1} parent=11 // pred_region
          _
        $region20: #{tpu_custom_call.1} parent=11 // pred_fallthru
          _
        // Predicated region
        $region21: #{tpu_custom_call.1} parent=11 // pred_check
          %p435 = pneg %p115
        $region22: #{tpu_custom_call.1} parent=11 // pred_check_branch
          %437 = sbr.rel (%p435) target = $region24
        $region23: #{tpu_custom_call.1} parent=11 // pred_region
          _
        $region24: #{tpu_custom_call.1} parent=11 // pred_fallthru
          _
        // Predicated region
        $region25: #{tpu_custom_call.1} parent=11 // pred_check
          %p438 = pneg %p136
        $region26: #{tpu_custom_call.1} parent=11 // pred_check_branch
          %440 = sbr.rel (%p438) target = $region28
        $region27: #{tpu_custom_call.1} parent=11 // pred_region
          _
        $region28: #{tpu_custom_call.1} parent=11 // pred_fallthru
          _
        // Predicated region
        $region29: #{tpu_custom_call.1} parent=11 // pred_check
          %p441 = pneg %p157
        $region30: #{tpu_custom_call.1} parent=11 // pred_check_branch
          %443 = sbr.rel (%p441) target = $region32
        $region31: #{tpu_custom_call.1} parent=11 // pred_region
          _
        $region32: #{tpu_custom_call.1} parent=11 // pred_fallthru
          _
        // Predicated region
        $region33: #{tpu_custom_call.1} parent=11 // pred_check
          %p444 = pneg %p178
        $region34: #{tpu_custom_call.1} parent=11 // pred_check_branch
          %446 = sbr.rel (%p444) target = $region36
        $region35: #{tpu_custom_call.1} parent=11 // pred_region
          _
        $region36: #{tpu_custom_call.1} parent=11 // pred_fallthru
          _
        // Predicated region
        $region37: #{tpu_custom_call.1} parent=11 // pred_check
          %p447 = pneg %p199
        $region38: #{tpu_custom_call.1} parent=11 // pred_check_branch
          %449 = sbr.rel (%p447) target = $region40
        $region39: #{tpu_custom_call.1} parent=11 // pred_region
          _
        $region40: #{tpu_custom_call.1} parent=11 // pred_fallthru
          _
        // Predicated region
        $region41: #{tpu_custom_call.1} parent=11 // pred_check
          %p450 = pneg %p220
        $region42: #{tpu_custom_call.1} parent=11 // pred_check_branch
          %452 = sbr.rel (%p450) target = $region44
        $region43: #{tpu_custom_call.1} parent=11 // pred_region
          _
        $region44: #{tpu_custom_call.1} parent=11 // pred_fallthru
          _
        // Predicated region
        $region45: #{tpu_custom_call.1} parent=11 // pred_check
          %p453 = pneg %p241
        $region46: #{tpu_custom_call.1} parent=11 // pred_check_branch
          %455 = sbr.rel (%p453) target = $region48
        $region47: #{tpu_custom_call.1} parent=11 // pred_region
          _
        $region48: #{tpu_custom_call.1} parent=11 // pred_fallthru
          _
        // Predicated region
        $region49: #{tpu_custom_call.1} parent=11 // pred_check
          %p456 = pneg %p262
        $region50: #{tpu_custom_call.1} parent=11 // pred_check_branch
          %458 = sbr.rel (%p456) target = $region52
        $region51: #{tpu_custom_call.1} parent=11 // pred_region
          _
        $region52: #{tpu_custom_call.1} parent=11 // pred_fallthru
          _
        // Predicated region
        $region53: #{tpu_custom_call.1} parent=11 // pred_check
          %p459 = pneg %p283
        $region54: #{tpu_custom_call.1} parent=11 // pred_check_branch
          %461 = sbr.rel (%p459) target = $region56
        $region55: #{tpu_custom_call.1} parent=11 // pred_region
          _
        $region56: #{tpu_custom_call.1} parent=11 // pred_fallthru
          _
        // Predicated region
        $region57: #{tpu_custom_call.1} parent=11 // pred_check
          %p462 = pneg %p304
        $region58: #{tpu_custom_call.1} parent=11 // pred_check_branch
          %464 = sbr.rel (%p462) target = $region60
        $region59: #{tpu_custom_call.1} parent=11 // pred_region
          _
        $region60: #{tpu_custom_call.1} parent=11 // pred_fallthru
          _
        // Predicated region
        $region61: #{tpu_custom_call.1} parent=11 // pred_check
          %p465 = pneg %p325
        $region62: #{tpu_custom_call.1} parent=11 // pred_check_branch
          %467 = sbr.rel (%p465) target = $region64
        $region63: #{tpu_custom_call.1} parent=11 // pred_region
          _
        $region64: #{tpu_custom_call.1} parent=11 // pred_fallthru
          _
        // Predicated region
        $region65: #{tpu_custom_call.1} parent=11 // pred_check
          %p468 = pneg %p346
        $region66: #{tpu_custom_call.1} parent=11 // pred_check_branch
          %470 = sbr.rel (%p468) target = $region68
        $region67: #{tpu_custom_call.1} parent=11 // pred_region
          _
        $region68: #{tpu_custom_call.1} parent=11 // pred_fallthru
          _
        // Predicated region
        $region69: #{tpu_custom_call.1} parent=11 // pred_check
          %p471 = pneg %p367
        $region70: #{tpu_custom_call.1} parent=11 // pred_check_branch
          %473 = sbr.rel (%p471) target = $region72
        $region71: #{tpu_custom_call.1} parent=11 // pred_region
          _
        $region72: #{tpu_custom_call.1} parent=11 // pred_fallthru
          _
        // Predicated region
        $region73: #{tpu_custom_call.1} parent=11 // pred_check
          %p474 = pneg %p388
        $region74: #{tpu_custom_call.1} parent=11 // pred_check_branch
          %476 = sbr.rel (%p474) target = $region76
        $region75: #{tpu_custom_call.1} parent=11 // pred_region
          _
        $region76: #{tpu_custom_call.1} parent=11 // pred_fallthru
          _
      $region12: #{tpu_custom_call.1} parent=5 // pred_fallthru
        _
      %p477 = scmp.lt.s32.totalorder %s26, 2
      // Predicated region
      $region77: #{tpu_custom_call.1} parent=5 // pred_check
        %p478 = pneg %p477
      $region78: #{tpu_custom_call.1} parent=5 // pred_check_branch
        %480 = sbr.rel (%p478) target = $region80
      $region79: #{tpu_custom_call.1} parent=5 // pred_region
        // Predicated region
        $region81: #{tpu_custom_call.1} parent=79 // pred_check
          %p481 = pneg %p46
        $region82: #{tpu_custom_call.1} parent=79 // pred_check_branch
          %483 = sbr.rel (%p481) target = $region84
        $region83: #{tpu_custom_call.1} parent=79 // pred_region
          %p484 = scmp.lt.s32.totalorder %s26, 1
          %s485 = scalar_select %p484, %s26, 1
          %s486 = smul.addr %s485, 8
          %s487 = smul.addr %s486, 8
          %s488 = scalar_lea.vmem %s0, %s487
        $region84: #{tpu_custom_call.1} parent=79 // pred_fallthru
          _
      $region80: #{tpu_custom_call.1} parent=5 // pred_fallthru
        _
      %p489 = scmp.le.s32.totalorder 1, %s26
      %p490 = scmp.lt.s32.totalorder %s26, 3
      %p491 = pnand %p489, %p490
      %p492 = pneg %p491
      // Predicated region
      $region85: #{tpu_custom_call.1} parent=5 // pred_check
        _
      $region86: #{tpu_custom_call.1} parent=5 // pred_check_branch
        %494 = sbr.rel (%p491) target = $region88
      $region87: #{tpu_custom_call.1} parent=5 // pred_region
        %s495 = ssub.s32 %s26, 1
        %p496 = scmp.lt.s32.totalorder %s31, 1
        %s497 = scalar_select %p496, %s31, 1
        %s498 = smul.addr %s497, 8
        %s499 = smul.addr %s498, 8
        %s500 = scalar_lea.vmem %s0, %s499
        %p501 = pneg %p52
        %p502 = pneg %p49
        %p503 = pneg %p73
        %p504 = pneg %p70
        %p505 = pneg %p94
        %p506 = pneg %p91
        %p507 = pneg %p115
        %p508 = pneg %p112
        %p509 = pneg %p136
        %p510 = pneg %p133
        %p511 = pneg %p157
        %p512 = pneg %p154
        %p513 = pneg %p178
        %p514 = pneg %p175
        %p515 = pneg %p199
        %p516 = pneg %p196
        %p517 = pneg %p220
        %p518 = pneg %p217
        %p519 = pneg %p241
        %p520 = pneg %p238
        %p521 = pneg %p262
        %p522 = pneg %p259
        %p523 = pneg %p283
        %p524 = pneg %p280
        %p525 = pneg %p304
        %p526 = pneg %p301
        %p527 = pneg %p325
        %p528 = pneg %p322
        %p529 = pneg %p346
        %p530 = pneg %p343
        %p531 = pneg %p367
        %p532 = pneg %p364
        %p533 = pneg %p388
        %p534 = pneg %p385
        %p535 = pneg %p414
        %p536 = pneg %p411
        %s537 = sand.u32 %s401, 1
        %s538 = scalar_lea.sflag [#allocation3], %s537
        %s539 = sand.u32 %s401, 1
        %s540 = smul.addr %s539, 64
        %s541 = scalar_lea.vmem [#allocation2], %s540
        %p542 = scmp.lt.s32.totalorder %s31, 1
        %s543 = scalar_select %p542, %s31, 1
        %s544 = smul.addr %s543, 8
        %s545 = smul.addr %s544, 8
        %s546 = scalar_lea.vmem %s0, %s545
        %v547 = vld [vmem:[%s546] sm:$0xff]
        %v548 = vld [vmem:[%s546 + $0x8] sm:$0xff]
        %v549 = vld [vmem:[%s546 + $0x10] sm:$0xff]
        %v550 = vld [vmem:[%s546 + $0x18] sm:$0xff]
        %v551 = vld [vmem:[%s546 + $0x20] sm:$0xff]
        %v552 = vld [vmem:[%s546 + $0x28] sm:$0xff]
        %v553 = vld [vmem:[%s546 + $0x30] sm:$0xff]
        %v554 = vld [vmem:[%s546 + $0x38] sm:$0xff]
        %v555 = vld [vmem:[%s1] sm:$0xff]
        %v556 = vld [vmem:[%s1 + $0x8] sm:$0xff]
        %vm557 = vcmask 523264
        %v559 = vsel %vm557, %v555, 0
        %v562 = vsel %vm557, %v556, 0
        %564 = vmatprep.subr.mxu0 0.0
        %565 = vmatpush1.msra.mxu0 %v547
        %566 = vmatprep.subr.mxu0 0.0
        %567 = vmatpush1.msra.mxu0 %v548
        %568 = vmatprep.subr.mxu0 0.0
        %569 = vmatpush1.msra.mxu0 %v549
        %570 = vmatprep.subr.mxu0 0.0
        %571 = vmatpush1.msra.mxu0 %v550
        %572 = vmatprep.subr.mxu0 0.0
        %573 = vmatpush1.msra.mxu0 %v551
        %574 = vmatprep.subr.mxu0 0.0
        %575 = vmatpush1.msra.mxu0 %v552
        %576 = vmatprep.subr.mxu0 0.0
        %577 = vmatpush1.msra.mxu0 %v553
        %578 = vmatprep.subr.mxu0 0.0
        %579 = vmatpush1.msra.mxu0 %v554
        %580 = vmatprep.subr.mxu0 0.0
        %581 = vmatpush1.msra.mxu0 0.0
        %582 = vmatprep.subr.mxu0 0.0
        %583 = vmatpush1.msra.mxu0 0.0
        %584 = vmatprep.subr.mxu0 0.0
        %585 = vmatpush1.msra.mxu0 0.0
        %586 = vmatprep.subr.mxu0 0.0
        %587 = vmatpush1.msra.mxu0 0.0
        %588 = vmatprep.subr.mxu0 0.0
        %589 = vmatpush1.msra.mxu0 0.0
        %590 = vmatprep.subr.mxu0 0.0
        %591 = vmatpush1.msra.mxu0 0.0
        %592 = vmatprep.subr.mxu0 0.0
        %593 = vmatpush1.msra.mxu0 0.0
        %594 = vmatprep.subr.mxu0 0.0
        %595 = vmatpush1.msra.mxu0 0.0
        %596 = vmatprep.subr.mxu0 0.0
        %597 = vmatpush1.msra.mxu0 0.0
        %598 = vmatprep.subr.mxu0 0.0
        %599 = vmatpush1.msra.mxu0 0.0
        %600 = vmatprep.subr.mxu0 0.0
        %601 = vmatpush1.msra.mxu0 0.0
        %602 = vmatprep.subr.mxu0 0.0
        %603 = vmatpush1.msra.mxu0 0.0
        %604 = vmatprep.subr.mxu0 0.0
        %605 = vmatpush1.msra.mxu0 0.0
        %606 = vmatprep.subr.mxu0 0.0
        %607 = vmatpush1.msra.mxu0 0.0
        %608 = vmatprep.subr.mxu0 0.0
        %609 = vmatpush1.msra.mxu0 0.0
        %610 = vmatprep.subr.mxu0 0.0
        %611 = vmatpush1.msra.mxu0 0.0
        %612 = vmatprep.subr.mxu0 0.0
        %613 = vmatpush1.msra.mxu0 0.0
        %614 = vmatprep.subr.mxu0 0.0
        %615 = vmatpush1.msra.mxu0 0.0
        %616 = vmatprep.subr.mxu0 0.0
        %617 = vmatpush1.msra.mxu0 0.0
        %618 = vmatprep.subr.mxu0 0.0
        %619 = vmatpush1.msra.mxu0 0.0
        %620 = vmatprep.subr.mxu0 0.0
        %621 = vmatpush1.msra.mxu0 0.0
        %622 = vmatprep.subr.mxu0 0.0
        %623 = vmatpush1.msra.mxu0 0.0
        %624 = vmatprep.subr.mxu0 0.0
        %625 = vmatpush1.msra.mxu0 0.0
        %626 = vmatprep.subr.mxu0 0.0
        %627 = vmatpush1.msra.mxu0 0.0
        %628 = vmatprep.mubr.f32.mxu0 0.0
        %629 = vmatmul.mubr.f32.gmra.mrb[0].mxu0 %v559
        %v630 = vpop.f32.mrb[0].mxu0
        %v631 = vadd.f32 0.0, %v630
        %v632 = vpop.f32.mrb[0].mxu0
        %633 = vmatprep.mubr.f32.mxu0 0.0
        %634 = vmatmul.mubr.f32.gmra.mrb[0].mxu0 %v562
        %v635 = vpop.f32.mrb[0].mxu0
        %v636 = vadd.f32 0.0, %v635
        %v637 = vpop.f32.mrb[0].mxu0
        %638 = vdwg.mxu0
        %v639 = vld [vmem:[%s2] sm:$0xff]
        %v640 = vld [vmem:[%s2 + $0x8] sm:$0xff]
        %642 = vset.pattern.permute.xlu0 0
        %643 = vperm.xlu0 %642, %v639
        %v644 = vpop.permute.xlu0 %643
        %647 = vset.pattern.permute.xlu0 0
        %648 = vperm.xlu0 %647, %v640
        %v649 = vpop.permute.xlu0 %648
        %v651 = vmul.f32 %v631, %v644
        %v652 = vmul.f32 %v636, %v649
        %v653 = vld [vmem:[%s3] sm:$0xff]
        %v654 = vld [vmem:[%s3 + $0x8] sm:$0xff]
        %656 = vset.pattern.permute.xlu0 0
        %657 = vperm.xlu0 %656, %v653
        %v658 = vpop.permute.xlu0 %657
        %661 = vset.pattern.permute.xlu0 0
        %662 = vperm.xlu0 %661, %v654
        %v663 = vpop.permute.xlu0 %662
        %v665 = vadd.f32 %v651, %v658
        %v666 = vadd.f32 %v652, %v663
        %v667 = vmax.f32 %v665, 0.0
        %v668 = vmax.f32 %v666, 0.0
        %v669 = vld [vmem:[%s4] sm:$0xf]
        %v671 = vrot.slane %v667, 4
        %672 = vrot.lane.b32.xlu0 %v671, 1
        %v673 = vpop.permute.xlu0 %672
        %vm675 = vcmask 7168
        %v676 = vsel %vm675, 0.0, %v673
        %s677 = scalar_lea.vmem %s4, 4
        %v678 = vld [vmem:[%s677] sm:$0xf]
        %vm679 = vcmask 31744
        %v681 = vsel %vm679, %v678, 0
        %vm683 = vcmask 1043456
        %v684 = vsel %vm683, %v671, 0
        %686 = vmatprep.subr.mxu0 0.0
        %687 = vmatpush1.msra.mxu0 %v684
        %688 = vmatprep.subr.mxu0 0.0
        %689 = vmatpush1.msra.mxu0 0.0
        %690 = vmatprep.subr.mxu0 0.0
        %691 = vmatpush1.msra.mxu0 0.0
        %692 = vmatprep.subr.mxu0 0.0
        %693 = vmatpush1.msra.mxu0 0.0
        %694 = vmatprep.subr.mxu0 0.0
        %695 = vmatpush1.msra.mxu0 0.0
        %696 = vmatprep.subr.mxu0 0.0
        %697 = vmatpush1.msra.mxu0 0.0
        %698 = vmatprep.subr.mxu0 0.0
        %699 = vmatpush1.msra.mxu0 0.0
        %700 = vmatprep.subr.mxu0 0.0
        %701 = vmatpush1.msra.mxu0 0.0
        %702 = vmatprep.subr.mxu0 0.0
        %703 = vmatpush1.msra.mxu0 0.0
        %704 = vmatprep.subr.mxu0 0.0
        %705 = vmatpush1.msra.mxu0 0.0
        %706 = vmatprep.subr.mxu0 0.0
        %707 = vmatpush1.msra.mxu0 0.0
        %708 = vmatprep.subr.mxu0 0.0
        %709 = vmatpush1.msra.mxu0 0.0
        %710 = vmatprep.subr.mxu0 0.0
        %711 = vmatpush1.msra.mxu0 0.0
        %712 = vmatprep.subr.mxu0 0.0
        %713 = vmatpush1.msra.mxu0 0.0
        %714 = vmatprep.subr.mxu0 0.0
        %715 = vmatpush1.msra.mxu0 0.0
        %716 = vmatprep.subr.mxu0 0.0
        %717 = vmatpush1.msra.mxu0 0.0
        %718 = vmatprep.subr.mxu0 0.0
        %719 = vmatpush1.msra.mxu0 0.0
        %720 = vmatprep.subr.mxu0 0.0
        %721 = vmatpush1.msra.mxu0 0.0
        %722 = vmatprep.subr.mxu0 0.0
        %723 = vmatpush1.msra.mxu0 0.0
        %724 = vmatprep.subr.mxu0 0.0
        %725 = vmatpush1.msra.mxu0 0.0
        %726 = vmatprep.subr.mxu0 0.0
        %727 = vmatpush1.msra.mxu0 0.0
        %728 = vmatprep.subr.mxu0 0.0
        %729 = vmatpush1.msra.mxu0 0.0
        %730 = vmatprep.subr.mxu0 0.0
        %731 = vmatpush1.msra.mxu0 0.0
        %732 = vmatprep.subr.mxu0 0.0
        %733 = vmatpush1.msra.mxu0 0.0
        %734 = vmatprep.subr.mxu0 0.0
        %735 = vmatpush1.msra.mxu0 0.0
        %736 = vmatprep.subr.mxu0 0.0
        %737 = vmatpush1.msra.mxu0 0.0
        %738 = vmatprep.subr.mxu0 0.0
        %739 = vmatpush1.msra.mxu0 0.0
        %740 = vmatprep.subr.mxu0 0.0
        %741 = vmatpush1.msra.mxu0 0.0
        %742 = vmatprep.subr.mxu0 0.0
        %743 = vmatpush1.msra.mxu0 0.0
        %744 = vmatprep.subr.mxu0 0.0
        %745 = vmatpush1.msra.mxu0 0.0
        %746 = vmatprep.subr.mxu0 0.0
        %747 = vmatpush1.msra.mxu0 0.0
        %748 = vmatprep.subr.mxu0 0.0
        %749 = vmatpush1.msra.mxu0 0.0
        %750 = vmatprep.mubr.f32.mxu0 0.0
        %751 = vmatmul.mubr.f32.gmra.mrb[0].mxu0 %v681
        %v752 = vpop.f32.mrb[0].mxu0
        %v753 = vadd.f32 0.0, %v752
        %v754 = vpop.f32.mrb[0].mxu0
        %755 = vdwg.mxu0
        %v757 = vsel %vm679, %v669, 0
        %v760 = vsel %vm683, %v676, 0
        %762 = vmatprep.subr.mxu0 0.0
        %763 = vmatpush1.msra.mxu0 %v760
        %764 = vmatprep.subr.mxu0 0.0
        %765 = vmatpush1.msra.mxu0 0.0
        %766 = vmatprep.subr.mxu0 0.0
        %767 = vmatpush1.msra.mxu0 0.0
        %768 = vmatprep.subr.mxu0 0.0
        %769 = vmatpush1.msra.mxu0 0.0
        %770 = vmatprep.subr.mxu0 0.0
        %771 = vmatpush1.msra.mxu0 0.0
        %772 = vmatprep.subr.mxu0 0.0
        %773 = vmatpush1.msra.mxu0 0.0
        %774 = vmatprep.subr.mxu0 0.0
        %775 = vmatpush1.msra.mxu0 0.0
        %776 = vmatprep.subr.mxu0 0.0
        %777 = vmatpush1.msra.mxu0 0.0
        %778 = vmatprep.subr.mxu0 0.0
        %779 = vmatpush1.msra.mxu0 0.0
        %780 = vmatprep.subr.mxu0 0.0
        %781 = vmatpush1.msra.mxu0 0.0
        %782 = vmatprep.subr.mxu0 0.0
        %783 = vmatpush1.msra.mxu0 0.0
        %784 = vmatprep.subr.mxu0 0.0
        %785 = vmatpush1.msra.mxu0 0.0
        %786 = vmatprep.subr.mxu0 0.0
        %787 = vmatpush1.msra.mxu0 0.0
        %788 = vmatprep.subr.mxu0 0.0
        %789 = vmatpush1.msra.mxu0 0.0
        %790 = vmatprep.subr.mxu0 0.0
        %791 = vmatpush1.msra.mxu0 0.0
        %792 = vmatprep.subr.mxu0 0.0
        %793 = vmatpush1.msra.mxu0 0.0
        %794 = vmatprep.subr.mxu0 0.0
        %795 = vmatpush1.msra.mxu0 0.0
        %796 = vmatprep.subr.mxu0 0.0
        %797 = vmatpush1.msra.mxu0 0.0
        %798 = vmatprep.subr.mxu0 0.0
        %799 = vmatpush1.msra.mxu0 0.0
        %800 = vmatprep.subr.mxu0 0.0
        %801 = vmatpush1.msra.mxu0 0.0
        %802 = vmatprep.subr.mxu0 0.0
        %803 = vmatpush1.msra.mxu0 0.0
        %804 = vmatprep.subr.mxu0 0.0
        %805 = vmatpush1.msra.mxu0 0.0
        %806 = vmatprep.subr.mxu0 0.0
        %807 = vmatpush1.msra.mxu0 0.0
        %808 = vmatprep.subr.mxu0 0.0
        %809 = vmatpush1.msra.mxu0 0.0
        %810 = vmatprep.subr.mxu0 0.0
        %811 = vmatpush1.msra.mxu0 0.0
        %812 = vmatprep.subr.mxu0 0.0
        %813 = vmatpush1.msra.mxu0 0.0
        %814 = vmatprep.subr.mxu0 0.0
        %815 = vmatpush1.msra.mxu0 0.0
        %816 = vmatprep.subr.mxu0 0.0
        %817 = vmatpush1.msra.mxu0 0.0
        %818 = vmatprep.subr.mxu0 0.0
        %819 = vmatpush1.msra.mxu0 0.0
        %820 = vmatprep.subr.mxu0 0.0
        %821 = vmatpush1.msra.mxu0 0.0
        %822 = vmatprep.subr.mxu0 0.0
        %823 = vmatpush1.msra.mxu0 0.0
        %824 = vmatprep.subr.mxu0 0.0
        %825 = vmatpush1.msra.mxu0 0.0
        %826 = vmatprep.mubr.f32.mxu0 0.0
        %827 = vmatmul.mubr.f32.gmra.mrb[0].mxu0 %v757
        %v828 = vpop.f32.mrb[0].mxu0
        %v829 = vadd.f32 %v753, %v828
        %v830 = vpop.f32.mrb[0].mxu0
        %831 = vdwg.mxu0
        %s832 = scalar_lea.vmem %s4, 8
        %v833 = vld [vmem:[%s832] sm:$0xf]
        %834 = vrot.lane.b32.xlu0 %v667, 127
        %v835 = vpop.permute.xlu0 %834
        %vm837 = vcmask 1039360
        %v838 = vsel %vm837, %v835, 0.0
        %v840 = vrot.slane %v838, 4
        %v842 = vsel %vm679, %v833, 0
        %v844 = vsel %vm683, %v840, 0
        %846 = vmatprep.subr.mxu0 0.0
        %847 = vmatpush1.msra.mxu0 %v844
        %848 = vmatprep.subr.mxu0 0.0
        %849 = vmatpush1.msra.mxu0 0.0
        %850 = vmatprep.subr.mxu0 0.0
        %851 = vmatpush1.msra.mxu0 0.0
        %852 = vmatprep.subr.mxu0 0.0
        %853 = vmatpush1.msra.mxu0 0.0
        %854 = vmatprep.subr.mxu0 0.0
        %855 = vmatpush1.msra.mxu0 0.0
        %856 = vmatprep.subr.mxu0 0.0
        %857 = vmatpush1.msra.mxu0 0.0
        %858 = vmatprep.subr.mxu0 0.0
        %859 = vmatpush1.msra.mxu0 0.0
        %860 = vmatprep.subr.mxu0 0.0
        %861 = vmatpush1.msra.mxu0 0.0
        %862 = vmatprep.subr.mxu0 0.0
        %863 = vmatpush1.msra.mxu0 0.0
        %864 = vmatprep.subr.mxu0 0.0
        %865 = vmatpush1.msra.mxu0 0.0
        %866 = vmatprep.subr.mxu0 0.0
        %867 = vmatpush1.msra.mxu0 0.0
        %868 = vmatprep.subr.mxu0 0.0
        %869 = vmatpush1.msra.mxu0 0.0
        %870 = vmatprep.subr.mxu0 0.0
        %871 = vmatpush1.msra.mxu0 0.0
        %872 = vmatprep.subr.mxu0 0.0
        %873 = vmatpush1.msra.mxu0 0.0
        %874 = vmatprep.subr.mxu0 0.0
        %875 = vmatpush1.msra.mxu0 0.0
        %876 = vmatprep.subr.mxu0 0.0
        %877 = vmatpush1.msra.mxu0 0.0
        %878 = vmatprep.subr.mxu0 0.0
        %879 = vmatpush1.msra.mxu0 0.0
        %880 = vmatprep.subr.mxu0 0.0
        %881 = vmatpush1.msra.mxu0 0.0
        %882 = vmatprep.subr.mxu0 0.0
        %883 = vmatpush1.msra.mxu0 0.0
        %884 = vmatprep.subr.mxu0 0.0
        %885 = vmatpush1.msra.mxu0 0.0
        %886 = vmatprep.subr.mxu0 0.0
        %887 = vmatpush1.msra.mxu0 0.0
        %888 = vmatprep.subr.mxu0 0.0
        %889 = vmatpush1.msra.mxu0 0.0
        %890 = vmatprep.subr.mxu0 0.0
        %891 = vmatpush1.msra.mxu0 0.0
        %892 = vmatprep.subr.mxu0 0.0
        %893 = vmatpush1.msra.mxu0 0.0
        %894 = vmatprep.subr.mxu0 0.0
        %895 = vmatpush1.msra.mxu0 0.0
        %896 = vmatprep.subr.mxu0 0.0
        %897 = vmatpush1.msra.mxu0 0.0
        %898 = vmatprep.subr.mxu0 0.0
        %899 = vmatpush1.msra.mxu0 0.0
        %900 = vmatprep.subr.mxu0 0.0
        %901 = vmatpush1.msra.mxu0 0.0
        %902 = vmatprep.subr.mxu0 0.0
        %903 = vmatpush1.msra.mxu0 0.0
        %904 = vmatprep.subr.mxu0 0.0
        %905 = vmatpush1.msra.mxu0 0.0
        %906 = vmatprep.subr.mxu0 0.0
        %907 = vmatpush1.msra.mxu0 0.0
        %908 = vmatprep.subr.mxu0 0.0
        %909 = vmatpush1.msra.mxu0 0.0
        %910 = vmatprep.mubr.f32.mxu0 0.0
        %911 = vmatmul.mubr.f32.gmra.mrb[0].mxu0 %v842
        %v912 = vpop.f32.mrb[0].mxu0
        %v913 = vadd.f32 0.0, %v912
        %v914 = vpop.f32.mrb[0].mxu0
        %915 = vdwg.mxu0
        %v916 = vadd.f32 %v829, %v913
        %v917 = vld [vmem:[%s5] sm:$0xf]
        %919 = vset.pattern.permute.xlu0 0
        %920 = vperm.xlu0 %919, %v917
        %v921 = vpop.permute.xlu0 %920
        %v923 = vmul.f32 %v916, %v921
        %v924 = vld [vmem:[%s6] sm:$0xf]
        %926 = vset.pattern.permute.xlu0 0
        %927 = vperm.xlu0 %926, %v924
        %v928 = vpop.permute.xlu0 %927
        %v930 = vadd.f32 %v923, %v928
        %v931 = vmax.f32 %v930, 0.0
        %v932 = vld [vmem:[%s7] sm:$0xf]
        %v933 = vsel %vm683, %v931, 0.0
        %934 = vadd.xlane.f32.xlu0 %v933
        %v935 = vpop.xlane.xlu0 %934
        %v936 = vrcp.pop 128.0
        %v937 = vmul.f32 %v935, %v936
        %v939 = vsel %vm679, %v932, 0
        %v942 = vsel %vm683, %v937, 0
        %944 = vmatprep.subr.mxu0 0.0
        %945 = vmatpush1.msra.mxu0 %v942
        %946 = vmatprep.subr.mxu0 0.0
        %947 = vmatpush1.msra.mxu0 0.0
        %948 = vmatprep.subr.mxu0 0.0
        %949 = vmatpush1.msra.mxu0 0.0
        %950 = vmatprep.subr.mxu0 0.0
        %951 = vmatpush1.msra.mxu0 0.0
        %952 = vmatprep.subr.mxu0 0.0
        %953 = vmatpush1.msra.mxu0 0.0
        %954 = vmatprep.subr.mxu0 0.0
        %955 = vmatpush1.msra.mxu0 0.0
        %956 = vmatprep.subr.mxu0 0.0
        %957 = vmatpush1.msra.mxu0 0.0
        %958 = vmatprep.subr.mxu0 0.0
        %959 = vmatpush1.msra.mxu0 0.0
        %960 = vmatprep.subr.mxu0 0.0
        %961 = vmatpush1.msra.mxu0 0.0
        %962 = vmatprep.subr.mxu0 0.0
        %963 = vmatpush1.msra.mxu0 0.0
        %964 = vmatprep.subr.mxu0 0.0
        %965 = vmatpush1.msra.mxu0 0.0
        %966 = vmatprep.subr.mxu0 0.0
        %967 = vmatpush1.msra.mxu0 0.0
        %968 = vmatprep.subr.mxu0 0.0
        %969 = vmatpush1.msra.mxu0 0.0
        %970 = vmatprep.subr.mxu0 0.0
        %971 = vmatpush1.msra.mxu0 0.0
        %972 = vmatprep.subr.mxu0 0.0
        %973 = vmatpush1.msra.mxu0 0.0
        %974 = vmatprep.subr.mxu0 0.0
        %975 = vmatpush1.msra.mxu0 0.0
        %976 = vmatprep.subr.mxu0 0.0
        %977 = vmatpush1.msra.mxu0 0.0
        %978 = vmatprep.subr.mxu0 0.0
        %979 = vmatpush1.msra.mxu0 0.0
        %980 = vmatprep.subr.mxu0 0.0
        %981 = vmatpush1.msra.mxu0 0.0
        %982 = vmatprep.subr.mxu0 0.0
        %983 = vmatpush1.msra.mxu0 0.0
        %984 = vmatprep.subr.mxu0 0.0
        %985 = vmatpush1.msra.mxu0 0.0
        %986 = vmatprep.subr.mxu0 0.0
        %987 = vmatpush1.msra.mxu0 0.0
        %988 = vmatprep.subr.mxu0 0.0
        %989 = vmatpush1.msra.mxu0 0.0
        %990 = vmatprep.subr.mxu0 0.0
        %991 = vmatpush1.msra.mxu0 0.0
        %992 = vmatprep.subr.mxu0 0.0
        %993 = vmatpush1.msra.mxu0 0.0
        %994 = vmatprep.subr.mxu0 0.0
        %995 = vmatpush1.msra.mxu0 0.0
        %996 = vmatprep.subr.mxu0 0.0
        %997 = vmatpush1.msra.mxu0 0.0
        %998 = vmatprep.subr.mxu0 0.0
        %999 = vmatpush1.msra.mxu0 0.0
        %1000 = vmatprep.subr.mxu0 0.0
        %1001 = vmatpush1.msra.mxu0 0.0
        %1002 = vmatprep.subr.mxu0 0.0
        %1003 = vmatpush1.msra.mxu0 0.0
        %1004 = vmatprep.subr.mxu0 0.0
        %1005 = vmatpush1.msra.mxu0 0.0
        %1006 = vmatprep.subr.mxu0 0.0
        %1007 = vmatpush1.msra.mxu0 0.0
        %1008 = vmatprep.mubr.f32.mxu0 0.0
        %1009 = vmatmul.mubr.f32.gmra.mrb[0].mxu0 %v939
        %v1010 = vpop.f32.mrb[0].mxu0
        %v1011 = vadd.f32 0.0, %v1010
        %v1012 = vpop.f32.mrb[0].mxu0
        %1013 = vdwg.mxu0
        %v1014 = vxor.u32 %v1011, 2147483648
        %v1015 = vmul.f32 %v1014, 1.442695
        %v1016 = vpow.pop %v1015
        %v1017 = vadd.f32 %v1016, 1.0
        %v1018 = vrcp.pop %v1017
        %v1019 = vmul.f32 1.0, %v1018
        %1021 = vset.pattern.permute.xlu0 0
        %1022 = vperm.xlu0 %1021, %v1019
        %v1023 = vpop.permute.xlu0 %1022
        %v1025 = vadd.f32 %v1023, %v931
        %s1026 = scalar_lea.vmem %s4, 12
        %v1027 = vld [vmem:[%s1026] sm:$0xf]
        %1029 = vrot.lane.b32.xlu0 %v668, 1
        %v1030 = vpop.permute.xlu0 %1029
        %v1032 = vsel %vm675, 0.0, %v1030
        %s1033 = scalar_lea.vmem %s4, 16
        %v1034 = vld [vmem:[%s1033] sm:$0xf]
        %v1036 = vsel %vm679, %v1034, 0
        %v1038 = vsel %vm683, %v668, 0
        %1040 = vmatprep.subr.mxu0 0.0
        %1041 = vmatpush1.msra.mxu0 %v1038
        %1042 = vmatprep.subr.mxu0 0.0
        %1043 = vmatpush1.msra.mxu0 0.0
        %1044 = vmatprep.subr.mxu0 0.0
        %1045 = vmatpush1.msra.mxu0 0.0
        %1046 = vmatprep.subr.mxu0 0.0
        %1047 = vmatpush1.msra.mxu0 0.0
        %1048 = vmatprep.subr.mxu0 0.0
        %1049 = vmatpush1.msra.mxu0 0.0
        %1050 = vmatprep.subr.mxu0 0.0
        %1051 = vmatpush1.msra.mxu0 0.0
        %1052 = vmatprep.subr.mxu0 0.0
        %1053 = vmatpush1.msra.mxu0 0.0
        %1054 = vmatprep.subr.mxu0 0.0
        %1055 = vmatpush1.msra.mxu0 0.0
        %1056 = vmatprep.subr.mxu0 0.0
        %1057 = vmatpush1.msra.mxu0 0.0
        %1058 = vmatprep.subr.mxu0 0.0
        %1059 = vmatpush1.msra.mxu0 0.0
        %1060 = vmatprep.subr.mxu0 0.0
        %1061 = vmatpush1.msra.mxu0 0.0
        %1062 = vmatprep.subr.mxu0 0.0
        %1063 = vmatpush1.msra.mxu0 0.0
        %1064 = vmatprep.subr.mxu0 0.0
        %1065 = vmatpush1.msra.mxu0 0.0
        %1066 = vmatprep.subr.mxu0 0.0
        %1067 = vmatpush1.msra.mxu0 0.0
        %1068 = vmatprep.subr.mxu0 0.0
        %1069 = vmatpush1.msra.mxu0 0.0
        %1070 = vmatprep.subr.mxu0 0.0
        %1071 = vmatpush1.msra.mxu0 0.0
        %1072 = vmatprep.subr.mxu0 0.0
        %1073 = vmatpush1.msra.mxu0 0.0
        %1074 = vmatprep.subr.mxu0 0.0
        %1075 = vmatpush1.msra.mxu0 0.0
        %1076 = vmatprep.subr.mxu0 0.0
        %1077 = vmatpush1.msra.mxu0 0.0
        %1078 = vmatprep.subr.mxu0 0.0
        %1079 = vmatpush1.msra.mxu0 0.0
        %1080 = vmatprep.subr.mxu0 0.0
        %1081 = vmatpush1.msra.mxu0 0.0
        %1082 = vmatprep.subr.mxu0 0.0
        %1083 = vmatpush1.msra.mxu0 0.0
        %1084 = vmatprep.subr.mxu0 0.0
        %1085 = vmatpush1.msra.mxu0 0.0
        %1086 = vmatprep.subr.mxu0 0.0
        %1087 = vmatpush1.msra.mxu0 0.0
        %1088 = vmatprep.subr.mxu0 0.0
        %1089 = vmatpush1.msra.mxu0 0.0
        %1090 = vmatprep.subr.mxu0 0.0
        %1091 = vmatpush1.msra.mxu0 0.0
        %1092 = vmatprep.subr.mxu0 0.0
        %1093 = vmatpush1.msra.mxu0 0.0
        %1094 = vmatprep.subr.mxu0 0.0
        %1095 = vmatpush1.msra.mxu0 0.0
        %1096 = vmatprep.subr.mxu0 0.0
        %1097 = vmatpush1.msra.mxu0 0.0
        %1098 = vmatprep.subr.mxu0 0.0
        %1099 = vmatpush1.msra.mxu0 0.0
        %1100 = vmatprep.subr.mxu0 0.0
        %1101 = vmatpush1.msra.mxu0 0.0
        %1102 = vmatprep.subr.mxu0 0.0
        %1103 = vmatpush1.msra.mxu0 0.0
        %1104 = vmatprep.mubr.f32.mxu0 0.0
        %1105 = vmatmul.mubr.f32.gmra.mrb[0].mxu0 %v1036
        %v1106 = vpop.f32.mrb[0].mxu0
        %v1107 = vadd.f32 0.0, %v1106
        %v1108 = vpop.f32.mrb[0].mxu0
        %1109 = vdwg.mxu0
        %v1111 = vsel %vm679, %v1027, 0
        %v1114 = vsel %vm683, %v1032, 0
        %1116 = vmatprep.subr.mxu0 0.0
        %1117 = vmatpush1.msra.mxu0 %v1114
        %1118 = vmatprep.subr.mxu0 0.0
        %1119 = vmatpush1.msra.mxu0 0.0
        %1120 = vmatprep.subr.mxu0 0.0
        %1121 = vmatpush1.msra.mxu0 0.0
        %1122 = vmatprep.subr.mxu0 0.0
        %1123 = vmatpush1.msra.mxu0 0.0
        %1124 = vmatprep.subr.mxu0 0.0
        %1125 = vmatpush1.msra.mxu0 0.0
        %1126 = vmatprep.subr.mxu0 0.0
        %1127 = vmatpush1.msra.mxu0 0.0
        %1128 = vmatprep.subr.mxu0 0.0
        %1129 = vmatpush1.msra.mxu0 0.0
        %1130 = vmatprep.subr.mxu0 0.0
        %1131 = vmatpush1.msra.mxu0 0.0
        %1132 = vmatprep.subr.mxu0 0.0
        %1133 = vmatpush1.msra.mxu0 0.0
        %1134 = vmatprep.subr.mxu0 0.0
        %1135 = vmatpush1.msra.mxu0 0.0
        %1136 = vmatprep.subr.mxu0 0.0
        %1137 = vmatpush1.msra.mxu0 0.0
        %1138 = vmatprep.subr.mxu0 0.0
        %1139 = vmatpush1.msra.mxu0 0.0
        %1140 = vmatprep.subr.mxu0 0.0
        %1141 = vmatpush1.msra.mxu0 0.0
        %1142 = vmatprep.subr.mxu0 0.0
        %1143 = vmatpush1.msra.mxu0 0.0
        %1144 = vmatprep.subr.mxu0 0.0
        %1145 = vmatpush1.msra.mxu0 0.0
        %1146 = vmatprep.subr.mxu0 0.0
        %1147 = vmatpush1.msra.mxu0 0.0
        %1148 = vmatprep.subr.mxu0 0.0
        %1149 = vmatpush1.msra.mxu0 0.0
        %1150 = vmatprep.subr.mxu0 0.0
        %1151 = vmatpush1.msra.mxu0 0.0
        %1152 = vmatprep.subr.mxu0 0.0
        %1153 = vmatpush1.msra.mxu0 0.0
        %1154 = vmatprep.subr.mxu0 0.0
        %1155 = vmatpush1.msra.mxu0 0.0
        %1156 = vmatprep.subr.mxu0 0.0
        %1157 = vmatpush1.msra.mxu0 0.0
        %1158 = vmatprep.subr.mxu0 0.0
        %1159 = vmatpush1.msra.mxu0 0.0
        %1160 = vmatprep.subr.mxu0 0.0
        %1161 = vmatpush1.msra.mxu0 0.0
        %1162 = vmatprep.subr.mxu0 0.0
        %1163 = vmatpush1.msra.mxu0 0.0
        %1164 = vmatprep.subr.mxu0 0.0
        %1165 = vmatpush1.msra.mxu0 0.0
        %1166 = vmatprep.subr.mxu0 0.0
        %1167 = vmatpush1.msra.mxu0 0.0
        %1168 = vmatprep.subr.mxu0 0.0
        %1169 = vmatpush1.msra.mxu0 0.0
        %1170 = vmatprep.subr.mxu0 0.0
        %1171 = vmatpush1.msra.mxu0 0.0
        %1172 = vmatprep.subr.mxu0 0.0
        %1173 = vmatpush1.msra.mxu0 0.0
        %1174 = vmatprep.subr.mxu0 0.0
        %1175 = vmatpush1.msra.mxu0 0.0
        %1176 = vmatprep.subr.mxu0 0.0
        %1177 = vmatpush1.msra.mxu0 0.0
        %1178 = vmatprep.subr.mxu0 0.0
        %1179 = vmatpush1.msra.mxu0 0.0
        %1180 = vmatprep.mubr.f32.mxu0 0.0
        %1181 = vmatmul.mubr.f32.gmra.mrb[0].mxu0 %v1111
        %v1182 = vpop.f32.mrb[0].mxu0
        %v1183 = vadd.f32 %v1107, %v1182
        %v1184 = vpop.f32.mrb[0].mxu0
        %1185 = vdwg.mxu0
        %s1186 = scalar_lea.vmem %s4, 20
        %v1187 = vld [vmem:[%s1186] sm:$0xf]
        %1188 = vrot.lane.b32.xlu0 %v668, 127
        %v1189 = vpop.permute.xlu0 %1188
        %v1191 = vsel %vm837, %v1189, 0.0
        %v1193 = vsel %vm679, %v1187, 0
        %v1196 = vsel %vm683, %v1191, 0
        %1198 = vmatprep.subr.mxu0 0.0
        %1199 = vmatpush1.msra.mxu0 %v1196
        %1200 = vmatprep.subr.mxu0 0.0
        %1201 = vmatpush1.msra.mxu0 0.0
        %1202 = vmatprep.subr.mxu0 0.0
        %1203 = vmatpush1.msra.mxu0 0.0
        %1204 = vmatprep.subr.mxu0 0.0
        %1205 = vmatpush1.msra.mxu0 0.0
        %1206 = vmatprep.subr.mxu0 0.0
        %1207 = vmatpush1.msra.mxu0 0.0
        %1208 = vmatprep.subr.mxu0 0.0
        %1209 = vmatpush1.msra.mxu0 0.0
        %1210 = vmatprep.subr.mxu0 0.0
        %1211 = vmatpush1.msra.mxu0 0.0
        %1212 = vmatprep.subr.mxu0 0.0
        %1213 = vmatpush1.msra.mxu0 0.0
        %1214 = vmatprep.subr.mxu0 0.0
        %1215 = vmatpush1.msra.mxu0 0.0
        %1216 = vmatprep.subr.mxu0 0.0
        %1217 = vmatpush1.msra.mxu0 0.0
        %1218 = vmatprep.subr.mxu0 0.0
        %1219 = vmatpush1.msra.mxu0 0.0
        %1220 = vmatprep.subr.mxu0 0.0
        %1221 = vmatpush1.msra.mxu0 0.0
        %1222 = vmatprep.subr.mxu0 0.0
        %1223 = vmatpush1.msra.mxu0 0.0
        %1224 = vmatprep.subr.mxu0 0.0
        %1225 = vmatpush1.msra.mxu0 0.0
        %1226 = vmatprep.subr.mxu0 0.0
        %1227 = vmatpush1.msra.mxu0 0.0
        %1228 = vmatprep.subr.mxu0 0.0
        %1229 = vmatpush1.msra.mxu0 0.0
        %1230 = vmatprep.subr.mxu0 0.0
        %1231 = vmatpush1.msra.mxu0 0.0
        %1232 = vmatprep.subr.mxu0 0.0
        %1233 = vmatpush1.msra.mxu0 0.0
        %1234 = vmatprep.subr.mxu0 0.0
        %1235 = vmatpush1.msra.mxu0 0.0
        %1236 = vmatprep.subr.mxu0 0.0
        %1237 = vmatpush1.msra.mxu0 0.0
        %1238 = vmatprep.subr.mxu0 0.0
        %1239 = vmatpush1.msra.mxu0 0.0
        %1240 = vmatprep.subr.mxu0 0.0
        %1241 = vmatpush1.msra.mxu0 0.0
        %1242 = vmatprep.subr.mxu0 0.0
        %1243 = vmatpush1.msra.mxu0 0.0
        %1244 = vmatprep.subr.mxu0 0.0
        %1245 = vmatpush1.msra.mxu0 0.0
        %1246 = vmatprep.subr.mxu0 0.0
        %1247 = vmatpush1.msra.mxu0 0.0
        %1248 = vmatprep.subr.mxu0 0.0
        %1249 = vmatpush1.msra.mxu0 0.0
        %1250 = vmatprep.subr.mxu0 0.0
        %1251 = vmatpush1.msra.mxu0 0.0
        %1252 = vmatprep.subr.mxu0 0.0
        %1253 = vmatpush1.msra.mxu0 0.0
        %1254 = vmatprep.subr.mxu0 0.0
        %1255 = vmatpush1.msra.mxu0 0.0
        %1256 = vmatprep.subr.mxu0 0.0
        %1257 = vmatpush1.msra.mxu0 0.0
        %1258 = vmatprep.subr.mxu0 0.0
        %1259 = vmatpush1.msra.mxu0 0.0
        %1260 = vmatprep.subr.mxu0 0.0
        %1261 = vmatpush1.msra.mxu0 0.0
        %1262 = vmatprep.mubr.f32.mxu0 0.0
        %1263 = vmatmul.mubr.f32.gmra.mrb[0].mxu0 %v1193
        %v1264 = vpop.f32.mrb[0].mxu0
        %v1265 = vadd.f32 0.0, %v1264
        %v1266 = vpop.f32.mrb[0].mxu0
        %1267 = vdwg.mxu0
        %v1268 = vadd.f32 %v1183, %v1265
        %s1269 = scalar_lea.vmem %s5, 4
        %v1270 = vld [vmem:[%s1269] sm:$0xf]
        %1272 = vset.pattern.permute.xlu0 0
        %1273 = vperm.xlu0 %1272, %v1270
        %v1274 = vpop.permute.xlu0 %1273
        %v1276 = vmul.f32 %v1268, %v1274
        %s1277 = scalar_lea.vmem %s6, 4
        %v1278 = vld [vmem:[%s1277] sm:$0xf]
        %1280 = vset.pattern.permute.xlu0 0
        %1281 = vperm.xlu0 %1280, %v1278
        %v1282 = vpop.permute.xlu0 %1281
        %v1284 = vadd.f32 %v1276, %v1282
        %v1285 = vmax.f32 %v1284, 0.0
        %v1286 = vadd.f32 %v1285, %v931
        %v1287 = vadd.f32 %v1286, %v1025
        %s1288 = scalar_lea.vmem %s7, 4
        %v1289 = vld [vmem:[%s1288] sm:$0xf]
        %v1290 = vsel %vm683, %v1287, 0.0
        %1291 = vadd.xlane.f32.xlu0 %v1290
        %v1292 = vpop.xlane.xlu0 %1291
        %v1293 = vmul.f32 %v1292, %v936
        %v1295 = vsel %vm679, %v1289, 0
        %v1298 = vsel %vm683, %v1293, 0
        %1300 = vmatprep.subr.mxu0 0.0
        %1301 = vmatpush1.msra.mxu0 %v1298
        %1302 = vmatprep.subr.mxu0 0.0
        %1303 = vmatpush1.msra.mxu0 0.0
        %1304 = vmatprep.subr.mxu0 0.0
        %1305 = vmatpush1.msra.mxu0 0.0
        %1306 = vmatprep.subr.mxu0 0.0
        %1307 = vmatpush1.msra.mxu0 0.0
        %1308 = vmatprep.subr.mxu0 0.0
        %1309 = vmatpush1.msra.mxu0 0.0
        %1310 = vmatprep.subr.mxu0 0.0
        %1311 = vmatpush1.msra.mxu0 0.0
        %1312 = vmatprep.subr.mxu0 0.0
        %1313 = vmatpush1.msra.mxu0 0.0
        %1314 = vmatprep.subr.mxu0 0.0
        %1315 = vmatpush1.msra.mxu0 0.0
        %1316 = vmatprep.subr.mxu0 0.0
        %1317 = vmatpush1.msra.mxu0 0.0
        %1318 = vmatprep.subr.mxu0 0.0
        %1319 = vmatpush1.msra.mxu0 0.0
        %1320 = vmatprep.subr.mxu0 0.0
        %1321 = vmatpush1.msra.mxu0 0.0
        %1322 = vmatprep.subr.mxu0 0.0
        %1323 = vmatpush1.msra.mxu0 0.0
        %1324 = vmatprep.subr.mxu0 0.0
        %1325 = vmatpush1.msra.mxu0 0.0
        %1326 = vmatprep.subr.mxu0 0.0
        %1327 = vmatpush1.msra.mxu0 0.0
        %1328 = vmatprep.subr.mxu0 0.0
        %1329 = vmatpush1.msra.mxu0 0.0
        %1330 = vmatprep.subr.mxu0 0.0
        %1331 = vmatpush1.msra.mxu0 0.0
        %1332 = vmatprep.subr.mxu0 0.0
        %1333 = vmatpush1.msra.mxu0 0.0
        %1334 = vmatprep.subr.mxu0 0.0
        %1335 = vmatpush1.msra.mxu0 0.0
        %1336 = vmatprep.subr.mxu0 0.0
        %1337 = vmatpush1.msra.mxu0 0.0
        %1338 = vmatprep.subr.mxu0 0.0
        %1339 = vmatpush1.msra.mxu0 0.0
        %1340 = vmatprep.subr.mxu0 0.0
        %1341 = vmatpush1.msra.mxu0 0.0
        %1342 = vmatprep.subr.mxu0 0.0
        %1343 = vmatpush1.msra.mxu0 0.0
        %1344 = vmatprep.subr.mxu0 0.0
        %1345 = vmatpush1.msra.mxu0 0.0
        %1346 = vmatprep.subr.mxu0 0.0
        %1347 = vmatpush1.msra.mxu0 0.0
        %1348 = vmatprep.subr.mxu0 0.0
        %1349 = vmatpush1.msra.mxu0 0.0
        %1350 = vmatprep.subr.mxu0 0.0
        %1351 = vmatpush1.msra.mxu0 0.0
        %1352 = vmatprep.subr.mxu0 0.0
        %1353 = vmatpush1.msra.mxu0 0.0
        %1354 = vmatprep.subr.mxu0 0.0
        %1355 = vmatpush1.msra.mxu0 0.0
        %1356 = vmatprep.subr.mxu0 0.0
        %1357 = vmatpush1.msra.mxu0 0.0
        %1358 = vmatprep.subr.mxu0 0.0
        %1359 = vmatpush1.msra.mxu0 0.0
        %1360 = vmatprep.subr.mxu0 0.0
        %1361 = vmatpush1.msra.mxu0 0.0
        %1362 = vmatprep.subr.mxu0 0.0
        %1363 = vmatpush1.msra.mxu0 0.0
        %1364 = vmatprep.mubr.f32.mxu0 0.0
        %1365 = vmatmul.mubr.f32.gmra.mrb[0].mxu0 %v1295
        %v1366 = vpop.f32.mrb[0].mxu0
        %v1367 = vadd.f32 0.0, %v1366
        %v1368 = vpop.f32.mrb[0].mxu0
        %1369 = vdwg.mxu0
        %v1370 = vxor.u32 %v1367, 2147483648
        %v1371 = vmul.f32 %v1370, 1.442695
        %v1372 = vpow.pop %v1371
        %v1373 = vadd.f32 %v1372, 1.0
        %v1374 = vrcp.pop %v1373
        %v1375 = vmul.f32 1.0, %v1374
        %1377 = vset.pattern.permute.xlu0 0
        %1378 = vperm.xlu0 %1377, %v1375
        %v1379 = vpop.permute.xlu0 %1378
        %v1381 = vadd.f32 %v1379, %v1287
        %s1382 = scalar_lea.vmem %s4, 24
        %v1383 = vld [vmem:[%s1382] sm:$0xf]
        %v1384 = vrot.slane %v668, 4
        %1385 = vrot.lane.b32.xlu0 %v1384, 1
        %v1386 = vpop.permute.xlu0 %1385
        %v1388 = vsel %vm675, 0.0, %v1386
        %s1389 = scalar_lea.vmem %s4, 28
        %v1390 = vld [vmem:[%s1389] sm:$0xf]
        %v1392 = vsel %vm679, %v1390, 0
        %v1394 = vsel %vm683, %v1384, 0
        %1396 = vmatprep.subr.mxu0 0.0
        %1397 = vmatpush1.msra.mxu0 %v1394
        %1398 = vmatprep.subr.mxu0 0.0
        %1399 = vmatpush1.msra.mxu0 0.0
        %1400 = vmatprep.subr.mxu0 0.0
        %1401 = vmatpush1.msra.mxu0 0.0
        %1402 = vmatprep.subr.mxu0 0.0
        %1403 = vmatpush1.msra.mxu0 0.0
        %1404 = vmatprep.subr.mxu0 0.0
        %1405 = vmatpush1.msra.mxu0 0.0
        %1406 = vmatprep.subr.mxu0 0.0
        %1407 = vmatpush1.msra.mxu0 0.0
        %1408 = vmatprep.subr.mxu0 0.0
        %1409 = vmatpush1.msra.mxu0 0.0
        %1410 = vmatprep.subr.mxu0 0.0
        %1411 = vmatpush1.msra.mxu0 0.0
        %1412 = vmatprep.subr.mxu0 0.0
        %1413 = vmatpush1.msra.mxu0 0.0
        %1414 = vmatprep.subr.mxu0 0.0
        %1415 = vmatpush1.msra.mxu0 0.0
        %1416 = vmatprep.subr.mxu0 0.0
        %1417 = vmatpush1.msra.mxu0 0.0
        %1418 = vmatprep.subr.mxu0 0.0
        %1419 = vmatpush1.msra.mxu0 0.0
        %1420 = vmatprep.subr.mxu0 0.0
        %1421 = vmatpush1.msra.mxu0 0.0
        %1422 = vmatprep.subr.mxu0 0.0
        %1423 = vmatpush1.msra.mxu0 0.0
        %1424 = vmatprep.subr.mxu0 0.0
        %1425 = vmatpush1.msra.mxu0 0.0
        %1426 = vmatprep.subr.mxu0 0.0
        %1427 = vmatpush1.msra.mxu0 0.0
        %1428 = vmatprep.subr.mxu0 0.0
        %1429 = vmatpush1.msra.mxu0 0.0
        %1430 = vmatprep.subr.mxu0 0.0
        %1431 = vmatpush1.msra.mxu0 0.0
        %1432 = vmatprep.subr.mxu0 0.0
        %1433 = vmatpush1.msra.mxu0 0.0
        %1434 = vmatprep.subr.mxu0 0.0
        %1435 = vmatpush1.msra.mxu0 0.0
        %1436 = vmatprep.subr.mxu0 0.0
        %1437 = vmatpush1.msra.mxu0 0.0
        %1438 = vmatprep.subr.mxu0 0.0
        %1439 = vmatpush1.msra.mxu0 0.0
        %1440 = vmatprep.subr.mxu0 0.0
        %1441 = vmatpush1.msra.mxu0 0.0
        %1442 = vmatprep.subr.mxu0 0.0
        %1443 = vmatpush1.msra.mxu0 0.0
        %1444 = vmatprep.subr.mxu0 0.0
        %1445 = vmatpush1.msra.mxu0 0.0
        %1446 = vmatprep.subr.mxu0 0.0
        %1447 = vmatpush1.msra.mxu0 0.0
        %1448 = vmatprep.subr.mxu0 0.0
        %1449 = vmatpush1.msra.mxu0 0.0
        %1450 = vmatprep.subr.mxu0 0.0
        %1451 = vmatpush1.msra.mxu0 0.0
        %1452 = vmatprep.subr.mxu0 0.0
        %1453 = vmatpush1.msra.mxu0 0.0
        %1454 = vmatprep.subr.mxu0 0.0
        %1455 = vmatpush1.msra.mxu0 0.0
        %1456 = vmatprep.subr.mxu0 0.0
        %1457 = vmatpush1.msra.mxu0 0.0
        %1458 = vmatprep.subr.mxu0 0.0
        %1459 = vmatpush1.msra.mxu0 0.0
        %1460 = vmatprep.mubr.f32.mxu0 0.0
        %1461 = vmatmul.mubr.f32.gmra.mrb[0].mxu0 %v1392
        %v1462 = vpop.f32.mrb[0].mxu0
        %v1463 = vadd.f32 0.0, %v1462
        %v1464 = vpop.f32.mrb[0].mxu0
        %1465 = vdwg.mxu0
        %v1467 = vsel %vm679, %v1383, 0
        %v1470 = vsel %vm683, %v1388, 0
        %1472 = vmatprep.subr.mxu0 0.0
        %1473 = vmatpush1.msra.mxu0 %v1470
        %1474 = vmatprep.subr.mxu0 0.0
        %1475 = vmatpush1.msra.mxu0 0.0
        %1476 = vmatprep.subr.mxu0 0.0
        %1477 = vmatpush1.msra.mxu0 0.0
        %1478 = vmatprep.subr.mxu0 0.0
        %1479 = vmatpush1.msra.mxu0 0.0
        %1480 = vmatprep.subr.mxu0 0.0
        %1481 = vmatpush1.msra.mxu0 0.0
        %1482 = vmatprep.subr.mxu0 0.0
        %1483 = vmatpush1.msra.mxu0 0.0
        %1484 = vmatprep.subr.mxu0 0.0
        %1485 = vmatpush1.msra.mxu0 0.0
        %1486 = vmatprep.subr.mxu0 0.0
        %1487 = vmatpush1.msra.mxu0 0.0
        %1488 = vmatprep.subr.mxu0 0.0
        %1489 = vmatpush1.msra.mxu0 0.0
        %1490 = vmatprep.subr.mxu0 0.0
        %1491 = vmatpush1.msra.mxu0 0.0
        %1492 = vmatprep.subr.mxu0 0.0
        %1493 = vmatpush1.msra.mxu0 0.0
        %1494 = vmatprep.subr.mxu0 0.0
        %1495 = vmatpush1.msra.mxu0 0.0
        %1496 = vmatprep.subr.mxu0 0.0
        %1497 = vmatpush1.msra.mxu0 0.0
        %1498 = vmatprep.subr.mxu0 0.0
        %1499 = vmatpush1.msra.mxu0 0.0
        %1500 = vmatprep.subr.mxu0 0.0
        %1501 = vmatpush1.msra.mxu0 0.0
        %1502 = vmatprep.subr.mxu0 0.0
        %1503 = vmatpush1.msra.mxu0 0.0
        %1504 = vmatprep.subr.mxu0 0.0
        %1505 = vmatpush1.msra.mxu0 0.0
        %1506 = vmatprep.subr.mxu0 0.0
        %1507 = vmatpush1.msra.mxu0 0.0
        %1508 = vmatprep.subr.mxu0 0.0
        %1509 = vmatpush1.msra.mxu0 0.0
        %1510 = vmatprep.subr.mxu0 0.0
        %1511 = vmatpush1.msra.mxu0 0.0
        %1512 = vmatprep.subr.mxu0 0.0
        %1513 = vmatpush1.msra.mxu0 0.0
        %1514 = vmatprep.subr.mxu0 0.0
        %1515 = vmatpush1.msra.mxu0 0.0
        %1516 = vmatprep.subr.mxu0 0.0
        %1517 = vmatpush1.msra.mxu0 0.0
        %1518 = vmatprep.subr.mxu0 0.0
        %1519 = vmatpush1.msra.mxu0 0.0
        %1520 = vmatprep.subr.mxu0 0.0
        %1521 = vmatpush1.msra.mxu0 0.0
        %1522 = vmatprep.subr.mxu0 0.0
        %1523 = vmatpush1.msra.mxu0 0.0
        %1524 = vmatprep.subr.mxu0 0.0
        %1525 = vmatpush1.msra.mxu0 0.0
        %1526 = vmatprep.subr.mxu0 0.0
        %1527 = vmatpush1.msra.mxu0 0.0
        %1528 = vmatprep.subr.mxu0 0.0
        %1529 = vmatpush1.msra.mxu0 0.0
        %1530 = vmatprep.subr.mxu0 0.0
        %1531 = vmatpush1.msra.mxu0 0.0
        %1532 = vmatprep.subr.mxu0 0.0
        %1533 = vmatpush1.msra.mxu0 0.0
        %1534 = vmatprep.subr.mxu0 0.0
        %1535 = vmatpush1.msra.mxu0 0.0
        %1536 = vmatprep.mubr.f32.mxu0 0.0
        %1537 = vmatmul.mubr.f32.gmra.mrb[0].mxu0 %v1467
        %v1538 = vpop.f32.mrb[0].mxu0
        %v1539 = vadd.f32 %v1463, %v1538
        %v1540 = vpop.f32.mrb[0].mxu0
        %1541 = vdwg.mxu0
        %s1542 = scalar_lea.vmem %s4, 32
        %v1543 = vld [vmem:[%s1542] sm:$0xf]
        %v1544 = vrot.slane %v1191, 4
        %v1546 = vsel %vm679, %v1543, 0
        %v1548 = vsel %vm683, %v1544, 0
        %1550 = vmatprep.subr.mxu0 0.0
        %1551 = vmatpush1.msra.mxu0 %v1548
        %1552 = vmatprep.subr.mxu0 0.0
        %1553 = vmatpush1.msra.mxu0 0.0
        %1554 = vmatprep.subr.mxu0 0.0
        %1555 = vmatpush1.msra.mxu0 0.0
        %1556 = vmatprep.subr.mxu0 0.0
        %1557 = vmatpush1.msra.mxu0 0.0
        %1558 = vmatprep.subr.mxu0 0.0
        %1559 = vmatpush1.msra.mxu0 0.0
        %1560 = vmatprep.subr.mxu0 0.0
        %1561 = vmatpush1.msra.mxu0 0.0
        %1562 = vmatprep.subr.mxu0 0.0
        %1563 = vmatpush1.msra.mxu0 0.0
        %1564 = vmatprep.subr.mxu0 0.0
        %1565 = vmatpush1.msra.mxu0 0.0
        %1566 = vmatprep.subr.mxu0 0.0
        %1567 = vmatpush1.msra.mxu0 0.0
        %1568 = vmatprep.subr.mxu0 0.0
        %1569 = vmatpush1.msra.mxu0 0.0
        %1570 = vmatprep.subr.mxu0 0.0
        %1571 = vmatpush1.msra.mxu0 0.0
        %1572 = vmatprep.subr.mxu0 0.0
        %1573 = vmatpush1.msra.mxu0 0.0
        %1574 = vmatprep.subr.mxu0 0.0
        %1575 = vmatpush1.msra.mxu0 0.0
        %1576 = vmatprep.subr.mxu0 0.0
        %1577 = vmatpush1.msra.mxu0 0.0
        %1578 = vmatprep.subr.mxu0 0.0
        %1579 = vmatpush1.msra.mxu0 0.0
        %1580 = vmatprep.subr.mxu0 0.0
        %1581 = vmatpush1.msra.mxu0 0.0
        %1582 = vmatprep.subr.mxu0 0.0
        %1583 = vmatpush1.msra.mxu0 0.0
        %1584 = vmatprep.subr.mxu0 0.0
        %1585 = vmatpush1.msra.mxu0 0.0
        %1586 = vmatprep.subr.mxu0 0.0
        %1587 = vmatpush1.msra.mxu0 0.0
        %1588 = vmatprep.subr.mxu0 0.0
        %1589 = vmatpush1.msra.mxu0 0.0
        %1590 = vmatprep.subr.mxu0 0.0
        %1591 = vmatpush1.msra.mxu0 0.0
        %1592 = vmatprep.subr.mxu0 0.0
        %1593 = vmatpush1.msra.mxu0 0.0
        %1594 = vmatprep.subr.mxu0 0.0
        %1595 = vmatpush1.msra.mxu0 0.0
        %1596 = vmatprep.subr.mxu0 0.0
        %1597 = vmatpush1.msra.mxu0 0.0
        %1598 = vmatprep.subr.mxu0 0.0
        %1599 = vmatpush1.msra.mxu0 0.0
        %1600 = vmatprep.subr.mxu0 0.0
        %1601 = vmatpush1.msra.mxu0 0.0
        %1602 = vmatprep.subr.mxu0 0.0
        %1603 = vmatpush1.msra.mxu0 0.0
        %1604 = vmatprep.subr.mxu0 0.0
        %1605 = vmatpush1.msra.mxu0 0.0
        %1606 = vmatprep.subr.mxu0 0.0
        %1607 = vmatpush1.msra.mxu0 0.0
        %1608 = vmatprep.subr.mxu0 0.0
        %1609 = vmatpush1.msra.mxu0 0.0
        %1610 = vmatprep.subr.mxu0 0.0
        %1611 = vmatpush1.msra.mxu0 0.0
        %1612 = vmatprep.subr.mxu0 0.0
        %1613 = vmatpush1.msra.mxu0 0.0
        %1614 = vmatprep.mubr.f32.mxu0 0.0
        %1615 = vmatmul.mubr.f32.gmra.mrb[0].mxu0 %v1546
        %v1616 = vpop.f32.mrb[0].mxu0
        %v1617 = vadd.f32 0.0, %v1616
        %v1618 = vpop.f32.mrb[0].mxu0
        %1619 = vdwg.mxu0
        %v1620 = vadd.f32 %v1539, %v1617
        %s1621 = scalar_lea.vmem %s5, 8
        %v1622 = vld [vmem:[%s1621] sm:$0xf]
        %1624 = vset.pattern.permute.xlu0 0
        %1625 = vperm.xlu0 %1624, %v1622
        %v1626 = vpop.permute.xlu0 %1625
        %v1628 = vmul.f32 %v1620, %v1626
        %s1629 = scalar_lea.vmem %s6, 8
        %v1630 = vld [vmem:[%s1629] sm:$0xf]
        %1632 = vset.pattern.permute.xlu0 0
        %1633 = vperm.xlu0 %1632, %v1630
        %v1634 = vpop.permute.xlu0 %1633
        %v1636 = vadd.f32 %v1628, %v1634
        %v1637 = vmax.f32 %v1636, 0.0
        %v1638 = vadd.f32 %v1637, %v1285
        %v1639 = vadd.f32 %v1638, %v1381
        %s1640 = scalar_lea.vmem %s7, 8
        %v1641 = vld [vmem:[%s1640] sm:$0xf]
        %v1642 = vsel %vm683, %v1639, 0.0
        %1643 = vadd.xlane.f32.xlu0 %v1642
        %v1644 = vpop.xlane.xlu0 %1643
        %v1645 = vmul.f32 %v1644, %v936
        %v1647 = vsel %vm679, %v1641, 0
        %v1650 = vsel %vm683, %v1645, 0
        %1652 = vmatprep.subr.mxu0 0.0
        %1653 = vmatpush1.msra.mxu0 %v1650
        %1654 = vmatprep.subr.mxu0 0.0
        %1655 = vmatpush1.msra.mxu0 0.0
        %1656 = vmatprep.subr.mxu0 0.0
        %1657 = vmatpush1.msra.mxu0 0.0
        %1658 = vmatprep.subr.mxu0 0.0
        %1659 = vmatpush1.msra.mxu0 0.0
        %1660 = vmatprep.subr.mxu0 0.0
        %1661 = vmatpush1.msra.mxu0 0.0
        %1662 = vmatprep.subr.mxu0 0.0
        %1663 = vmatpush1.msra.mxu0 0.0
        %1664 = vmatprep.subr.mxu0 0.0
        %1665 = vmatpush1.msra.mxu0 0.0
        %1666 = vmatprep.subr.mxu0 0.0
        %1667 = vmatpush1.msra.mxu0 0.0
        %1668 = vmatprep.subr.mxu0 0.0
        %1669 = vmatpush1.msra.mxu0 0.0
        %1670 = vmatprep.subr.mxu0 0.0
        %1671 = vmatpush1.msra.mxu0 0.0
        %1672 = vmatprep.subr.mxu0 0.0
        %1673 = vmatpush1.msra.mxu0 0.0
        %1674 = vmatprep.subr.mxu0 0.0
        %1675 = vmatpush1.msra.mxu0 0.0
        %1676 = vmatprep.subr.mxu0 0.0
        %1677 = vmatpush1.msra.mxu0 0.0
        %1678 = vmatprep.subr.mxu0 0.0
        %1679 = vmatpush1.msra.mxu0 0.0
        %1680 = vmatprep.subr.mxu0 0.0
        %1681 = vmatpush1.msra.mxu0 0.0
        %1682 = vmatprep.subr.mxu0 0.0
        %1683 = vmatpush1.msra.mxu0 0.0
        %1684 = vmatprep.subr.mxu0 0.0
        %1685 = vmatpush1.msra.mxu0 0.0
        %1686 = vmatprep.subr.mxu0 0.0
        %1687 = vmatpush1.msra.mxu0 0.0
        %1688 = vmatprep.subr.mxu0 0.0
        %1689 = vmatpush1.msra.mxu0 0.0
        %1690 = vmatprep.subr.mxu0 0.0
        %1691 = vmatpush1.msra.mxu0 0.0
        %1692 = vmatprep.subr.mxu0 0.0
        %1693 = vmatpush1.msra.mxu0 0.0
        %1694 = vmatprep.subr.mxu0 0.0
        %1695 = vmatpush1.msra.mxu0 0.0
        %1696 = vmatprep.subr.mxu0 0.0
        %1697 = vmatpush1.msra.mxu0 0.0
        %1698 = vmatprep.subr.mxu0 0.0
        %1699 = vmatpush1.msra.mxu0 0.0
        %1700 = vmatprep.subr.mxu0 0.0
        %1701 = vmatpush1.msra.mxu0 0.0
        %1702 = vmatprep.subr.mxu0 0.0
        %1703 = vmatpush1.msra.mxu0 0.0
        %1704 = vmatprep.subr.mxu0 0.0
        %1705 = vmatpush1.msra.mxu0 0.0
        %1706 = vmatprep.subr.mxu0 0.0
        %1707 = vmatpush1.msra.mxu0 0.0
        %1708 = vmatprep.subr.mxu0 0.0
        %1709 = vmatpush1.msra.mxu0 0.0
        %1710 = vmatprep.subr.mxu0 0.0
        %1711 = vmatpush1.msra.mxu0 0.0
        %1712 = vmatprep.subr.mxu0 0.0
        %1713 = vmatpush1.msra.mxu0 0.0
        %1714 = vmatprep.subr.mxu0 0.0
        %1715 = vmatpush1.msra.mxu0 0.0
        %1716 = vmatprep.mubr.f32.mxu0 0.0
        %1717 = vmatmul.mubr.f32.gmra.mrb[0].mxu0 %v1647
        %v1718 = vpop.f32.mrb[0].mxu0
        %v1719 = vadd.f32 0.0, %v1718
        %v1720 = vpop.f32.mrb[0].mxu0
        %1721 = vdwg.mxu0
        %v1722 = vxor.u32 %v1719, 2147483648
        %v1723 = vmul.f32 %v1722, 1.442695
        %v1724 = vpow.pop %v1723
        %v1725 = vadd.f32 %v1724, 1.0
        %v1726 = vrcp.pop %v1725
        %v1727 = vmul.f32 1.0, %v1726
        %1729 = vset.pattern.permute.xlu0 0
        %1730 = vperm.xlu0 %1729, %v1727
        %v1731 = vpop.permute.xlu0 %1730
        %v1733 = vadd.f32 %v1731, %v1639
        %v1735 = vrot.slane %v1025, 4
        %v1738 = vrot.slane %v1733, 4
        %v1740 = vsel %vm683, %v667, %v1735
        %v1741 = vsel %vm683, %v1381, %v1738
        %v1742 = vld [vmem:[%s8] sm:$0xff]
        %v1743 = vld [vmem:[%s8 + $0x8] sm:$0xff]
        %v1744 = vld [vmem:[%s8 + $0x10] sm:$0xff]
        %v1745 = vld [vmem:[%s8 + $0x18] sm:$0xff]
        %v1746 = vld [vmem:[%s8 + $0x20] sm:$0xff]
        %v1747 = vld [vmem:[%s8 + $0x28] sm:$0xff]
        %v1748 = vld [vmem:[%s8 + $0x30] sm:$0xff]
        %v1749 = vld [vmem:[%s8 + $0x38] sm:$0xff]
        %vm1750 = vcmask 130048
        %v1752 = vsel %vm1750, %v1742, 0
        %v1755 = vsel %vm1750, %v1743, 0
        %v1758 = vsel %vm1750, %v1744, 0
        %v1761 = vsel %vm1750, %v1745, 0
        %v1764 = vsel %vm1750, %v1746, 0
        %v1767 = vsel %vm1750, %v1747, 0
        %v1770 = vsel %vm1750, %v1748, 0
        %v1773 = vsel %vm1750, %v1749, 0
        %1775 = vmatprep.subr.mxu0 0.0
        %1776 = vmatpush1.msra.mxu0 %v1740
        %1777 = vmatprep.subr.mxu0 0.0
        %1778 = vmatpush1.msra.mxu0 %v1741
        %1779 = vmatprep.subr.mxu0 0.0
        %1780 = vmatpush1.msra.mxu0 0.0
        %1781 = vmatprep.subr.mxu0 0.0
        %1782 = vmatpush1.msra.mxu0 0.0
        %1783 = vmatprep.subr.mxu0 0.0
        %1784 = vmatpush1.msra.mxu0 0.0
        %1785 = vmatprep.subr.mxu0 0.0
        %1786 = vmatpush1.msra.mxu0 0.0
        %1787 = vmatprep.subr.mxu0 0.0
        %1788 = vmatpush1.msra.mxu0 0.0
        %1789 = vmatprep.subr.mxu0 0.0
        %1790 = vmatpush1.msra.mxu0 0.0
        %1791 = vmatprep.subr.mxu0 0.0
        %1792 = vmatpush1.msra.mxu0 0.0
        %1793 = vmatprep.subr.mxu0 0.0
        %1794 = vmatpush1.msra.mxu0 0.0
        %1795 = vmatprep.subr.mxu0 0.0
        %1796 = vmatpush1.msra.mxu0 0.0
        %1797 = vmatprep.subr.mxu0 0.0
        %1798 = vmatpush1.msra.mxu0 0.0
        %1799 = vmatprep.subr.mxu0 0.0
        %1800 = vmatpush1.msra.mxu0 0.0
        %1801 = vmatprep.subr.mxu0 0.0
        %1802 = vmatpush1.msra.mxu0 0.0
        %1803 = vmatprep.subr.mxu0 0.0
        %1804 = vmatpush1.msra.mxu0 0.0
        %1805 = vmatprep.subr.mxu0 0.0
        %1806 = vmatpush1.msra.mxu0 0.0
        %1807 = vmatprep.subr.mxu0 0.0
        %1808 = vmatpush1.msra.mxu0 0.0
        %1809 = vmatprep.subr.mxu0 0.0
        %1810 = vmatpush1.msra.mxu0 0.0
        %1811 = vmatprep.subr.mxu0 0.0
        %1812 = vmatpush1.msra.mxu0 0.0
        %1813 = vmatprep.subr.mxu0 0.0
        %1814 = vmatpush1.msra.mxu0 0.0
        %1815 = vmatprep.subr.mxu0 0.0
        %1816 = vmatpush1.msra.mxu0 0.0
        %1817 = vmatprep.subr.mxu0 0.0
        %1818 = vmatpush1.msra.mxu0 0.0
        %1819 = vmatprep.subr.mxu0 0.0
        %1820 = vmatpush1.msra.mxu0 0.0
        %1821 = vmatprep.subr.mxu0 0.0
        %1822 = vmatpush1.msra.mxu0 0.0
        %1823 = vmatprep.subr.mxu0 0.0
        %1824 = vmatpush1.msra.mxu0 0.0
        %1825 = vmatprep.subr.mxu0 0.0
        %1826 = vmatpush1.msra.mxu0 0.0
        %1827 = vmatprep.subr.mxu0 0.0
        %1828 = vmatpush1.msra.mxu0 0.0
        %1829 = vmatprep.subr.mxu0 0.0
        %1830 = vmatpush1.msra.mxu0 0.0
        %1831 = vmatprep.subr.mxu0 0.0
        %1832 = vmatpush1.msra.mxu0 0.0
        %1833 = vmatprep.subr.mxu0 0.0
        %1834 = vmatpush1.msra.mxu0 0.0
        %1835 = vmatprep.subr.mxu0 0.0
        %1836 = vmatpush1.msra.mxu0 0.0
        %1837 = vmatprep.subr.mxu0 0.0
        %1838 = vmatpush1.msra.mxu0 0.0
        %1839 = vmatprep.mubr.f32.mxu0 0.0
        %1840 = vmatmul.mubr.f32.gmra.mrb[0].mxu0 %v1752
        %v1841 = vpop.f32.mrb[0].mxu0
        %v1842 = vadd.f32 0.0, %v1841
        %v1843 = vpop.f32.mrb[0].mxu0
        %1844 = vmatprep.mubr.f32.mxu0 0.0
        %1845 = vmatmul.mubr.f32.gmra.mrb[0].mxu0 %v1755
        %v1846 = vpop.f32.mrb[0].mxu0
        %v1847 = vadd.f32 0.0, %v1846
        %v1848 = vpop.f32.mrb[0].mxu0
        %1849 = vmatprep.mubr.f32.mxu0 0.0
        %1850 = vmatmul.mubr.f32.gmra.mrb[0].mxu0 %v1758
        %v1851 = vpop.f32.mrb[0].mxu0
        %v1852 = vadd.f32 0.0, %v1851
        %v1853 = vpop.f32.mrb[0].mxu0
        %1854 = vmatprep.mubr.f32.mxu0 0.0
        %1855 = vmatmul.mubr.f32.gmra.mrb[0].mxu0 %v1761
        %v1856 = vpop.f32.mrb[0].mxu0
        %v1857 = vadd.f32 0.0, %v1856
        %v1858 = vpop.f32.mrb[0].mxu0
        %1859 = vmatprep.mubr.f32.mxu0 0.0
        %1860 = vmatmul.mubr.f32.gmra.mrb[0].mxu0 %v1764
        %v1861 = vpop.f32.mrb[0].mxu0
        %v1862 = vadd.f32 0.0, %v1861
        %v1863 = vpop.f32.mrb[0].mxu0
        %1864 = vmatprep.mubr.f32.mxu0 0.0
        %1865 = vmatmul.mubr.f32.gmra.mrb[0].mxu0 %v1767
        %v1866 = vpop.f32.mrb[0].mxu0
        %v1867 = vadd.f32 0.0, %v1866
        %v1868 = vpop.f32.mrb[0].mxu0
        %1869 = vmatprep.mubr.f32.mxu0 0.0
        %1870 = vmatmul.mubr.f32.gmra.mrb[0].mxu0 %v1770
        %v1871 = vpop.f32.mrb[0].mxu0
        %v1872 = vadd.f32 0.0, %v1871
        %v1873 = vpop.f32.mrb[0].mxu0
        %1874 = vmatprep.mubr.f32.mxu0 0.0
        %1875 = vmatmul.mubr.f32.gmra.mrb[0].mxu0 %v1773
        %v1876 = vpop.f32.mrb[0].mxu0
        %v1877 = vadd.f32 0.0, %v1876
        %v1878 = vpop.f32.mrb[0].mxu0
        %1879 = vdwg.mxu0
        %v1880 = vld [vmem:[%s9] sm:$0xff]
        %v1881 = vld [vmem:[%s9 + $0x8] sm:$0xff]
        %v1882 = vld [vmem:[%s9 + $0x10] sm:$0xff]
        %v1883 = vld [vmem:[%s9 + $0x18] sm:$0xff]
        %v1884 = vld [vmem:[%s9 + $0x20] sm:$0xff]
        %v1885 = vld [vmem:[%s9 + $0x28] sm:$0xff]
        %v1886 = vld [vmem:[%s9 + $0x30] sm:$0xff]
        %v1887 = vld [vmem:[%s9 + $0x38] sm:$0xff]
        %1889 = vset.pattern.permute.xlu0 0
        %1890 = vperm.xlu0 %1889, %v1880
        %v1891 = vpop.permute.xlu0 %1890
        %1894 = vset.pattern.permute.xlu0 0
        %1895 = vperm.xlu0 %1894, %v1881
        %v1896 = vpop.permute.xlu0 %1895
        %1899 = vset.pattern.permute.xlu0 0
        %1900 = vperm.xlu0 %1899, %v1882
        %v1901 = vpop.permute.xlu0 %1900
        %1904 = vset.pattern.permute.xlu0 0
        %1905 = vperm.xlu0 %1904, %v1883
        %v1906 = vpop.permute.xlu0 %1905
        %1909 = vset.pattern.permute.xlu0 0
        %1910 = vperm.xlu0 %1909, %v1884
        %v1911 = vpop.permute.xlu0 %1910
        %1914 = vset.pattern.permute.xlu0 0
        %1915 = vperm.xlu0 %1914, %v1885
        %v1916 = vpop.permute.xlu0 %1915
        %1919 = vset.pattern.permute.xlu0 0
        %1920 = vperm.xlu0 %1919, %v1886
        %v1921 = vpop.permute.xlu0 %1920
        %1924 = vset.pattern.permute.xlu0 0
        %1925 = vperm.xlu0 %1924, %v1887
        %v1926 = vpop.permute.xlu0 %1925
        %v1928 = vmul.f32 %v1842, %v1891
        %v1929 = vmul.f32 %v1847, %v1896
        %v1930 = vmul.f32 %v1852, %v1901
        %v1931 = vmul.f32 %v1857, %v1906
        %v1932 = vmul.f32 %v1862, %v1911
        %v1933 = vmul.f32 %v1867, %v1916
        %v1934 = vmul.f32 %v1872, %v1921
        %v1935 = vmul.f32 %v1877, %v1926
        %v1936 = vld [vmem:[%s10] sm:$0xff]
        %v1937 = vld [vmem:[%s10 + $0x8] sm:$0xff]
        %v1938 = vld [vmem:[%s10 + $0x10] sm:$0xff]
        %v1939 = vld [vmem:[%s10 + $0x18] sm:$0xff]
        %v1940 = vld [vmem:[%s10 + $0x20] sm:$0xff]
        %v1941 = vld [vmem:[%s10 + $0x28] sm:$0xff]
        %v1942 = vld [vmem:[%s10 + $0x30] sm:$0xff]
        %v1943 = vld [vmem:[%s10 + $0x38] sm:$0xff]
        %1945 = vset.pattern.permute.xlu0 0
        %1946 = vperm.xlu0 %1945, %v1936
        %v1947 = vpop.permute.xlu0 %1946
        %1950 = vset.pattern.permute.xlu0 0
        %1951 = vperm.xlu0 %1950, %v1937
        %v1952 = vpop.permute.xlu0 %1951
        %1955 = vset.pattern.permute.xlu0 0
        %1956 = vperm.xlu0 %1955, %v1938
        %v1957 = vpop.permute.xlu0 %1956
        %1960 = vset.pattern.permute.xlu0 0
        %1961 = vperm.xlu0 %1960, %v1939
        %v1962 = vpop.permute.xlu0 %1961
        %1965 = vset.pattern.permute.xlu0 0
        %1966 = vperm.xlu0 %1965, %v1940
        %v1967 = vpop.permute.xlu0 %1966
        %1970 = vset.pattern.permute.xlu0 0
        %1971 = vperm.xlu0 %1970, %v1941
        %v1972 = vpop.permute.xlu0 %1971
        %1975 = vset.pattern.permute.xlu0 0
        %1976 = vperm.xlu0 %1975, %v1942
        %v1977 = vpop.permute.xlu0 %1976
        %1980 = vset.pattern.permute.xlu0 0
        %1981 = vperm.xlu0 %1980, %v1943
        %v1982 = vpop.permute.xlu0 %1981
        %v1984 = vadd.f32 %v1928, %v1947
        %v1985 = vadd.f32 %v1929, %v1952
        %v1986 = vadd.f32 %v1930, %v1957
        %v1987 = vadd.f32 %v1931, %v1962
        %v1988 = vadd.f32 %v1932, %v1967
        %v1989 = vadd.f32 %v1933, %v1972
        %v1990 = vadd.f32 %v1934, %v1977
        %v1991 = vadd.f32 %v1935, %v1982
        %v1992 = vld [vmem:[%s11] sm:$0xff]
        %v1993 = vld [vmem:[%s11 + $0x8] sm:$0xff]
        %v1994 = vld [vmem:[%s11 + $0x10] sm:$0xff]
        %v1995 = vld [vmem:[%s11 + $0x18] sm:$0xff]
        %v1996 = vld [vmem:[%s11 + $0x20] sm:$0xff]
        %v1997 = vld [vmem:[%s11 + $0x28] sm:$0xff]
        %v1998 = vld [vmem:[%s11 + $0x30] sm:$0xff]
        %v1999 = vld [vmem:[%s11 + $0x38] sm:$0xff]
        %2000 = vadd.xlane.f32.xlu0 %v1984
        %v2001 = vpop.xlane.xlu0 %2000
        %2002 = vadd.xlane.f32.xlu0 %v1985
        %v2003 = vpop.xlane.xlu0 %2002
        %2004 = vadd.xlane.f32.xlu0 %v1986
        %v2005 = vpop.xlane.xlu0 %2004
        %2006 = vadd.xlane.f32.xlu0 %v1987
        %v2007 = vpop.xlane.xlu0 %2006
        %2008 = vadd.xlane.f32.xlu0 %v1988
        %v2009 = vpop.xlane.xlu0 %2008
        %2010 = vadd.xlane.f32.xlu0 %v1989
        %v2011 = vpop.xlane.xlu0 %2010
        %2012 = vadd.xlane.f32.xlu0 %v1990
        %v2013 = vpop.xlane.xlu0 %2012
        %2014 = vadd.xlane.f32.xlu0 %v1991
        %v2015 = vpop.xlane.xlu0 %2014
        %v2016 = vmul.f32 %v2001, %v936
        %v2017 = vmul.f32 %v2003, %v936
        %v2018 = vmul.f32 %v2005, %v936
        %v2019 = vmul.f32 %v2007, %v936
        %v2020 = vmul.f32 %v2009, %v936
        %v2021 = vmul.f32 %v2011, %v936
        %v2022 = vmul.f32 %v2013, %v936
        %v2023 = vmul.f32 %v2015, %v936
        %v2025 = vsel %vm557, %v1992, 0
        %v2028 = vsel %vm557, %v1993, 0
        %v2031 = vsel %vm557, %v1994, 0
        %v2034 = vsel %vm557, %v1995, 0
        %v2037 = vsel %vm557, %v1996, 0
        %v2040 = vsel %vm557, %v1997, 0
        %v2043 = vsel %vm557, %v1998, 0
        %v2046 = vsel %vm557, %v1999, 0
        %2048 = vmatprep.subr.mxu0 0.0
        %2049 = vmatpush1.msra.mxu0 %v2016
        %2050 = vmatprep.subr.mxu0 0.0
        %2051 = vmatpush1.msra.mxu0 %v2017
        %2052 = vmatprep.subr.mxu0 0.0
        %2053 = vmatpush1.msra.mxu0 %v2018
        %2054 = vmatprep.subr.mxu0 0.0
        %2055 = vmatpush1.msra.mxu0 %v2019
        %2056 = vmatprep.subr.mxu0 0.0
        %2057 = vmatpush1.msra.mxu0 %v2020
        %2058 = vmatprep.subr.mxu0 0.0
        %2059 = vmatpush1.msra.mxu0 %v2021
        %2060 = vmatprep.subr.mxu0 0.0
        %2061 = vmatpush1.msra.mxu0 %v2022
        %2062 = vmatprep.subr.mxu0 0.0
        %2063 = vmatpush1.msra.mxu0 %v2023
        %2064 = vmatprep.subr.mxu0 0.0
        %2065 = vmatpush1.msra.mxu0 0.0
        %2066 = vmatprep.subr.mxu0 0.0
        %2067 = vmatpush1.msra.mxu0 0.0
        %2068 = vmatprep.subr.mxu0 0.0
        %2069 = vmatpush1.msra.mxu0 0.0
        %2070 = vmatprep.subr.mxu0 0.0
        %2071 = vmatpush1.msra.mxu0 0.0
        %2072 = vmatprep.subr.mxu0 0.0
        %2073 = vmatpush1.msra.mxu0 0.0
        %2074 = vmatprep.subr.mxu0 0.0
        %2075 = vmatpush1.msra.mxu0 0.0
        %2076 = vmatprep.subr.mxu0 0.0
        %2077 = vmatpush1.msra.mxu0 0.0
        %2078 = vmatprep.subr.mxu0 0.0
        %2079 = vmatpush1.msra.mxu0 0.0
        %2080 = vmatprep.subr.mxu0 0.0
        %2081 = vmatpush1.msra.mxu0 0.0
        %2082 = vmatprep.subr.mxu0 0.0
        %2083 = vmatpush1.msra.mxu0 0.0
        %2084 = vmatprep.subr.mxu0 0.0
        %2085 = vmatpush1.msra.mxu0 0.0
        %2086 = vmatprep.subr.mxu0 0.0
        %2087 = vmatpush1.msra.mxu0 0.0
        %2088 = vmatprep.subr.mxu0 0.0
        %2089 = vmatpush1.msra.mxu0 0.0
        %2090 = vmatprep.subr.mxu0 0.0
        %2091 = vmatpush1.msra.mxu0 0.0
        %2092 = vmatprep.subr.mxu0 0.0
        %2093 = vmatpush1.msra.mxu0 0.0
        %2094 = vmatprep.subr.mxu0 0.0
        %2095 = vmatpush1.msra.mxu0 0.0
        %2096 = vmatprep.subr.mxu0 0.0
        %2097 = vmatpush1.msra.mxu0 0.0
        %2098 = vmatprep.subr.mxu0 0.0
        %2099 = vmatpush1.msra.mxu0 0.0
        %2100 = vmatprep.subr.mxu0 0.0
        %2101 = vmatpush1.msra.mxu0 0.0
        %2102 = vmatprep.subr.mxu0 0.0
        %2103 = vmatpush1.msra.mxu0 0.0
        %2104 = vmatprep.subr.mxu0 0.0
        %2105 = vmatpush1.msra.mxu0 0.0
        %2106 = vmatprep.subr.mxu0 0.0
        %2107 = vmatpush1.msra.mxu0 0.0
        %2108 = vmatprep.subr.mxu0 0.0
        %2109 = vmatpush1.msra.mxu0 0.0
        %2110 = vmatprep.subr.mxu0 0.0
        %2111 = vmatpush1.msra.mxu0 0.0
        %2112 = vmatprep.mubr.f32.mxu0 0.0
        %2113 = vmatmul.mubr.f32.gmra.mrb[0].mxu0 %v2025
        %v2114 = vpop.f32.mrb[0].mxu0
        %v2115 = vadd.f32 0.0, %v2114
        %v2116 = vpop.f32.mrb[0].mxu0
        %2117 = vmatprep.mubr.f32.mxu0 0.0
        %2118 = vmatmul.mubr.f32.gmra.mrb[0].mxu0 %v2028
        %v2119 = vpop.f32.mrb[0].mxu0
        %v2120 = vadd.f32 0.0, %v2119
        %v2121 = vpop.f32.mrb[0].mxu0
        %2122 = vmatprep.mubr.f32.mxu0 0.0
        %2123 = vmatmul.mubr.f32.gmra.mrb[0].mxu0 %v2031
        %v2124 = vpop.f32.mrb[0].mxu0
        %v2125 = vadd.f32 0.0, %v2124
        %v2126 = vpop.f32.mrb[0].mxu0
        %2127 = vmatprep.mubr.f32.mxu0 0.0
        %2128 = vmatmul.mubr.f32.gmra.mrb[0].mxu0 %v2034
        %v2129 = vpop.f32.mrb[0].mxu0
        %v2130 = vadd.f32 0.0, %v2129
        %v2131 = vpop.f32.mrb[0].mxu0
        %2132 = vmatprep.mubr.f32.mxu0 0.0
        %2133 = vmatmul.mubr.f32.gmra.mrb[0].mxu0 %v2037
        %v2134 = vpop.f32.mrb[0].mxu0
        %v2135 = vadd.f32 0.0, %v2134
        %v2136 = vpop.f32.mrb[0].mxu0
        %2137 = vmatprep.mubr.f32.mxu0 0.0
        %2138 = vmatmul.mubr.f32.gmra.mrb[0].mxu0 %v2040
        %v2139 = vpop.f32.mrb[0].mxu0
        %v2140 = vadd.f32 0.0, %v2139
        %v2141 = vpop.f32.mrb[0].mxu0
        %2142 = vmatprep.mubr.f32.mxu0 0.0
        %2143 = vmatmul.mubr.f32.gmra.mrb[0].mxu0 %v2043
        %v2144 = vpop.f32.mrb[0].mxu0
        %v2145 = vadd.f32 0.0, %v2144
        %v2146 = vpop.f32.mrb[0].mxu0
        %2147 = vmatprep.mubr.f32.mxu0 0.0
        %2148 = vmatmul.mubr.f32.gmra.mrb[0].mxu0 %v2046
        %v2149 = vpop.f32.mrb[0].mxu0
        %v2150 = vadd.f32 0.0, %v2149
        %v2151 = vpop.f32.mrb[0].mxu0
        %2152 = vdwg.mxu0
        %v2153 = vxor.u32 %v2115, 2147483648
        %v2154 = vxor.u32 %v2120, 2147483648
        %v2155 = vxor.u32 %v2125, 2147483648
        %v2156 = vxor.u32 %v2130, 2147483648
        %v2157 = vxor.u32 %v2135, 2147483648
        %v2158 = vxor.u32 %v2140, 2147483648
        %v2159 = vxor.u32 %v2145, 2147483648
        %v2160 = vxor.u32 %v2150, 2147483648
        %v2161 = vmul.f32 %v2153, 1.442695
        %v2162 = vpow.pop %v2161
        %v2163 = vmul.f32 %v2154, 1.442695
        %v2164 = vpow.pop %v2163
        %v2165 = vmul.f32 %v2155, 1.442695
        %v2166 = vpow.pop %v2165
        %v2167 = vmul.f32 %v2156, 1.442695
        %v2168 = vpow.pop %v2167
        %v2169 = vmul.f32 %v2157, 1.442695
        %v2170 = vpow.pop %v2169
        %v2171 = vmul.f32 %v2158, 1.442695
        %v2172 = vpow.pop %v2171
        %v2173 = vmul.f32 %v2159, 1.442695
        %v2174 = vpow.pop %v2173
        %v2175 = vmul.f32 %v2160, 1.442695
        %v2176 = vpow.pop %v2175
        %v2177 = vadd.f32 %v2162, 1.0
        %v2178 = vadd.f32 %v2164, 1.0
        %v2179 = vadd.f32 %v2166, 1.0
        %v2180 = vadd.f32 %v2168, 1.0
        %v2181 = vadd.f32 %v2170, 1.0
        %v2182 = vadd.f32 %v2172, 1.0
        %v2183 = vadd.f32 %v2174, 1.0
        %v2184 = vadd.f32 %v2176, 1.0
        %v2185 = vrcp.pop %v2177
        %v2186 = vmul.f32 1.0, %v2185
        %v2187 = vrcp.pop %v2178
        %v2188 = vmul.f32 1.0, %v2187
        %v2189 = vrcp.pop %v2179
        %v2190 = vmul.f32 1.0, %v2189
        %v2191 = vrcp.pop %v2180
        %v2192 = vmul.f32 1.0, %v2191
        %v2193 = vrcp.pop %v2181
        %v2194 = vmul.f32 1.0, %v2193
        %v2195 = vrcp.pop %v2182
        %v2196 = vmul.f32 1.0, %v2195
        %v2197 = vrcp.pop %v2183
        %v2198 = vmul.f32 1.0, %v2197
        %v2199 = vrcp.pop %v2184
        %v2200 = vmul.f32 1.0, %v2199
        %2202 = vset.pattern.permute.xlu0 0
        %2203 = vperm.xlu0 %2202, %v2186
        %v2204 = vpop.permute.xlu0 %2203
        %2207 = vset.pattern.permute.xlu0 0
        %2208 = vperm.xlu0 %2207, %v2188
        %v2209 = vpop.permute.xlu0 %2208
        %2212 = vset.pattern.permute.xlu0 0
        %2213 = vperm.xlu0 %2212, %v2190
        %v2214 = vpop.permute.xlu0 %2213
        %2217 = vset.pattern.permute.xlu0 0
        %2218 = vperm.xlu0 %2217, %v2192
        %v2219 = vpop.permute.xlu0 %2218
        %2222 = vset.pattern.permute.xlu0 0
        %2223 = vperm.xlu0 %2222, %v2194
        %v2224 = vpop.permute.xlu0 %2223
        %2227 = vset.pattern.permute.xlu0 0
        %2228 = vperm.xlu0 %2227, %v2196
        %v2229 = vpop.permute.xlu0 %2228
        %2232 = vset.pattern.permute.xlu0 0
        %2233 = vperm.xlu0 %2232, %v2198
        %v2234 = vpop.permute.xlu0 %2233
        %2237 = vset.pattern.permute.xlu0 0
        %2238 = vperm.xlu0 %2237, %v2200
        %v2239 = vpop.permute.xlu0 %2238
        %v2241 = vadd.f32 %v2204, %v1984
        %v2242 = vadd.f32 %v2209, %v1985
        %v2243 = vadd.f32 %v2214, %v1986
        %v2244 = vadd.f32 %v2219, %v1987
        %v2245 = vadd.f32 %v2224, %v1988
        %v2246 = vadd.f32 %v2229, %v1989
        %v2247 = vadd.f32 %v2234, %v1990
        %v2248 = vadd.f32 %v2239, %v1991
        %v2249 = vadd.f32 %v1984, %v2241
        %v2250 = vadd.f32 %v1985, %v2242
        %v2251 = vadd.f32 %v1986, %v2243
        %v2252 = vadd.f32 %v1987, %v2244
        %v2253 = vadd.f32 %v1988, %v2245
        %v2254 = vadd.f32 %v1989, %v2246
        %v2255 = vadd.f32 %v1990, %v2247
        %v2256 = vadd.f32 %v1991, %v2248
        %v2257 = vand.u32 2147483647, %v2249
        %v2258 = vand.u32 2147483647, %v2250
        %v2259 = vand.u32 2147483647, %v2251
        %v2260 = vand.u32 2147483647, %v2252
        %v2261 = vand.u32 2147483647, %v2253
        %v2262 = vand.u32 2147483647, %v2254
        %v2263 = vand.u32 2147483647, %v2255
        %v2264 = vand.u32 2147483647, %v2256
        %v2265 = vld [vmem:[%s12] sm:$0xff]
        %v2266 = vld [vmem:[%s12 + $0x8] sm:$0xff]
        %v2267 = vld [vmem:[%s12 + $0x10] sm:$0xff]
        %v2268 = vld [vmem:[%s12 + $0x18] sm:$0xff]
        %v2269 = vld [vmem:[%s12 + $0x20] sm:$0xff]
        %v2270 = vld [vmem:[%s12 + $0x28] sm:$0xff]
        %v2271 = vld [vmem:[%s12 + $0x30] sm:$0xff]
        %v2272 = vld [vmem:[%s12 + $0x38] sm:$0xff]
        %2273 = vadd.xlane.f32.xlu0 %v2257
        %v2274 = vpop.xlane.xlu0 %2273
        %2275 = vadd.xlane.f32.xlu0 %v2258
        %v2276 = vpop.xlane.xlu0 %2275
        %2277 = vadd.xlane.f32.xlu0 %v2259
        %v2278 = vpop.xlane.xlu0 %2277
        %2279 = vadd.xlane.f32.xlu0 %v2260
        %v2280 = vpop.xlane.xlu0 %2279
        %2281 = vadd.xlane.f32.xlu0 %v2261
        %v2282 = vpop.xlane.xlu0 %2281
        %2283 = vadd.xlane.f32.xlu0 %v2262
        %v2284 = vpop.xlane.xlu0 %2283
        %2285 = vadd.xlane.f32.xlu0 %v2263
        %v2286 = vpop.xlane.xlu0 %2285
        %2287 = vadd.xlane.f32.xlu0 %v2264
        %v2288 = vpop.xlane.xlu0 %2287
        %v2289 = vmul.f32 %v2274, %v936
        %v2290 = vmul.f32 %v2276, %v936
        %v2291 = vmul.f32 %v2278, %v936
        %v2292 = vmul.f32 %v2280, %v936
        %v2293 = vmul.f32 %v2282, %v936
        %v2294 = vmul.f32 %v2284, %v936
        %v2295 = vmul.f32 %v2286, %v936
        %v2296 = vmul.f32 %v2288, %v936
        %v2298 = vsel %vm557, %v2265, 0
        %v2301 = vsel %vm557, %v2266, 0
        %v2304 = vsel %vm557, %v2267, 0
        %v2307 = vsel %vm557, %v2268, 0
        %v2310 = vsel %vm557, %v2269, 0
        %v2313 = vsel %vm557, %v2270, 0
        %v2316 = vsel %vm557, %v2271, 0
        %v2319 = vsel %vm557, %v2272, 0
        %2321 = vmatprep.subr.mxu0 0.0
        %2322 = vmatpush1.msra.mxu0 %v2289
        %2323 = vmatprep.subr.mxu0 0.0
        %2324 = vmatpush1.msra.mxu0 %v2290
        %2325 = vmatprep.subr.mxu0 0.0
        %2326 = vmatpush1.msra.mxu0 %v2291
        %2327 = vmatprep.subr.mxu0 0.0
        %2328 = vmatpush1.msra.mxu0 %v2292
        %2329 = vmatprep.subr.mxu0 0.0
        %2330 = vmatpush1.msra.mxu0 %v2293
        %2331 = vmatprep.subr.mxu0 0.0
        %2332 = vmatpush1.msra.mxu0 %v2294
        %2333 = vmatprep.subr.mxu0 0.0
        %2334 = vmatpush1.msra.mxu0 %v2295
        %2335 = vmatprep.subr.mxu0 0.0
        %2336 = vmatpush1.msra.mxu0 %v2296
        %2337 = vmatprep.subr.mxu0 0.0
        %2338 = vmatpush1.msra.mxu0 0.0
        %2339 = vmatprep.subr.mxu0 0.0
        %2340 = vmatpush1.msra.mxu0 0.0
        %2341 = vmatprep.subr.mxu0 0.0
        %2342 = vmatpush1.msra.mxu0 0.0
        %2343 = vmatprep.subr.mxu0 0.0
        %2344 = vmatpush1.msra.mxu0 0.0
        %2345 = vmatprep.subr.mxu0 0.0
        %2346 = vmatpush1.msra.mxu0 0.0
        %2347 = vmatprep.subr.mxu0 0.0
        %2348 = vmatpush1.msra.mxu0 0.0
        %2349 = vmatprep.subr.mxu0 0.0
        %2350 = vmatpush1.msra.mxu0 0.0
        %2351 = vmatprep.subr.mxu0 0.0
        %2352 = vmatpush1.msra.mxu0 0.0
        %2353 = vmatprep.subr.mxu0 0.0
        %2354 = vmatpush1.msra.mxu0 0.0
        %2355 = vmatprep.subr.mxu0 0.0
        %2356 = vmatpush1.msra.mxu0 0.0
        %2357 = vmatprep.subr.mxu0 0.0
        %2358 = vmatpush1.msra.mxu0 0.0
        %2359 = vmatprep.subr.mxu0 0.0
        %2360 = vmatpush1.msra.mxu0 0.0
        %2361 = vmatprep.subr.mxu0 0.0
        %2362 = vmatpush1.msra.mxu0 0.0
        %2363 = vmatprep.subr.mxu0 0.0
        %2364 = vmatpush1.msra.mxu0 0.0
        %2365 = vmatprep.subr.mxu0 0.0
        %2366 = vmatpush1.msra.mxu0 0.0
        %2367 = vmatprep.subr.mxu0 0.0
        %2368 = vmatpush1.msra.mxu0 0.0
        %2369 = vmatprep.subr.mxu0 0.0
        %2370 = vmatpush1.msra.mxu0 0.0
        %2371 = vmatprep.subr.mxu0 0.0
        %2372 = vmatpush1.msra.mxu0 0.0
        %2373 = vmatprep.subr.mxu0 0.0
        %2374 = vmatpush1.msra.mxu0 0.0
        %2375 = vmatprep.subr.mxu0 0.0
        %2376 = vmatpush1.msra.mxu0 0.0
        %2377 = vmatprep.subr.mxu0 0.0
        %2378 = vmatpush1.msra.mxu0 0.0
        %2379 = vmatprep.subr.mxu0 0.0
        %2380 = vmatpush1.msra.mxu0 0.0
        %2381 = vmatprep.subr.mxu0 0.0
        %2382 = vmatpush1.msra.mxu0 0.0
        %2383 = vmatprep.subr.mxu0 0.0
        %2384 = vmatpush1.msra.mxu0 0.0
        %2385 = vmatprep.mubr.f32.mxu0 0.0
        %2386 = vmatmul.mubr.f32.gmra.mrb[0].mxu0 %v2298
        %v2387 = vpop.f32.mrb[0].mxu0
        %v2388 = vadd.f32 0.0, %v2387
        %v2389 = vpop.f32.mrb[0].mxu0
        %2390 = vmatprep.mubr.f32.mxu0 0.0
        %2391 = vmatmul.mubr.f32.gmra.mrb[0].mxu0 %v2301
        %v2392 = vpop.f32.mrb[0].mxu0
        %v2393 = vadd.f32 0.0, %v2392
        %v2394 = vpop.f32.mrb[0].mxu0
        %2395 = vmatprep.mubr.f32.mxu0 0.0
        %2396 = vmatmul.mubr.f32.gmra.mrb[0].mxu0 %v2304
        %v2397 = vpop.f32.mrb[0].mxu0
        %v2398 = vadd.f32 0.0, %v2397
        %v2399 = vpop.f32.mrb[0].mxu0
        %2400 = vmatprep.mubr.f32.mxu0 0.0
        %2401 = vmatmul.mubr.f32.gmra.mrb[0].mxu0 %v2307
        %v2402 = vpop.f32.mrb[0].mxu0
        %v2403 = vadd.f32 0.0, %v2402
        %v2404 = vpop.f32.mrb[0].mxu0
        %2405 = vmatprep.mubr.f32.mxu0 0.0
        %2406 = vmatmul.mubr.f32.gmra.mrb[0].mxu0 %v2310
        %v2407 = vpop.f32.mrb[0].mxu0
        %v2408 = vadd.f32 0.0, %v2407
        %v2409 = vpop.f32.mrb[0].mxu0
        %2410 = vmatprep.mubr.f32.mxu0 0.0
        %2411 = vmatmul.mubr.f32.gmra.mrb[0].mxu0 %v2313
        %v2412 = vpop.f32.mrb[0].mxu0
        %v2413 = vadd.f32 0.0, %v2412
        %v2414 = vpop.f32.mrb[0].mxu0
        %2415 = vmatprep.mubr.f32.mxu0 0.0
        %2416 = vmatmul.mubr.f32.gmra.mrb[0].mxu0 %v2316
        %v2417 = vpop.f32.mrb[0].mxu0
        %v2418 = vadd.f32 0.0, %v2417
        %v2419 = vpop.f32.mrb[0].mxu0
        %2420 = vmatprep.mubr.f32.mxu0 0.0
        %2421 = vmatmul.mubr.f32.gmra.mrb[0].mxu0 %v2319
        %v2422 = vpop.f32.mrb[0].mxu0
        %v2423 = vadd.f32 0.0, %v2422
        %v2424 = vpop.f32.mrb[0].mxu0
        %2425 = vdwg.mxu0
        %v2426 = vxor.u32 %v2388, 2147483648
        %v2427 = vxor.u32 %v2393, 2147483648
        %v2428 = vxor.u32 %v2398, 2147483648
        %v2429 = vxor.u32 %v2403, 2147483648
        %v2430 = vxor.u32 %v2408, 2147483648
        %v2431 = vxor.u32 %v2413, 2147483648
        %v2432 = vxor.u32 %v2418, 2147483648
        %v2433 = vxor.u32 %v2423, 2147483648
        %v2434 = vmul.f32 %v2426, 1.442695
        %v2435 = vpow.pop %v2434
        %v2436 = vmul.f32 %v2427, 1.442695
        %v2437 = vpow.pop %v2436
        %v2438 = vmul.f32 %v2428, 1.442695
        %v2439 = vpow.pop %v2438
        %v2440 = vmul.f32 %v2429, 1.442695
        %v2441 = vpow.pop %v2440
        %v2442 = vmul.f32 %v2430, 1.442695
        %v2443 = vpow.pop %v2442
        %v2444 = vmul.f32 %v2431, 1.442695
        %v2445 = vpow.pop %v2444
        %v2446 = vmul.f32 %v2432, 1.442695
        %v2447 = vpow.pop %v2446
        %v2448 = vmul.f32 %v2433, 1.442695
        %v2449 = vpow.pop %v2448
        %v2450 = vadd.f32 %v2435, 1.0
        %v2451 = vadd.f32 %v2437, 1.0
        %v2452 = vadd.f32 %v2439, 1.0
        %v2453 = vadd.f32 %v2441, 1.0
        %v2454 = vadd.f32 %v2443, 1.0
        %v2455 = vadd.f32 %v2445, 1.0
        %v2456 = vadd.f32 %v2447, 1.0
        %v2457 = vadd.f32 %v2449, 1.0
        %v2458 = vrcp.pop %v2450
        %v2459 = vmul.f32 1.0, %v2458
        %v2460 = vrcp.pop %v2451
        %v2461 = vmul.f32 1.0, %v2460
        %v2462 = vrcp.pop %v2452
        %v2463 = vmul.f32 1.0, %v2462
        %v2464 = vrcp.pop %v2453
        %v2465 = vmul.f32 1.0, %v2464
        %v2466 = vrcp.pop %v2454
        %v2467 = vmul.f32 1.0, %v2466
        %v2468 = vrcp.pop %v2455
        %v2469 = vmul.f32 1.0, %v2468
        %v2470 = vrcp.pop %v2456
        %v2471 = vmul.f32 1.0, %v2470
        %v2472 = vrcp.pop %v2457
        %v2473 = vmul.f32 1.0, %v2472
        %2475 = vset.pattern.permute.xlu0 0
        %2476 = vperm.xlu0 %2475, %v2459
        %v2477 = vpop.permute.xlu0 %2476
        %2480 = vset.pattern.permute.xlu0 0
        %2481 = vperm.xlu0 %2480, %v2461
        %v2482 = vpop.permute.xlu0 %2481
        %2485 = vset.pattern.permute.xlu0 0
        %2486 = vperm.xlu0 %2485, %v2463
        %v2487 = vpop.permute.xlu0 %2486
        %2490 = vset.pattern.permute.xlu0 0
        %2491 = vperm.xlu0 %2490, %v2465
        %v2492 = vpop.permute.xlu0 %2491
        %2495 = vset.pattern.permute.xlu0 0
        %2496 = vperm.xlu0 %2495, %v2467
        %v2497 = vpop.permute.xlu0 %2496
        %2500 = vset.pattern.permute.xlu0 0
        %2501 = vperm.xlu0 %2500, %v2469
        %v2502 = vpop.permute.xlu0 %2501
        %2505 = vset.pattern.permute.xlu0 0
        %2506 = vperm.xlu0 %2505, %v2471
        %v2507 = vpop.permute.xlu0 %2506
        %2510 = vset.pattern.permute.xlu0 0
        %2511 = vperm.xlu0 %2510, %v2473
        %v2512 = vpop.permute.xlu0 %2511
        %v2514 = vmul.f32 %v2257, %v2477
        %v2515 = vmul.f32 %v2258, %v2482
        %v2516 = vmul.f32 %v2259, %v2487
        %v2517 = vmul.f32 %v2260, %v2492
        %v2518 = vmul.f32 %v2261, %v2497
        %v2519 = vmul.f32 %v2262, %v2502
        %v2520 = vmul.f32 %v2263, %v2507
        %v2521 = vmul.f32 %v2264, %v2512
        %v2522 = vld [vmem:[%s13] sm:$0xff]
        %v2523 = vld [vmem:[%s13 + $0x8] sm:$0xff]
        %v2524 = vld [vmem:[%s13 + $0x10] sm:$0xff]
        %v2525 = vld [vmem:[%s13 + $0x18] sm:$0xff]
        %v2526 = vld [vmem:[%s13 + $0x20] sm:$0xff]
        %v2527 = vld [vmem:[%s13 + $0x28] sm:$0xff]
        %v2528 = vld [vmem:[%s13 + $0x30] sm:$0xff]
        %v2529 = vld [vmem:[%s13 + $0x38] sm:$0xff]
        %v2530 = vld [vmem:[%s14] sm:$0xff]
        %v2531 = vld [vmem:[%s14 + $0x8] sm:$0xff]
        %v2532 = vld [vmem:[%s14 + $0x10] sm:$0xff]
        %v2533 = vld [vmem:[%s14 + $0x18] sm:$0xff]
        %v2534 = vld [vmem:[%s14 + $0x20] sm:$0xff]
        %v2535 = vld [vmem:[%s14 + $0x28] sm:$0xff]
        %v2536 = vld [vmem:[%s14 + $0x30] sm:$0xff]
        %v2537 = vld [vmem:[%s14 + $0x38] sm:$0xff]
        %v2539 = vsel %vm557, %v2522, 0
        %v2542 = vsel %vm557, %v2523, 0
        %v2545 = vsel %vm557, %v2524, 0
        %v2548 = vsel %vm557, %v2525, 0
        %v2551 = vsel %vm557, %v2526, 0
        %v2554 = vsel %vm557, %v2527, 0
        %v2557 = vsel %vm557, %v2528, 0
        %v2560 = vsel %vm557, %v2529, 0
        %2562 = vmatprep.subr.mxu0 0.0
        %2563 = vmatpush1.msra.mxu0 %v2289
        %2564 = vmatprep.subr.mxu0 0.0
        %2565 = vmatpush1.msra.mxu0 %v2290
        %2566 = vmatprep.subr.mxu0 0.0
        %2567 = vmatpush1.msra.mxu0 %v2291
        %2568 = vmatprep.subr.mxu0 0.0
        %2569 = vmatpush1.msra.mxu0 %v2292
        %2570 = vmatprep.subr.mxu0 0.0
        %2571 = vmatpush1.msra.mxu0 %v2293
        %2572 = vmatprep.subr.mxu0 0.0
        %2573 = vmatpush1.msra.mxu0 %v2294
        %2574 = vmatprep.subr.mxu0 0.0
        %2575 = vmatpush1.msra.mxu0 %v2295
        %2576 = vmatprep.subr.mxu0 0.0
        %2577 = vmatpush1.msra.mxu0 %v2296
        %2578 = vmatprep.subr.mxu0 0.0
        %2579 = vmatpush1.msra.mxu0 0.0
        %2580 = vmatprep.subr.mxu0 0.0
        %2581 = vmatpush1.msra.mxu0 0.0
        %2582 = vmatprep.subr.mxu0 0.0
        %2583 = vmatpush1.msra.mxu0 0.0
        %2584 = vmatprep.subr.mxu0 0.0
        %2585 = vmatpush1.msra.mxu0 0.0
        %2586 = vmatprep.subr.mxu0 0.0
        %2587 = vmatpush1.msra.mxu0 0.0
        %2588 = vmatprep.subr.mxu0 0.0
        %2589 = vmatpush1.msra.mxu0 0.0
        %2590 = vmatprep.subr.mxu0 0.0
        %2591 = vmatpush1.msra.mxu0 0.0
        %2592 = vmatprep.subr.mxu0 0.0
        %2593 = vmatpush1.msra.mxu0 0.0
        %2594 = vmatprep.subr.mxu0 0.0
        %2595 = vmatpush1.msra.mxu0 0.0
        %2596 = vmatprep.subr.mxu0 0.0
        %2597 = vmatpush1.msra.mxu0 0.0
        %2598 = vmatprep.subr.mxu0 0.0
        %2599 = vmatpush1.msra.mxu0 0.0
        %2600 = vmatprep.subr.mxu0 0.0
        %2601 = vmatpush1.msra.mxu0 0.0
        %2602 = vmatprep.subr.mxu0 0.0
        %2603 = vmatpush1.msra.mxu0 0.0
        %2604 = vmatprep.subr.mxu0 0.0
        %2605 = vmatpush1.msra.mxu0 0.0
        %2606 = vmatprep.subr.mxu0 0.0
        %2607 = vmatpush1.msra.mxu0 0.0
        %2608 = vmatprep.subr.mxu0 0.0
        %2609 = vmatpush1.msra.mxu0 0.0
        %2610 = vmatprep.subr.mxu0 0.0
        %2611 = vmatpush1.msra.mxu0 0.0
        %2612 = vmatprep.subr.mxu0 0.0
        %2613 = vmatpush1.msra.mxu0 0.0
        %2614 = vmatprep.subr.mxu0 0.0
        %2615 = vmatpush1.msra.mxu0 0.0
        %2616 = vmatprep.subr.mxu0 0.0
        %2617 = vmatpush1.msra.mxu0 0.0
        %2618 = vmatprep.subr.mxu0 0.0
        %2619 = vmatpush1.msra.mxu0 0.0
        %2620 = vmatprep.subr.mxu0 0.0
        %2621 = vmatpush1.msra.mxu0 0.0
        %2622 = vmatprep.subr.mxu0 0.0
        %2623 = vmatpush1.msra.mxu0 0.0
        %2624 = vmatprep.subr.mxu0 0.0
        %2625 = vmatpush1.msra.mxu0 0.0
        %2626 = vmatprep.mubr.f32.mxu0 0.0
        %2627 = vmatmul.mubr.f32.gmra.mrb[0].mxu0 %v2539
        %v2628 = vpop.f32.mrb[0].mxu0
        %v2629 = vadd.f32 %v2530, %v2628
        %v2630 = vpop.f32.mrb[0].mxu0
        %2631 = vmatprep.mubr.f32.mxu0 0.0
        %2632 = vmatmul.mubr.f32.gmra.mrb[0].mxu0 %v2542
        %v2633 = vpop.f32.mrb[0].mxu0
        %v2634 = vadd.f32 %v2531, %v2633
        %v2635 = vpop.f32.mrb[0].mxu0
        %2636 = vmatprep.mubr.f32.mxu0 0.0
        %2637 = vmatmul.mubr.f32.gmra.mrb[0].mxu0 %v2545
        %v2638 = vpop.f32.mrb[0].mxu0
        %v2639 = vadd.f32 %v2532, %v2638
        %v2640 = vpop.f32.mrb[0].mxu0
        %2641 = vmatprep.mubr.f32.mxu0 0.0
        %2642 = vmatmul.mubr.f32.gmra.mrb[0].mxu0 %v2548
        %v2643 = vpop.f32.mrb[0].mxu0
        %v2644 = vadd.f32 %v2533, %v2643
        %v2645 = vpop.f32.mrb[0].mxu0
        %2646 = vmatprep.mubr.f32.mxu0 0.0
        %2647 = vmatmul.mubr.f32.gmra.mrb[0].mxu0 %v2551
        %v2648 = vpop.f32.mrb[0].mxu0
        %v2649 = vadd.f32 %v2534, %v2648
        %v2650 = vpop.f32.mrb[0].mxu0
        %2651 = vmatprep.mubr.f32.mxu0 0.0
        %2652 = vmatmul.mubr.f32.gmra.mrb[0].mxu0 %v2554
        %v2653 = vpop.f32.mrb[0].mxu0
        %v2654 = vadd.f32 %v2535, %v2653
        %v2655 = vpop.f32.mrb[0].mxu0
        %2656 = vmatprep.mubr.f32.mxu0 0.0
        %2657 = vmatmul.mubr.f32.gmra.mrb[0].mxu0 %v2557
        %v2658 = vpop.f32.mrb[0].mxu0
        %v2659 = vadd.f32 %v2536, %v2658
        %v2660 = vpop.f32.mrb[0].mxu0
        %2661 = vmatprep.mubr.f32.mxu0 0.0
        %2662 = vmatmul.mubr.f32.gmra.mrb[0].mxu0 %v2560
        %v2663 = vpop.f32.mrb[0].mxu0
        %v2664 = vadd.f32 %v2537, %v2663
        %v2665 = vpop.f32.mrb[0].mxu0
        %2666 = vdwg.mxu0
        %v2667 = vmax.f32 %v2629, 0.0
        %v2668 = vmax.f32 %v2634, 0.0
        %v2669 = vmax.f32 %v2639, 0.0
        %v2670 = vmax.f32 %v2644, 0.0
        %v2671 = vmax.f32 %v2649, 0.0
        %v2672 = vmax.f32 %v2654, 0.0
        %v2673 = vmax.f32 %v2659, 0.0
        %v2674 = vmax.f32 %v2664, 0.0
        %v2675 = vld [vmem:[%s15] sm:$0xff]
        %v2676 = vld [vmem:[%s15 + $0x8] sm:$0xff]
        %v2677 = vld [vmem:[%s15 + $0x10] sm:$0xff]
        %v2678 = vld [vmem:[%s15 + $0x18] sm:$0xff]
        %v2679 = vld [vmem:[%s15 + $0x20] sm:$0xff]
        %v2680 = vld [vmem:[%s15 + $0x28] sm:$0xff]
        %v2681 = vld [vmem:[%s15 + $0x30] sm:$0xff]
        %v2682 = vld [vmem:[%s15 + $0x38] sm:$0xff]
        %v2683 = vld [vmem:[%s16] sm:$0xff]
        %v2684 = vld [vmem:[%s16 + $0x8] sm:$0xff]
        %v2685 = vld [vmem:[%s16 + $0x10] sm:$0xff]
        %v2686 = vld [vmem:[%s16 + $0x18] sm:$0xff]
        %v2687 = vld [vmem:[%s16 + $0x20] sm:$0xff]
        %v2688 = vld [vmem:[%s16 + $0x28] sm:$0xff]
        %v2689 = vld [vmem:[%s16 + $0x30] sm:$0xff]
        %v2690 = vld [vmem:[%s16 + $0x38] sm:$0xff]
        %v2692 = vsel %vm557, %v2675, 0
        %v2695 = vsel %vm557, %v2676, 0
        %v2698 = vsel %vm557, %v2677, 0
        %v2701 = vsel %vm557, %v2678, 0
        %v2704 = vsel %vm557, %v2679, 0
        %v2707 = vsel %vm557, %v2680, 0
        %v2710 = vsel %vm557, %v2681, 0
        %v2713 = vsel %vm557, %v2682, 0
        %2715 = vmatprep.subr.mxu0 0.0
        %2716 = vmatpush1.msra.mxu0 %v2667
        %2717 = vmatprep.subr.mxu0 0.0
        %2718 = vmatpush1.msra.mxu0 %v2668
        %2719 = vmatprep.subr.mxu0 0.0
        %2720 = vmatpush1.msra.mxu0 %v2669
        %2721 = vmatprep.subr.mxu0 0.0
        %2722 = vmatpush1.msra.mxu0 %v2670
        %2723 = vmatprep.subr.mxu0 0.0
        %2724 = vmatpush1.msra.mxu0 %v2671
        %2725 = vmatprep.subr.mxu0 0.0
        %2726 = vmatpush1.msra.mxu0 %v2672
        %2727 = vmatprep.subr.mxu0 0.0
        %2728 = vmatpush1.msra.mxu0 %v2673
        %2729 = vmatprep.subr.mxu0 0.0
        %2730 = vmatpush1.msra.mxu0 %v2674
        %2731 = vmatprep.subr.mxu0 0.0
        %2732 = vmatpush1.msra.mxu0 0.0
        %2733 = vmatprep.subr.mxu0 0.0
        %2734 = vmatpush1.msra.mxu0 0.0
        %2735 = vmatprep.subr.mxu0 0.0
        %2736 = vmatpush1.msra.mxu0 0.0
        %2737 = vmatprep.subr.mxu0 0.0
        %2738 = vmatpush1.msra.mxu0 0.0
        %2739 = vmatprep.subr.mxu0 0.0
        %2740 = vmatpush1.msra.mxu0 0.0
        %2741 = vmatprep.subr.mxu0 0.0
        %2742 = vmatpush1.msra.mxu0 0.0
        %2743 = vmatprep.subr.mxu0 0.0
        %2744 = vmatpush1.msra.mxu0 0.0
        %2745 = vmatprep.subr.mxu0 0.0
        %2746 = vmatpush1.msra.mxu0 0.0
        %2747 = vmatprep.subr.mxu0 0.0
        %2748 = vmatpush1.msra.mxu0 0.0
        %2749 = vmatprep.subr.mxu0 0.0
        %2750 = vmatpush1.msra.mxu0 0.0
        %2751 = vmatprep.subr.mxu0 0.0
        %2752 = vmatpush1.msra.mxu0 0.0
        %2753 = vmatprep.subr.mxu0 0.0
        %2754 = vmatpush1.msra.mxu0 0.0
        %2755 = vmatprep.subr.mxu0 0.0
        %2756 = vmatpush1.msra.mxu0 0.0
        %2757 = vmatprep.subr.mxu0 0.0
        %2758 = vmatpush1.msra.mxu0 0.0
        %2759 = vmatprep.subr.mxu0 0.0
        %2760 = vmatpush1.msra.mxu0 0.0
        %2761 = vmatprep.subr.mxu0 0.0
        %2762 = vmatpush1.msra.mxu0 0.0
        %2763 = vmatprep.subr.mxu0 0.0
        %2764 = vmatpush1.msra.mxu0 0.0
        %2765 = vmatprep.subr.mxu0 0.0
        %2766 = vmatpush1.msra.mxu0 0.0
        %2767 = vmatprep.subr.mxu0 0.0
        %2768 = vmatpush1.msra.mxu0 0.0
        %2769 = vmatprep.subr.mxu0 0.0
        %2770 = vmatpush1.msra.mxu0 0.0
        %2771 = vmatprep.subr.mxu0 0.0
        %2772 = vmatpush1.msra.mxu0 0.0
        %2773 = vmatprep.subr.mxu0 0.0
        %2774 = vmatpush1.msra.mxu0 0.0
        %2775 = vmatprep.subr.mxu0 0.0
        %2776 = vmatpush1.msra.mxu0 0.0
        %2777 = vmatprep.subr.mxu0 0.0
        %2778 = vmatpush1.msra.mxu0 0.0
        %2779 = vmatprep.mubr.f32.mxu0 0.0
        %2780 = vmatmul.mubr.f32.gmra.mrb[0].mxu0 %v2692
        %v2781 = vpop.f32.mrb[0].mxu0
        %v2782 = vadd.f32 %v2683, %v2781
        %v2783 = vpop.f32.mrb[0].mxu0
        %2784 = vmatprep.mubr.f32.mxu0 0.0
        %2785 = vmatmul.mubr.f32.gmra.mrb[0].mxu0 %v2695
        %v2786 = vpop.f32.mrb[0].mxu0
        %v2787 = vadd.f32 %v2684, %v2786
        %v2788 = vpop.f32.mrb[0].mxu0
        %2789 = vmatprep.mubr.f32.mxu0 0.0
        %2790 = vmatmul.mubr.f32.gmra.mrb[0].mxu0 %v2698
        %v2791 = vpop.f32.mrb[0].mxu0
        %v2792 = vadd.f32 %v2685, %v2791
        %v2793 = vpop.f32.mrb[0].mxu0
        %2794 = vmatprep.mubr.f32.mxu0 0.0
        %2795 = vmatmul.mubr.f32.gmra.mrb[0].mxu0 %v2701
        %v2796 = vpop.f32.mrb[0].mxu0
        %v2797 = vadd.f32 %v2686, %v2796
        %v2798 = vpop.f32.mrb[0].mxu0
        %2799 = vmatprep.mubr.f32.mxu0 0.0
        %2800 = vmatmul.mubr.f32.gmra.mrb[0].mxu0 %v2704
        %v2801 = vpop.f32.mrb[0].mxu0
        %v2802 = vadd.f32 %v2687, %v2801
        %v2803 = vpop.f32.mrb[0].mxu0
        %2804 = vmatprep.mubr.f32.mxu0 0.0
        %2805 = vmatmul.mubr.f32.gmra.mrb[0].mxu0 %v2707
        %v2806 = vpop.f32.mrb[0].mxu0
        %v2807 = vadd.f32 %v2688, %v2806
        %v2808 = vpop.f32.mrb[0].mxu0
        %2809 = vmatprep.mubr.f32.mxu0 0.0
        %2810 = vmatmul.mubr.f32.gmra.mrb[0].mxu0 %v2710
        %v2811 = vpop.f32.mrb[0].mxu0
        %v2812 = vadd.f32 %v2689, %v2811
        %v2813 = vpop.f32.mrb[0].mxu0
        %2814 = vmatprep.mubr.f32.mxu0 0.0
        %2815 = vmatmul.mubr.f32.gmra.mrb[0].mxu0 %v2713
        %v2816 = vpop.f32.mrb[0].mxu0
        %v2817 = vadd.f32 %v2690, %v2816
        %v2818 = vpop.f32.mrb[0].mxu0
        %2819 = vdwg.mxu0
        %v2820 = vxor.u32 %v2782, 2147483648
        %v2821 = vxor.u32 %v2787, 2147483648
        %v2822 = vxor.u32 %v2792, 2147483648
        %v2823 = vxor.u32 %v2797, 2147483648
        %v2824 = vxor.u32 %v2802, 2147483648
        %v2825 = vxor.u32 %v2807, 2147483648
        %v2826 = vxor.u32 %v2812, 2147483648
        %v2827 = vxor.u32 %v2817, 2147483648
        %v2828 = vmul.f32 %v2820, 1.442695
        %v2829 = vpow.pop %v2828
        %v2830 = vmul.f32 %v2821, 1.442695
        %v2831 = vpow.pop %v2830
        %v2832 = vmul.f32 %v2822, 1.442695
        %v2833 = vpow.pop %v2832
        %v2834 = vmul.f32 %v2823, 1.442695
        %v2835 = vpow.pop %v2834
        %v2836 = vmul.f32 %v2824, 1.442695
        %v2837 = vpow.pop %v2836
        %v2838 = vmul.f32 %v2825, 1.442695
        %v2839 = vpow.pop %v2838
        %v2840 = vmul.f32 %v2826, 1.442695
        %v2841 = vpow.pop %v2840
        %v2842 = vmul.f32 %v2827, 1.442695
        %v2843 = vpow.pop %v2842
        %v2844 = vadd.f32 %v2829, 1.0
        %v2845 = vadd.f32 %v2831, 1.0
        %v2846 = vadd.f32 %v2833, 1.0
        %v2847 = vadd.f32 %v2835, 1.0
        %v2848 = vadd.f32 %v2837, 1.0
        %v2849 = vadd.f32 %v2839, 1.0
        %v2850 = vadd.f32 %v2841, 1.0
        %v2851 = vadd.f32 %v2843, 1.0
        %v2852 = vrcp.pop %v2844
        %v2853 = vmul.f32 1.0, %v2852
        %v2854 = vrcp.pop %v2845
        %v2855 = vmul.f32 1.0, %v2854
        %v2856 = vrcp.pop %v2846
        %v2857 = vmul.f32 1.0, %v2856
        %v2858 = vrcp.pop %v2847
        %v2859 = vmul.f32 1.0, %v2858
        %v2860 = vrcp.pop %v2848
        %v2861 = vmul.f32 1.0, %v2860
        %v2862 = vrcp.pop %v2849
        %v2863 = vmul.f32 1.0, %v2862
        %v2864 = vrcp.pop %v2850
        %v2865 = vmul.f32 1.0, %v2864
        %v2866 = vrcp.pop %v2851
        %v2867 = vmul.f32 1.0, %v2866
        %v2868 = vmul.f32 %v2289, %v2853
        %v2869 = vmul.f32 %v2290, %v2855
        %v2870 = vmul.f32 %v2291, %v2857
        %v2871 = vmul.f32 %v2292, %v2859
        %v2872 = vmul.f32 %v2293, %v2861
        %v2873 = vmul.f32 %v2294, %v2863
        %v2874 = vmul.f32 %v2295, %v2865
        %v2875 = vmul.f32 %v2296, %v2867
        %2877 = vset.pattern.permute.xlu0 0
        %2878 = vperm.xlu0 %2877, %v2868
        %v2879 = vpop.permute.xlu0 %2878
        %2882 = vset.pattern.permute.xlu0 0
        %2883 = vperm.xlu0 %2882, %v2869
        %v2884 = vpop.permute.xlu0 %2883
        %2887 = vset.pattern.permute.xlu0 0
        %2888 = vperm.xlu0 %2887, %v2870
        %v2889 = vpop.permute.xlu0 %2888
        %2892 = vset.pattern.permute.xlu0 0
        %2893 = vperm.xlu0 %2892, %v2871
        %v2894 = vpop.permute.xlu0 %2893
        %2897 = vset.pattern.permute.xlu0 0
        %2898 = vperm.xlu0 %2897, %v2872
        %v2899 = vpop.permute.xlu0 %2898
        %2902 = vset.pattern.permute.xlu0 0
        %2903 = vperm.xlu0 %2902, %v2873
        %v2904 = vpop.permute.xlu0 %2903
        %2907 = vset.pattern.permute.xlu0 0
        %2908 = vperm.xlu0 %2907, %v2874
        %v2909 = vpop.permute.xlu0 %2908
        %2912 = vset.pattern.permute.xlu0 0
        %2913 = vperm.xlu0 %2912, %v2875
        %v2914 = vpop.permute.xlu0 %2913
        %v2916 = vmul.f32 %v2514, %v2879
        %v2917 = vmul.f32 %v2515, %v2884
        %v2918 = vmul.f32 %v2516, %v2889
        %v2919 = vmul.f32 %v2517, %v2894
        %v2920 = vmul.f32 %v2518, %v2899
        %v2921 = vmul.f32 %v2519, %v2904
        %v2922 = vmul.f32 %v2520, %v2909
        %v2923 = vmul.f32 %v2521, %v2914
        %v2924 = vsub.f32 %v2257, %v2916
        %v2925 = vsub.f32 %v2258, %v2917
        %v2926 = vsub.f32 %v2259, %v2918
        %v2927 = vsub.f32 %v2260, %v2919
        %v2928 = vsub.f32 %v2261, %v2920
        %v2929 = vsub.f32 %v2262, %v2921
        %v2930 = vsub.f32 %v2263, %v2922
        %v2931 = vsub.f32 %v2264, %v2923
        %v2932 = vmax.f32 %v2924, 0.0
        %v2933 = vmax.f32 %v2925, 0.0
        %v2934 = vmax.f32 %v2926, 0.0
        %v2935 = vmax.f32 %v2927, 0.0
        %v2936 = vmax.f32 %v2928, 0.0
        %v2937 = vmax.f32 %v2929, 0.0
        %v2938 = vmax.f32 %v2930, 0.0
        %v2939 = vmax.f32 %v2931, 0.0
        %vm2940 = vcmp.gt.f32.partialorder %v2249, 0.0
        %vm2941 = vcmp.gt.f32.partialorder %v2250, 0.0
        %vm2942 = vcmp.gt.f32.partialorder %v2251, 0.0
        %vm2943 = vcmp.gt.f32.partialorder %v2252, 0.0
        %vm2944 = vcmp.gt.f32.partialorder %v2253, 0.0
        %vm2945 = vcmp.gt.f32.partialorder %v2254, 0.0
        %vm2946 = vcmp.gt.f32.partialorder %v2255, 0.0
        %vm2947 = vcmp.gt.f32.partialorder %v2256, 0.0
        %vm2948 = vcmp.lt.f32.partialorder %v2249, 0.0
        %vm2949 = vcmp.lt.f32.partialorder %v2250, 0.0
        %vm2950 = vcmp.lt.f32.partialorder %v2251, 0.0
        %vm2951 = vcmp.lt.f32.partialorder %v2252, 0.0
        %vm2952 = vcmp.lt.f32.partialorder %v2253, 0.0
        %vm2953 = vcmp.lt.f32.partialorder %v2254, 0.0
        %vm2954 = vcmp.lt.f32.partialorder %v2255, 0.0
        %vm2955 = vcmp.lt.f32.partialorder %v2256, 0.0
        %v2956 = vsel %vm2948, -1.0, 0.0
        %v2957 = vsel %vm2949, -1.0, 0.0
        %v2958 = vsel %vm2950, -1.0, 0.0
        %v2959 = vsel %vm2951, -1.0, 0.0
        %v2960 = vsel %vm2952, -1.0, 0.0
        %v2961 = vsel %vm2953, -1.0, 0.0
        %v2962 = vsel %vm2954, -1.0, 0.0
        %v2963 = vsel %vm2955, -1.0, 0.0
        %v2964 = vsel %vm2940, 1.0, %v2956
        %v2965 = vsel %vm2941, 1.0, %v2957
        %v2966 = vsel %vm2942, 1.0, %v2958
        %v2967 = vsel %vm2943, 1.0, %v2959
        %v2968 = vsel %vm2944, 1.0, %v2960
        %v2969 = vsel %vm2945, 1.0, %v2961
        %v2970 = vsel %vm2946, 1.0, %v2962
        %v2971 = vsel %vm2947, 1.0, %v2963
        %v2972 = vmul.f32 %v2964, %v2932
        %v2973 = vmul.f32 %v2965, %v2933
        %v2974 = vmul.f32 %v2966, %v2934
        %v2975 = vmul.f32 %v2967, %v2935
        %v2976 = vmul.f32 %v2968, %v2936
        %v2977 = vmul.f32 %v2969, %v2937
        %v2978 = vmul.f32 %v2970, %v2938
        %v2979 = vmul.f32 %v2971, %v2939
        %v2980 = vadd.f32 %v2972, %v547
        %v2981 = vadd.f32 %v2973, %v548
        %v2982 = vadd.f32 %v2974, %v549
        %v2983 = vadd.f32 %v2975, %v550
        %v2984 = vadd.f32 %v2976, %v551
        %v2985 = vadd.f32 %v2977, %v552
        %v2986 = vadd.f32 %v2978, %v553
        %v2987 = vadd.f32 %v2979, %v554
        %v2988 = vmax.f32 %v2980, 0.0
        %v2989 = vmax.f32 %v2981, 0.0
        %v2990 = vmax.f32 %v2982, 0.0
        %v2991 = vmax.f32 %v2983, 0.0
        %v2992 = vmax.f32 %v2984, 0.0
        %v2993 = vmax.f32 %v2985, 0.0
        %v2994 = vmax.f32 %v2986, 0.0
        %v2995 = vmax.f32 %v2987, 0.0
        %2996 = vst [vmem:[%s541] sm:$0xff] %v2988
        %2997 = vst [vmem:[%s541 + $0x8] sm:$0xff] %v2989
        %2998 = vst [vmem:[%s541 + $0x10] sm:$0xff] %v2990
        %2999 = vst [vmem:[%s541 + $0x18] sm:$0xff] %v2991
        %3000 = vst [vmem:[%s541 + $0x20] sm:$0xff] %v2992
        %3001 = vst [vmem:[%s541 + $0x28] sm:$0xff] %v2993
        %3002 = vst [vmem:[%s541 + $0x30] sm:$0xff] %v2994
        %3003 = vst [vmem:[%s541 + $0x38] sm:$0xff] %v2995
        %s3004 = sand.u32 %s401, 1
        %s3005 = scalar_lea.sflag [#allocation3], %s3004
        %s3006 = sand.u32 %s401, 1
        %s3007 = smul.addr %s3006, 64
        %s3008 = scalar_lea.vmem [#allocation2], %s3007
        // Predicated region
        $region89: #{tpu_custom_call.1} parent=87 // pred_check
          %p3009 = pneg %p411
        $region90: #{tpu_custom_call.1} parent=87 // pred_check_branch
          %3011 = sbr.rel (%p3009) target = $region92
        $region91: #{tpu_custom_call.1} parent=87 // pred_region
          %s3013 = ssub.s32 1024, 1024
          %3014 = vsyncadd %s3005, %s3013
          %s3015 = smul.addr %s31, 8
          %s3016 = smul.addr %s3015, 128
          %s3017 = scalar_lea.hbm %s17, %s3016
          %s3018 = sshll.u32 %s3008, 4
          %s3019 = int_to_ptr.vmem [resolvable:$true] %s3018
          %3024 = dma.vmem_to_hbm [thread:$0]  %s3019, 1024, %s3017, %s3005, 128, 128, 8
        $region92: #{tpu_custom_call.1} parent=87 // pred_fallthru
          _
      $region88: #{tpu_custom_call.1} parent=5 // pred_fallthru
        _
      %p3025 = scmp.le.s32.totalorder 2, %s26
      // Predicated region
      $region93: #{tpu_custom_call.1} parent=5 // pred_check
        %p3026 = pneg %p3025
      $region94: #{tpu_custom_call.1} parent=5 // pred_check_branch
        %3028 = sbr.rel (%p3026) target = $region96
      $region95: #{tpu_custom_call.1} parent=5 // pred_region
        %s3029 = ssub.s32 %s26, 2
        // Predicated region
        $region97: #{tpu_custom_call.1} parent=95 // pred_check
          %p3030 = pneg %p417
        $region98: #{tpu_custom_call.1} parent=95 // pred_check_branch
          %3032 = sbr.rel (%p3030) target = $region100
        $region99: #{tpu_custom_call.1} parent=95 // pred_region
          %s3033 = sand.u32 %s402, 1
          %s3034 = scalar_lea.sflag [#allocation3], %s3033
          %s3035 = sand.u32 %s402, 1
          %s3036 = smul.addr %s3035, 64
          %s3037 = scalar_lea.vmem [#allocation2], %s3036
          %3038 = dma.done %s3034, 1024
        $region100: #{tpu_custom_call.1} parent=95 // pred_fallthru
          _
      $region96: #{tpu_custom_call.1} parent=5 // pred_fallthru
        _
    $region6: #{tpu_custom_call.1} parent=1 // loop_footer
      %s30 = sadd.s32 1, %s26
    $region7: #{tpu_custom_call.1} parent=1 // loop_footer_branch
      %25 = sbr.rel target = $region3
    $region8: #{tpu_custom_call.1} parent=1 // loop_exit
      _
    %3039 = vsyncpa [#allocation3], 1
    %s3040 = scalar_lea.sflag [#allocation3], 1
    %3041 = vsyncpa %s3040, 1

</llo_original>
